<compile_context>
chip_gen: v7x
topology: tpu7x:2x2x1
jax: 0.10.0
libtpu: 0.0.40
codegen_flags: <defaults>
</compile_context>

<pallas_src>
import functools

import jax
import jax.numpy as jnp
from jax.experimental import pallas as pl
from jax.experimental.pallas import tpu as pltpu

_VMEM_LIMIT = 32 * 1024 * 1024   # fits comfortably on v5e/v6e (128 MiB) and v7x (64 MiB)

# ConvTranspose2d(k=4, s=2, p=1): output phase r (resp. t) gathers (input offset, kernel tap)
_TAPS = {0: ((0, 1), (-1, 3)), 1: ((0, 2), (1, 0))}


def _round_up(x, m):
    return (x + m - 1) // m * m


def _pad_rows(x, mp):
    m = x.shape[0]
    if m == mp:
        return x
    return jnp.pad(x, ((0, mp - m),) + ((0, 0),) * (x.ndim - 1))


# ----------------------------- in-kernel exact GELU -----------------------------
# nn.GELU() is erf-based; erf is evaluated with the Abramowitz&Stegun 7.1.26 polynomial
# (|error| <= 1.5e-7) built only from exp/mul/add/div so it lowers cleanly inside Mosaic
# and runs on the otherwise-idle EUP slot under the MXU.

def _erf(x):
    p = 0.3275911
    a1, a2, a3, a4, a5 = (0.254829592, -0.284496736, 1.421413741,
                          -1.453152027, 1.061405429)
    z = jnp.abs(x)
    t = 1.0 / (1.0 + p * z)
    poly = ((((a5 * t + a4) * t + a3) * t + a2) * t + a1) * t
    y = 1.0 - poly * jnp.exp(-z * z)
    return jnp.where(x < 0.0, -y, y)


def _gelu(x):
    return 0.5 * x * (1.0 + _erf(x * 0.7071067811865476))


# ------------------------------- Pallas kernels ---------------------------------

def stem_conv3x3(x_nhwc, w_mat_bf16, b_row):
    """Conv2d(k=3,s=1,p=1): per-image grid step, taps gathered in-kernel (no HBM im2col)."""
    B, H, W, Cin = x_nhwc.shape
    Cout = w_mat_bf16.shape[1]
    xp = jnp.pad(x_nhwc, ((0, 0), (1, 1), (1, 1), (0, 0)))

    def kernel(x_ref, w_ref, b_ref, o_ref):
        xv = x_ref[0]                                           # (H+2, W+2, Cin)
        cols = [xv[ky:ky + H, kx:kx + W, :].reshape(H * W, Cin)
                for ky in range(3) for kx in range(3)]
        patches = jnp.concatenate(cols, axis=-1).astype(jnp.bfloat16)   # (H*W, 9*Cin)
        o_ref[0] = jnp.dot(patches, w_ref[...],
                           preferred_element_type=jnp.float32) + b_ref[...]

    out = pl.pallas_call(
        kernel,
        out_shape=jax.ShapeDtypeStruct((B, H * W, Cout), jnp.float32),
        grid=(B,),
        in_specs=[pl.BlockSpec((1, H + 2, W + 2, Cin), lambda b: (b, 0, 0, 0)),
                  pl.BlockSpec((9 * Cin, Cout), lambda b: (0, 0)),
                  pl.BlockSpec((1, Cout), lambda b: (0, 0))],
        out_specs=pl.BlockSpec((1, H * W, Cout), lambda b: (b, 0, 0)),
        compiler_params=pltpu.CompilerParams(
            dimension_semantics=("parallel",), vmem_limit_bytes=_VMEM_LIMIT),
    )(xp, w_mat_bf16, b_row)
    return out.reshape(B, H, W, Cout)


def wave_ff(xq, w_a, b_a, w_f2, b_f2, *, block_m=64):
    """h2 = gelu(xq @ W_A + b_A) @ Wf2 + bf2  — fused reduction-conv/DWT/perm/Wf1 + GELU + Wf2."""
    M, K = xq.shape
    Dm = w_a.shape[1]
    F = w_f2.shape[1]
    bm = min(block_m, _round_up(M, 8))
    Mp = _round_up(M, bm)
    xq_p = _pad_rows(xq, Mp)

    def kernel(x_ref, wa_ref, ba_ref, w2_ref, b2_ref, o_ref):
        h = jnp.dot(x_ref[...].astype(jnp.bfloat16), wa_ref[...],
                    preferred_element_type=jnp.float32) + ba_ref[...]
        h = _gelu(h)                                             # nn.GELU (erf), Dropout = id
        o_ref[...] = jnp.dot(h.astype(jnp.bfloat16), w2_ref[...],
                             preferred_element_type=jnp.float32) + b2_ref[...]

    out = pl.pallas_call(
        kernel,
        out_shape=jax.ShapeDtypeStruct((Mp, F), jnp.float32),
        grid=(Mp // bm,),
        in_specs=[pl.BlockSpec((bm, K), lambda i: (i, 0)),
                  pl.BlockSpec((K, Dm), lambda i: (0, 0)),
                  pl.BlockSpec((1, Dm), lambda i: (0, 0)),
                  pl.BlockSpec((Dm, F), lambda i: (0, 0)),
                  pl.BlockSpec((1, F), lambda i: (0, 0))],
        out_specs=pl.BlockSpec((bm, F), lambda i: (i, 0)),
        compiler_params=pltpu.CompilerParams(
            dimension_semantics=("parallel",), vmem_limit_bytes=_VMEM_LIMIT),
    )(xq_p, w_a, b_a, w_f2, b_f2)
    return out[:M]


def convt_residual(patches, w_t, b_t, resid, *, block_m=64):
    """All 4 ConvTranspose phases (+BN folded) as one 128-wide matmul + in-kernel residual."""
    M, K = patches.shape
    N = w_t.shape[1]
    bm = min(block_m, _round_up(M, 8))
    Mp = _round_up(M, bm)
    p_p = _pad_rows(patches, Mp)
    r_p = _pad_rows(resid, Mp)

    def kernel(p_ref, w_ref, b_ref, r_ref, o_ref):
        y = jnp.dot(p_ref[...].astype(jnp.bfloat16), w_ref[...],
                    preferred_element_type=jnp.float32)
        o_ref[...] = y + b_ref[...] + r_ref[...]                 # residual stays f32

    out = pl.pallas_call(
        kernel,
        out_shape=jax.ShapeDtypeStruct((Mp, N), jnp.float32),
        grid=(Mp // bm,),
        in_specs=[pl.BlockSpec((bm, K), lambda i: (i, 0)),
                  pl.BlockSpec((K, N), lambda i: (0, 0)),
                  pl.BlockSpec((1, N), lambda i: (0, 0)),
                  pl.BlockSpec((bm, N), lambda i: (i, 0))],
        out_specs=pl.BlockSpec((bm, N), lambda i: (i, 0)),
        compiler_params=pltpu.CompilerParams(
            dimension_semantics=("parallel",), vmem_limit_bytes=_VMEM_LIMIT),
    )(p_p, w_t, b_t, r_p)
    return out[:M]


def pool_linear(x, w, b):
    """AdaptiveAvgPool2d(1) + Linear, fused; spatial-tile reduction grid with VMEM accumulator."""
    B, S, C = x.shape
    N = w.shape[1]
    ts = 32 if S % 32 == 0 else S
    inv_s = 1.0 / float(S)

    def kernel(x_ref, w_ref, b_ref, o_ref, acc_ref):
        @pl.when(pl.program_id(0) == 0)
        def _():
            acc_ref[...] = jnp.zeros_like(acc_ref)
        acc_ref[...] += jnp.sum(x_ref[...], axis=1)
        @pl.when(pl.program_id(0) == pl.num_programs(0) - 1)
        def _():
            pooled = (acc_ref[...] * inv_s).astype(jnp.bfloat16)
            o_ref[...] = jnp.dot(pooled, w_ref[...],
                                 preferred_element_type=jnp.float32) + b_ref[...]

    return pl.pallas_call(
        kernel,
        out_shape=jax.ShapeDtypeStruct((B, N), jnp.float32),
        grid=(S // ts,),
        in_specs=[pl.BlockSpec((B, ts, C), lambda s: (0, s, 0)),
                  pl.BlockSpec((C, N), lambda s: (0, 0)),
                  pl.BlockSpec((1, N), lambda s: (0, 0))],
        out_specs=pl.BlockSpec((B, N), lambda s: (0, 0)),
        scratch_shapes=[pltpu.VMEM((B, C), jnp.float32)],
        compiler_params=pltpu.CompilerParams(
            dimension_semantics=("arbitrary",), vmem_limit_bytes=_VMEM_LIMIT),
    )(x, w, b)


# --------------------------------- JAX glue --------------------------------------

def level1_waveblock(xq, p, B, H2, W2):
    """One Waveblock on the quadrant-layout activation (M, 4D); returns block(x)+x."""
    M = xq.shape[0]
    h2 = wave_ff(xq, p["W_A"], p["b_A"], p["Wf2"], p["bf2"])            # (M, ff)
    ff = h2.shape[1]
    hp = jnp.pad(h2.reshape(B, H2, W2, ff), ((0, 0), (1, 1), (1, 1), (0, 0)))
    # 16 taps (4 per output phase) concatenated along channels -> K = 16*ff = 256
    cols = [hp[:, 1 + dy:1 + dy + H2, 1 + dx:1 + dx + W2, :]
            for r in (0, 1) for t in (0, 1)
            for (dy, _ky) in _TAPS[r] for (dx, _kx) in _TAPS[t]]
    patches = jnp.concatenate(cols, axis=-1).reshape(M, 16 * ff)
    return convt_residual(patches, p["W_T"], p["b_T"], xq)             # quadrant layout out


@functools.partial(jax.jit, static_argnames="num_classes")
def wavemix_forward(img_nchw, params, *, num_classes):
    x = jnp.transpose(img_nchw, (0, 2, 3, 1))                          # NCHW -> NHWC
    x = stem_conv3x3(x, params["W1m"], params["b1"])
    x = stem_conv3x3(x, params["W2m"], params["b2"])
    B, H, W, D = x.shape
    assert H % 2 == 0 and W % 2 == 0, "Level1Waveblock requires even H, W"
    H2, W2 = H // 2, W // 2
    # quadrant layout: xq[:, (2r+t)*D + c] = x[b, 2i+r, 2j+t, c]
    xq = (x.reshape(B, H2, 2, W2, 2, D)
           .transpose(0, 1, 3, 2, 4, 5)
           .reshape(B * H2 * W2, 4 * D))
    for blk in params["blocks"]:
        xq = level1_waveblock(xq, blk, B, H2, W2)
    logits = pool_linear(xq.reshape(B, H2 * W2, 4 * D),
                         params["Wl_q"], params["bl_pad"])
    return logits[:, :num_classes]


# --------------------------- deterministic parameters -----------------------------

def init_params(key, *, num_classes=27, depth=2, mult=2, ff_channel=16, final_dim=32):
    D = final_dim
    C4 = D // 4
    Dm = D * mult
    ff = ff_channel
    n_pad = _round_up(num_classes, 128)

    def nrm(k, shape, s=0.1):
        return (s * jax.random.normal(k, shape)).astype(jnp.float32)

    ks = iter(jax.random.split(key, 6 + 12 * depth))

    W1 = nrm(next(ks), (D // 2, 1, 3, 3));  b1 = nrm(next(ks), (D // 2,))
    W2 = nrm(next(ks), (D, D // 2, 3, 3));  b2 = nrm(next(ks), (D,))
    Wl = nrm(next(ks), (num_classes, D));   bl = nrm(next(ks), (num_classes,))

    params = {
        "W1m": jnp.transpose(W1, (2, 3, 1, 0)).reshape(9 * 1, D // 2).astype(jnp.bfloat16),
        "b1": b1.reshape(1, -1),
        "W2m": jnp.transpose(W2, (2, 3, 1, 0)).reshape(9 * (D // 2), D).astype(jnp.bfloat16),
        "b2": b2.reshape(1, -1),
        # AvgPool folded into the Linear for quadrant-layout activations; padded to 128 lanes
        "Wl_q": jnp.pad(jnp.concatenate([Wl.T] * 4, axis=0) / 4.0,
                        ((0, 0), (0, n_pad - num_classes))).astype(jnp.bfloat16),
        "bl_pad": jnp.pad(bl, (0, n_pad - num_classes)).reshape(1, n_pad),
        "blocks": [],
    }

    # column permutation mapping [LL | LH | HL | HH] blocks onto torch's cat(Y1, Yh[0]) order
    k_idx = jnp.arange(C4)
    perm = jnp.concatenate([k_idx, C4 + 3 * k_idx, C4 + 3 * k_idx + 1, C4 + 3 * k_idx + 2])
    # Haar analysis matrix (rows = [LL, Yh0, Yh1, Yh2], cols = quadrants [TL, TR, BL, BR])
    S = 0.5 * jnp.array([[1., 1., 1., 1.],
                         [1., 1., -1., -1.],
                         [1., -1., 1., -1.],
                         [1., -1., -1., 1.]], dtype=jnp.float32)

    for _ in range(depth):
        Wr = nrm(next(ks), (C4, D, 1, 1));   br = nrm(next(ks), (C4,))
        Wf1 = nrm(next(ks), (Dm, D, 1, 1));  bf1 = nrm(next(ks), (Dm,))
        Wf2 = nrm(next(ks), (ff, Dm, 1, 1)); bf2 = nrm(next(ks), (ff,))
        Wt = nrm(next(ks), (ff, D, 4, 4))    # ConvTranspose2d weight (in, out, kh, kw)
        bt = nrm(next(ks), (D,))
        gamma = 1.0 + nrm(next(ks), (D,));   beta = nrm(next(ks), (D,))
        rmean = nrm(next(ks), (D,));         rvar = 0.5 + jnp.abs(nrm(next(ks), (D,)))
        scale = gamma / jnp.sqrt(rvar + 1e-5)            # eval BatchNorm2d, folded
        shift = beta - rmean * scale

        # fold conv1x1(Wr) -> Haar DWT -> channel perm -> conv1x1(Wf1) into one (4D, Dm) matmul
        Wf1_blk = Wf1[:, perm, 0, 0].T.reshape(4, C4, Dm)          # [coef k, c4, n]
        Wr2 = Wr[:, :, 0, 0]                                       # (C4, D)
        W_A = jnp.einsum('kq,cd,kcn->qdn', S, Wr2, Wf1_blk).reshape(4 * D, Dm)
        b_A = 2.0 * (br @ Wf1_blk[0]) + bf1                        # only the LL path carries br

        # fold the 4 ConvTranspose output phases + BN scale into one (16*ff, 4*D) matmul
        beff = bt * scale + shift
        W_T = jnp.zeros((16 * ff, 4 * D), jnp.float32)
        for pidx, (r, t) in enumerate(((0, 0), (0, 1), (1, 0), (1, 1))):
            rows = [Wt[:, :, ky, kx]
                    for (dy, ky) in _TAPS[r] for (dx, kx) in _TAPS[t]]   # 4 x (ff, D)
            W_T = W_T.at[pidx * 4 * ff:(pidx + 1) * 4 * ff,
                         pidx * D:(pidx + 1) * D].set(
                jnp.concatenate(rows, axis=0) * scale[None, :])

        params["blocks"].append({
            "W_A": W_A.astype(jnp.bfloat16), "b_A": b_A.reshape(1, -1),
            "Wf2": Wf2[:, :, 0, 0].T.astype(jnp.bfloat16), "bf2": bf2.reshape(1, -1),
            "W_T": W_T.astype(jnp.bfloat16), "b_T": jnp.tile(beff, 4).reshape(1, 4 * D),
        })
    return params


if __name__ == "__main__":
    key = jax.random.PRNGKey(0)
    kp, kx = jax.random.split(key)
    params = init_params(kp, num_classes=27, depth=2, mult=2,
                         ff_channel=16, final_dim=32)
    # 1-channel image input (stem is Conv2d(1, ...)), NCHW like the PyTorch module
    img = jax.random.normal(kx, (2, 1, 16, 16), dtype=jnp.float32)
    out = wavemix_forward(img, params, num_classes=27)
    jax.block_until_ready(out)
    assert out.shape == (2, 27) and out.dtype == jnp.float32
    print("KERNEL_OK")
</pallas_src>

<mosaic_0001>
module attributes {stable_mosaic.version = 11 : i64} {
  func.func @kernel(%arg0: i32, %arg1: memref<1x18x18x1xf32, #tpu.memory_space<vmem>>, %arg2: memref<9x16xbf16, #tpu.memory_space<vmem>>, %arg3: memref<1x16xf32, #tpu.memory_space<vmem>>, %arg4: memref<1x256x16xf32, #tpu.memory_space<vmem>>) attributes {dimension_semantics = [#tpu.dimension_semantics<parallel>], iteration_bounds = array<i64: 2>, scalar_prefetch = 0 : i64, scratch_operands = 0 : i64, tpu.core_type = #tpu.core_type<tc>, window_params = [{transform_indices = @transform_0, window_bounds = array<i64: 1, 18, 18, 1>}, {pipeline_mode = #tpu.pipeline_mode<synchronous>, transform_indices = @transform_1, window_bounds = array<i64: 9, 16>}, {pipeline_mode = #tpu.pipeline_mode<synchronous>, transform_indices = @transform_2, window_bounds = array<i64: 1, 16>}, {transform_indices = @transform_3, window_bounds = array<i64: 1, 256, 16>}]} {
    %c0 = arith.constant 0 : index
    %c0_0 = arith.constant 0 : index
    %c0_1 = arith.constant 0 : index
    %c0_2 = arith.constant 0 : index
    %0 = vector.load %arg1[%c0, %c0_0, %c0_1, %c0_2] : memref<1x18x18x1xf32, #tpu.memory_space<vmem>>, vector<1x18x18x1xf32>
    %1 = vector.shape_cast %0 : vector<1x18x18x1xf32> to vector<18x18x1xf32>
    %2 = vector.extract_strided_slice %1 {offsets = [0, 0, 0], sizes = [16, 16, 1], strides = [1, 1, 1]} : vector<18x18x1xf32> to vector<16x16x1xf32>
    %3 = vector.shape_cast %2 : vector<16x16x1xf32> to vector<256x1xf32>
    %4 = vector.extract_strided_slice %1 {offsets = [0, 1, 0], sizes = [16, 16, 1], strides = [1, 1, 1]} : vector<18x18x1xf32> to vector<16x16x1xf32>
    %5 = vector.shape_cast %4 : vector<16x16x1xf32> to vector<256x1xf32>
    %6 = vector.extract_strided_slice %1 {offsets = [0, 2, 0], sizes = [16, 16, 1], strides = [1, 1, 1]} : vector<18x18x1xf32> to vector<16x16x1xf32>
    %7 = vector.shape_cast %6 : vector<16x16x1xf32> to vector<256x1xf32>
    %8 = vector.extract_strided_slice %1 {offsets = [1, 0, 0], sizes = [16, 16, 1], strides = [1, 1, 1]} : vector<18x18x1xf32> to vector<16x16x1xf32>
    %9 = vector.shape_cast %8 : vector<16x16x1xf32> to vector<256x1xf32>
    %10 = vector.extract_strided_slice %1 {offsets = [1, 1, 0], sizes = [16, 16, 1], strides = [1, 1, 1]} : vector<18x18x1xf32> to vector<16x16x1xf32>
    %11 = vector.shape_cast %10 : vector<16x16x1xf32> to vector<256x1xf32>
    %12 = vector.extract_strided_slice %1 {offsets = [1, 2, 0], sizes = [16, 16, 1], strides = [1, 1, 1]} : vector<18x18x1xf32> to vector<16x16x1xf32>
    %13 = vector.shape_cast %12 : vector<16x16x1xf32> to vector<256x1xf32>
    %14 = vector.extract_strided_slice %1 {offsets = [2, 0, 0], sizes = [16, 16, 1], strides = [1, 1, 1]} : vector<18x18x1xf32> to vector<16x16x1xf32>
    %15 = vector.shape_cast %14 : vector<16x16x1xf32> to vector<256x1xf32>
    %16 = vector.extract_strided_slice %1 {offsets = [2, 1, 0], sizes = [16, 16, 1], strides = [1, 1, 1]} : vector<18x18x1xf32> to vector<16x16x1xf32>
    %17 = vector.shape_cast %16 : vector<16x16x1xf32> to vector<256x1xf32>
    %18 = vector.extract_strided_slice %1 {offsets = [2, 2, 0], sizes = [16, 16, 1], strides = [1, 1, 1]} : vector<18x18x1xf32> to vector<16x16x1xf32>
    %19 = vector.shape_cast %18 : vector<16x16x1xf32> to vector<256x1xf32>
    %20 = tpu.concatenate %3, %5, %7, %9, %11, %13, %15, %17, %19 in 1 : vector<256x1xf32>, vector<256x1xf32>, vector<256x1xf32>, vector<256x1xf32>, vector<256x1xf32>, vector<256x1xf32>, vector<256x1xf32>, vector<256x1xf32>, vector<256x1xf32> -> vector<256x9xf32>
    %21 = arith.truncf %20 : vector<256x9xf32> to vector<256x9xbf16>
    %c0_3 = arith.constant 0 : index
    %c0_4 = arith.constant 0 : index
    %22 = vector.load %arg2[%c0_3, %c0_4] : memref<9x16xbf16, #tpu.memory_space<vmem>>, vector<9x16xbf16>
    %cst = arith.constant dense<0.000000e+00> : vector<256x16xf32>
    %23 = tpu.matmul %21, %22, %cst {dimension_numbers = #tpu.dot_dimension_numbers<[1], [0], [0], [1], [0, 0, 1, 1], [], []>} : vector<256x9xbf16>, vector<9x16xbf16>, vector<256x16xf32> -> vector<256x16xf32>
    %c0_5 = arith.constant 0 : index
    %c0_6 = arith.constant 0 : index
    %24 = vector.load %arg3[%c0_5, %c0_6] : memref<1x16xf32, #tpu.memory_space<vmem>>, vector<1x16xf32>
    %25 = vector.broadcast %24 : vector<1x16xf32> to vector<256x16xf32>
    %26 = arith.addf %23, %25 : vector<256x16xf32>
    %c0_7 = arith.constant 0 : index
    %c0_8 = arith.constant 0 : index
    %c0_9 = arith.constant 0 : index
    %27 = vector.load %arg4[%c0_7, %c0_8, %c0_9] : memref<1x256x16xf32, #tpu.memory_space<vmem>>, vector<1x256x16xf32>
    %28 = vector.shape_cast %27 : vector<1x256x16xf32> to vector<256x16xf32>
    %29 = vector.shape_cast %26 : vector<256x16xf32> to vector<1x256x16xf32>
    tpu.vector_store %arg4[%c0_7, %c0_8, %c0_9], %29 {strides = array<i32>} : memref<1x256x16xf32, #tpu.memory_space<vmem>>, vector<1x256x16xf32>,
    return
  }
  func.func @transform_0(%arg0: i32) -> (i32, i32, i32, i32) {
    %c0_i32 = arith.constant 0 : i32
    %c0_i32_0 = arith.constant 0 : i32
    %c0_i32_1 = arith.constant 0 : i32
    %c0_i32_2 = arith.constant 0 : i32
    return %arg0, %c0_i32, %c0_i32_0, %c0_i32_1 : i32, i32, i32, i32
  }
  func.func @transform_1(%arg0: i32) -> (i32, i32) {
    %c0_i32 = arith.constant 0 : i32
    %c0_i32_0 = arith.constant 0 : i32
    %c0_i32_1 = arith.constant 0 : i32
    return %c0_i32, %c0_i32_0 : i32, i32
  }
  func.func @transform_2(%arg0: i32) -> (i32, i32) {
    %c0_i32 = arith.constant 0 : i32
    %c0_i32_0 = arith.constant 0 : i32
    %c0_i32_1 = arith.constant 0 : i32
    return %c0_i32, %c0_i32_0 : i32, i32
  }
  func.func @transform_3(%arg0: i32) -> (i32, i32, i32) {
    %c0_i32 = arith.constant 0 : i32
    %c0_i32_0 = arith.constant 0 : i32
    %c0_i32_1 = arith.constant 0 : i32
    return %arg0, %c0_i32, %c0_i32_0 : i32, i32, i32
  }
}

module attributes {stable_mosaic.version = 11 : i64} {
  func.func @kernel(%arg0: i32, %arg1: memref<1x18x18x16xf32, #tpu.memory_space<vmem>>, %arg2: memref<144x32xbf16, #tpu.memory_space<vmem>>, %arg3: memref<1x32xf32, #tpu.memory_space<vmem>>, %arg4: memref<1x256x32xf32, #tpu.memory_space<vmem>>) attributes {dimension_semantics = [#tpu.dimension_semantics<parallel>], iteration_bounds = array<i64: 2>, scalar_prefetch = 0 : i64, scratch_operands = 0 : i64, tpu.core_type = #tpu.core_type<tc>, window_params = [{transform_indices = @transform_0, window_bounds = array<i64: 1, 18, 18, 16>}, {pipeline_mode = #tpu.pipeline_mode<synchronous>, transform_indices = @transform_1, window_bounds = array<i64: 144, 32>}, {pipeline_mode = #tpu.pipeline_mode<synchronous>, transform_indices = @transform_2, window_bounds = array<i64: 1, 32>}, {transform_indices = @transform_3, window_bounds = array<i64: 1, 256, 32>}]} {
    %c0 = arith.constant 0 : index
    %c0_0 = arith.constant 0 : index
    %c0_1 = arith.constant 0 : index
    %c0_2 = arith.constant 0 : index
    %0 = vector.load %arg1[%c0, %c0_0, %c0_1, %c0_2] : memref<1x18x18x16xf32, #tpu.memory_space<vmem>>, vector<1x18x18x16xf32>
    %1 = vector.shape_cast %0 : vector<1x18x18x16xf32> to vector<18x18x16xf32>
    %2 = vector.extract_strided_slice %1 {offsets = [0, 0, 0], sizes = [16, 16, 16], strides = [1, 1, 1]} : vector<18x18x16xf32> to vector<16x16x16xf32>
    %3 = vector.shape_cast %2 : vector<16x16x16xf32> to vector<256x16xf32>
    %4 = vector.extract_strided_slice %1 {offsets = [0, 1, 0], sizes = [16, 16, 16], strides = [1, 1, 1]} : vector<18x18x16xf32> to vector<16x16x16xf32>
    %5 = vector.shape_cast %4 : vector<16x16x16xf32> to vector<256x16xf32>
    %6 = vector.extract_strided_slice %1 {offsets = [0, 2, 0], sizes = [16, 16, 16], strides = [1, 1, 1]} : vector<18x18x16xf32> to vector<16x16x16xf32>
    %7 = vector.shape_cast %6 : vector<16x16x16xf32> to vector<256x16xf32>
    %8 = vector.extract_strided_slice %1 {offsets = [1, 0, 0], sizes = [16, 16, 16], strides = [1, 1, 1]} : vector<18x18x16xf32> to vector<16x16x16xf32>
    %9 = vector.shape_cast %8 : vector<16x16x16xf32> to vector<256x16xf32>
    %10 = vector.extract_strided_slice %1 {offsets = [1, 1, 0], sizes = [16, 16, 16], strides = [1, 1, 1]} : vector<18x18x16xf32> to vector<16x16x16xf32>
    %11 = vector.shape_cast %10 : vector<16x16x16xf32> to vector<256x16xf32>
    %12 = vector.extract_strided_slice %1 {offsets = [1, 2, 0], sizes = [16, 16, 16], strides = [1, 1, 1]} : vector<18x18x16xf32> to vector<16x16x16xf32>
    %13 = vector.shape_cast %12 : vector<16x16x16xf32> to vector<256x16xf32>
    %14 = vector.extract_strided_slice %1 {offsets = [2, 0, 0], sizes = [16, 16, 16], strides = [1, 1, 1]} : vector<18x18x16xf32> to vector<16x16x16xf32>
    %15 = vector.shape_cast %14 : vector<16x16x16xf32> to vector<256x16xf32>
    %16 = vector.extract_strided_slice %1 {offsets = [2, 1, 0], sizes = [16, 16, 16], strides = [1, 1, 1]} : vector<18x18x16xf32> to vector<16x16x16xf32>
    %17 = vector.shape_cast %16 : vector<16x16x16xf32> to vector<256x16xf32>
    %18 = vector.extract_strided_slice %1 {offsets = [2, 2, 0], sizes = [16, 16, 16], strides = [1, 1, 1]} : vector<18x18x16xf32> to vector<16x16x16xf32>
    %19 = vector.shape_cast %18 : vector<16x16x16xf32> to vector<256x16xf32>
    %20 = tpu.concatenate %3, %5, %7, %9, %11, %13, %15, %17, %19 in 1 : vector<256x16xf32>, vector<256x16xf32>, vector<256x16xf32>, vector<256x16xf32>, vector<256x16xf32>, vector<256x16xf32>, vector<256x16xf32>, vector<256x16xf32>, vector<256x16xf32> -> vector<256x144xf32>
    %21 = arith.truncf %20 : vector<256x144xf32> to vector<256x144xbf16>
    %c0_3 = arith.constant 0 : index
    %c0_4 = arith.constant 0 : index
    %22 = vector.load %arg2[%c0_3, %c0_4] : memref<144x32xbf16, #tpu.memory_space<vmem>>, vector<144x32xbf16>
    %cst = arith.constant dense<0.000000e+00> : vector<256x32xf32>
    %23 = tpu.matmul %21, %22, %cst {dimension_numbers = #tpu.dot_dimension_numbers<[1], [0], [0], [1], [0, 0, 1, 1], [], []>} : vector<256x144xbf16>, vector<144x32xbf16>, vector<256x32xf32> -> vector<256x32xf32>
    %c0_5 = arith.constant 0 : index
    %c0_6 = arith.constant 0 : index
    %24 = vector.load %arg3[%c0_5, %c0_6] : memref<1x32xf32, #tpu.memory_space<vmem>>, vector<1x32xf32>
    %25 = vector.broadcast %24 : vector<1x32xf32> to vector<256x32xf32>
    %26 = arith.addf %23, %25 : vector<256x32xf32>
    %c0_7 = arith.constant 0 : index
    %c0_8 = arith.constant 0 : index
    %c0_9 = arith.constant 0 : index
    %27 = vector.load %arg4[%c0_7, %c0_8, %c0_9] : memref<1x256x32xf32, #tpu.memory_space<vmem>>, vector<1x256x32xf32>
    %28 = vector.shape_cast %27 : vector<1x256x32xf32> to vector<256x32xf32>
    %29 = vector.shape_cast %26 : vector<256x32xf32> to vector<1x256x32xf32>
    tpu.vector_store %arg4[%c0_7, %c0_8, %c0_9], %29 {strides = array<i32>} : memref<1x256x32xf32, #tpu.memory_space<vmem>>, vector<1x256x32xf32>,
    return
  }
  func.func @transform_0(%arg0: i32) -> (i32, i32, i32, i32) {
    %c0_i32 = arith.constant 0 : i32
    %c0_i32_0 = arith.constant 0 : i32
    %c0_i32_1 = arith.constant 0 : i32
    %c0_i32_2 = arith.constant 0 : i32
    return %arg0, %c0_i32, %c0_i32_0, %c0_i32_1 : i32, i32, i32, i32
  }
  func.func @transform_1(%arg0: i32) -> (i32, i32) {
    %c0_i32 = arith.constant 0 : i32
    %c0_i32_0 = arith.constant 0 : i32
    %c0_i32_1 = arith.constant 0 : i32
    return %c0_i32, %c0_i32_0 : i32, i32
  }
  func.func @transform_2(%arg0: i32) -> (i32, i32) {
    %c0_i32 = arith.constant 0 : i32
    %c0_i32_0 = arith.constant 0 : i32
    %c0_i32_1 = arith.constant 0 : i32
    return %c0_i32, %c0_i32_0 : i32, i32
  }
  func.func @transform_3(%arg0: i32) -> (i32, i32, i32) {
    %c0_i32 = arith.constant 0 : i32
    %c0_i32_0 = arith.constant 0 : i32
    %c0_i32_1 = arith.constant 0 : i32
    return %arg0, %c0_i32, %c0_i32_0 : i32, i32, i32
  }
}

module attributes {stable_mosaic.version = 11 : i64} {
  func.func @kernel(%arg0: i32, %arg1: memref<64x128xf32, #tpu.memory_space<vmem>>, %arg2: memref<128x64xbf16, #tpu.memory_space<vmem>>, %arg3: memref<1x64xf32, #tpu.memory_space<vmem>>, %arg4: memref<64x16xbf16, #tpu.memory_space<vmem>>, %arg5: memref<1x16xf32, #tpu.memory_space<vmem>>, %arg6: memref<64x16xf32, #tpu.memory_space<vmem>>) attributes {dimension_semantics = [#tpu.dimension_semantics<parallel>], iteration_bounds = array<i64: 2>, scalar_prefetch = 0 : i64, scratch_operands = 0 : i64, tpu.core_type = #tpu.core_type<tc>, window_params = [{transform_indices = @transform_0, window_bounds = array<i64: 64, 128>}, {pipeline_mode = #tpu.pipeline_mode<synchronous>, transform_indices = @transform_1, window_bounds = array<i64: 128, 64>}, {pipeline_mode = #tpu.pipeline_mode<synchronous>, transform_indices = @transform_2, window_bounds = array<i64: 1, 64>}, {pipeline_mode = #tpu.pipeline_mode<synchronous>, transform_indices = @transform_3, window_bounds = array<i64: 64, 16>}, {pipeline_mode = #tpu.pipeline_mode<synchronous>, transform_indices = @transform_4, window_bounds = array<i64: 1, 16>}, {transform_indices = @transform_5, window_bounds = array<i64: 64, 16>}]} {
    %c0 = arith.constant 0 : index
    %c0_0 = arith.constant 0 : index
    %0 = vector.load %arg1[%c0, %c0_0] : memref<64x128xf32, #tpu.memory_space<vmem>>, vector<64x128xf32>
    %1 = arith.truncf %0 : vector<64x128xf32> to vector<64x128xbf16>
    %c0_1 = arith.constant 0 : index
    %c0_2 = arith.constant 0 : index
    %2 = vector.load %arg2[%c0_1, %c0_2] : memref<128x64xbf16, #tpu.memory_space<vmem>>, vector<128x64xbf16>
    %cst = arith.constant dense<0.000000e+00> : vector<64x64xf32>
    %3 = tpu.matmul %1, %2, %cst {dimension_numbers = #tpu.dot_dimension_numbers<[1], [0], [0], [1], [0, 0, 1, 1], [], []>} : vector<64x128xbf16>, vector<128x64xbf16>, vector<64x64xf32> -> vector<64x64xf32>
    %c0_3 = arith.constant 0 : index
    %c0_4 = arith.constant 0 : index
    %4 = vector.load %arg3[%c0_3, %c0_4] : memref<1x64xf32, #tpu.memory_space<vmem>>, vector<1x64xf32>
    %5 = vector.broadcast %4 : vector<1x64xf32> to vector<64x64xf32>
    %6 = arith.addf %3, %5 : vector<64x64xf32>
    %cst_5 = arith.constant 5.000000e-01 : f32
    %7 = vector.broadcast %cst_5 : f32 to vector<64x64xf32>
    %8 = arith.mulf %7, %6 : vector<64x64xf32>
    %cst_6 = arith.constant 0.707106769 : f32
    %9 = vector.broadcast %cst_6 : f32 to vector<64x64xf32>
    %10 = arith.mulf %6, %9 : vector<64x64xf32>
    %11 = math.absf %10 : vector<64x64xf32>
    %cst_7 = arith.constant 0.327591091 : f32
    %12 = vector.broadcast %cst_7 : f32 to vector<64x64xf32>
    %13 = arith.mulf %12, %11 : vector<64x64xf32>
    %cst_8 = arith.constant 1.000000e+00 : f32
    %14 = vector.broadcast %cst_8 : f32 to vector<64x64xf32>
    %15 = arith.addf %14, %13 : vector<64x64xf32>
    %cst_9 = arith.constant 1.000000e+00 : f32
    %16 = vector.broadcast %cst_9 : f32 to vector<64x64xf32>
    %17 = arith.divf %16, %15 : vector<64x64xf32>
    %cst_10 = arith.constant 1.06140542 : f32
    %18 = vector.broadcast %cst_10 : f32 to vector<64x64xf32>
    %19 = arith.mulf %18, %17 : vector<64x64xf32>
    %cst_11 = arith.constant -1.45315206 : f32
    %20 = vector.broadcast %cst_11 : f32 to vector<64x64xf32>
    %21 = arith.addf %19, %20 : vector<64x64xf32>
    %22 = arith.mulf %21, %17 : vector<64x64xf32>
    %cst_12 = arith.constant 1.42141378 : f32
    %23 = vector.broadcast %cst_12 : f32 to vector<64x64xf32>
    %24 = arith.addf %22, %23 : vector<64x64xf32>
    %25 = arith.mulf %24, %17 : vector<64x64xf32>
    %cst_13 = arith.constant -0.284496725 : f32
    %26 = vector.broadcast %cst_13 : f32 to vector<64x64xf32>
    %27 = arith.addf %25, %26 : vector<64x64xf32>
    %28 = arith.mulf %27, %17 : vector<64x64xf32>
    %cst_14 = arith.constant 0.254829586 : f32
    %29 = vector.broadcast %cst_14 : f32 to vector<64x64xf32>
    %30 = arith.addf %28, %29 : vector<64x64xf32>
    %31 = arith.mulf %30, %17 : vector<64x64xf32>
    %cst_15 = arith.constant 0.000000e+00 : f32
    %32 = vector.broadcast %cst_15 : f32 to vector<64x64xf32>
    %33 = arith.subf %32, %11 : vector<64x64xf32>
    %34 = arith.mulf %33, %11 : vector<64x64xf32>
    %35 = math.exp %34 : vector<64x64xf32>
    %36 = arith.mulf %31, %35 : vector<64x64xf32>
    %cst_16 = arith.constant 1.000000e+00 : f32
    %37 = vector.broadcast %cst_16 : f32 to vector<64x64xf32>
    %38 = arith.subf %37, %36 : vector<64x64xf32>
    %cst_17 = arith.constant 0.000000e+00 : f32
    %39 = vector.broadcast %cst_17 : f32 to vector<64x64xf32>
    %40 = arith.cmpf olt, %10, %39 : vector<64x64xf32>
    %cst_18 = arith.constant 0.000000e+00 : f32
    %41 = vector.broadcast %cst_18 : f32 to vector<64x64xf32>
    %42 = arith.subf %41, %38 : vector<64x64xf32>
    %43 = arith.select %40, %42, %38 : vector<64x64xi1>, vector<64x64xf32>
    %cst_19 = arith.constant 1.000000e+00 : f32
    %44 = vector.broadcast %cst_19 : f32 to vector<64x64xf32>
    %45 = arith.addf %44, %43 : vector<64x64xf32>
    %46 = arith.mulf %8, %45 : vector<64x64xf32>
    %47 = arith.truncf %46 : vector<64x64xf32> to vector<64x64xbf16>
    %c0_20 = arith.constant 0 : index
    %c0_21 = arith.constant 0 : index
    %48 = vector.load %arg4[%c0_20, %c0_21] : memref<64x16xbf16, #tpu.memory_space<vmem>>, vector<64x16xbf16>
    %cst_22 = arith.constant dense<0.000000e+00> : vector<64x16xf32>
    %49 = tpu.matmul %47, %48, %cst_22 {dimension_numbers = #tpu.dot_dimension_numbers<[1], [0], [0], [1], [0, 0, 1, 1], [], []>} : vector<64x64xbf16>, vector<64x16xbf16>, vector<64x16xf32> -> vector<64x16xf32>
    %c0_23 = arith.constant 0 : index
    %c0_24 = arith.constant 0 : index
    %50 = vector.load %arg5[%c0_23, %c0_24] : memref<1x16xf32, #tpu.memory_space<vmem>>, vector<1x16xf32>
    %51 = vector.broadcast %50 : vector<1x16xf32> to vector<64x16xf32>
    %52 = arith.addf %49, %51 : vector<64x16xf32>
    %c0_25 = arith.constant 0 : index
    %c0_26 = arith.constant 0 : index
    %53 = vector.load %arg6[%c0_25, %c0_26] : memref<64x16xf32, #tpu.memory_space<vmem>>, vector<64x16xf32>
    tpu.vector_store %arg6[%c0_25, %c0_26], %52 {strides = array<i32>} : memref<64x16xf32, #tpu.memory_space<vmem>>, vector<64x16xf32>,
    return
  }
  func.func @transform_0(%arg0: i32) -> (i32, i32) {
    %c0_i32 = arith.constant 0 : i32
    %c0_i32_0 = arith.constant 0 : i32
    return %arg0, %c0_i32 : i32, i32
  }
  func.func @transform_1(%arg0: i32) -> (i32, i32) {
    %c0_i32 = arith.constant 0 : i32
    %c0_i32_0 = arith.constant 0 : i32
    %c0_i32_1 = arith.constant 0 : i32
    return %c0_i32, %c0_i32_0 : i32, i32
  }
  func.func @transform_2(%arg0: i32) -> (i32, i32) {
    %c0_i32 = arith.constant 0 : i32
    %c0_i32_0 = arith.constant 0 : i32
    %c0_i32_1 = arith.constant 0 : i32
    return %c0_i32, %c0_i32_0 : i32, i32
  }
  func.func @transform_3(%arg0: i32) -> (i32, i32) {
    %c0_i32 = arith.constant 0 : i32
    %c0_i32_0 = arith.constant 0 : i32
    %c0_i32_1 = arith.constant 0 : i32
    return %c0_i32, %c0_i32_0 : i32, i32
  }
  func.func @transform_4(%arg0: i32) -> (i32, i32) {
    %c0_i32 = arith.constant 0 : i32
    %c0_i32_0 = arith.constant 0 : i32
    %c0_i32_1 = arith.constant 0 : i32
    return %c0_i32, %c0_i32_0 : i32, i32
  }
  func.func @transform_5(%arg0: i32) -> (i32, i32) {
    %c0_i32 = arith.constant 0 : i32
    %c0_i32_0 = arith.constant 0 : i32
    return %arg0, %c0_i32 : i32, i32
  }
}

module attributes {stable_mosaic.version = 11 : i64} {
  func.func @kernel(%arg0: i32, %arg1: memref<64x256xf32, #tpu.memory_space<vmem>>, %arg2: memref<256x128xbf16, #tpu.memory_space<vmem>>, %arg3: memref<1x128xf32, #tpu.memory_space<vmem>>, %arg4: memref<64x128xf32, #tpu.memory_space<vmem>>, %arg5: memref<64x128xf32, #tpu.memory_space<vmem>>) attributes {dimension_semantics = [#tpu.dimension_semantics<parallel>], iteration_bounds = array<i64: 2>, scalar_prefetch = 0 : i64, scratch_operands = 0 : i64, tpu.core_type = #tpu.core_type<tc>, window_params = [{transform_indices = @transform_0, window_bounds = array<i64: 64, 256>}, {pipeline_mode = #tpu.pipeline_mode<synchronous>, transform_indices = @transform_1, window_bounds = array<i64: 256, 128>}, {pipeline_mode = #tpu.pipeline_mode<synchronous>, transform_indices = @transform_2, window_bounds = array<i64: 1, 128>}, {transform_indices = @transform_3, window_bounds = array<i64: 64, 128>}, {transform_indices = @transform_4, window_bounds = array<i64: 64, 128>}]} {
    %c0 = arith.constant 0 : index
    %c0_0 = arith.constant 0 : index
    %0 = vector.load %arg1[%c0, %c0_0] : memref<64x256xf32, #tpu.memory_space<vmem>>, vector<64x256xf32>
    %1 = arith.truncf %0 : vector<64x256xf32> to vector<64x256xbf16>
    %c0_1 = arith.constant 0 : index
    %c0_2 = arith.constant 0 : index
    %2 = vector.load %arg2[%c0_1, %c0_2] : memref<256x128xbf16, #tpu.memory_space<vmem>>, vector<256x128xbf16>
    %cst = arith.constant dense<0.000000e+00> : vector<64x128xf32>
    %3 = tpu.matmul %1, %2, %cst {dimension_numbers = #tpu.dot_dimension_numbers<[1], [0], [0], [1], [0, 0, 1, 1], [], []>} : vector<64x256xbf16>, vector<256x128xbf16>, vector<64x128xf32> -> vector<64x128xf32>
    %c0_3 = arith.constant 0 : index
    %c0_4 = arith.constant 0 : index
    %4 = vector.load %arg3[%c0_3, %c0_4] : memref<1x128xf32, #tpu.memory_space<vmem>>, vector<1x128xf32>
    %5 = vector.broadcast %4 : vector<1x128xf32> to vector<64x128xf32>
    %6 = arith.addf %3, %5 : vector<64x128xf32>
    %c0_5 = arith.constant 0 : index
    %c0_6 = arith.constant 0 : index
    %7 = vector.load %arg4[%c0_5, %c0_6] : memref<64x128xf32, #tpu.memory_space<vmem>>, vector<64x128xf32>
    %8 = arith.addf %6, %7 : vector<64x128xf32>
    %c0_7 = arith.constant 0 : index
    %c0_8 = arith.constant 0 : index
    %9 = vector.load %arg5[%c0_7, %c0_8] : memref<64x128xf32, #tpu.memory_space<vmem>>, vector<64x128xf32>
    tpu.vector_store %arg5[%c0_7, %c0_8], %8 {strides = array<i32>} : memref<64x128xf32, #tpu.memory_space<vmem>>, vector<64x128xf32>,
    return
  }
  func.func @transform_0(%arg0: i32) -> (i32, i32) {
    %c0_i32 = arith.constant 0 : i32
    %c0_i32_0 = arith.constant 0 : i32
    return %arg0, %c0_i32 : i32, i32
  }
  func.func @transform_1(%arg0: i32) -> (i32, i32) {
    %c0_i32 = arith.constant 0 : i32
    %c0_i32_0 = arith.constant 0 : i32
    %c0_i32_1 = arith.constant 0 : i32
    return %c0_i32, %c0_i32_0 : i32, i32
  }
  func.func @transform_2(%arg0: i32) -> (i32, i32) {
    %c0_i32 = arith.constant 0 : i32
    %c0_i32_0 = arith.constant 0 : i32
    %c0_i32_1 = arith.constant 0 : i32
    return %c0_i32, %c0_i32_0 : i32, i32
  }
  func.func @transform_3(%arg0: i32) -> (i32, i32) {
    %c0_i32 = arith.constant 0 : i32
    %c0_i32_0 = arith.constant 0 : i32
    return %arg0, %c0_i32 : i32, i32
  }
  func.func @transform_4(%arg0: i32) -> (i32, i32) {
    %c0_i32 = arith.constant 0 : i32
    %c0_i32_0 = arith.constant 0 : i32
    return %arg0, %c0_i32 : i32, i32
  }
}

module attributes {stable_mosaic.version = 11 : i64} {
  func.func @kernel(%arg0: i32, %arg1: memref<2x32x128xf32, #tpu.memory_space<vmem>>, %arg2: memref<128x128xbf16, #tpu.memory_space<vmem>>, %arg3: memref<1x128xf32, #tpu.memory_space<vmem>>, %arg4: memref<2x128xf32, #tpu.memory_space<vmem>>, %arg5: memref<2x128xf32, #tpu.memory_space<vmem>>) attributes {dimension_semantics = [#tpu.dimension_semantics<arbitrary>], iteration_bounds = array<i64: 2>, scalar_prefetch = 0 : i64, scratch_operands = 1 : i64, tpu.core_type = #tpu.core_type<tc>, window_params = [{transform_indices = @transform_0, window_bounds = array<i64: 2, 32, 128>}, {pipeline_mode = #tpu.pipeline_mode<synchronous>, transform_indices = @transform_1, window_bounds = array<i64: 128, 128>}, {pipeline_mode = #tpu.pipeline_mode<synchronous>, transform_indices = @transform_2, window_bounds = array<i64: 1, 128>}, {pipeline_mode = #tpu.pipeline_mode<synchronous>, transform_indices = @transform_3, window_bounds = array<i64: 2, 128>}]} {
    %c0_i32 = arith.constant 0 : i32
    %0 = arith.cmpi eq, %arg0, %c0_i32 : i32
    %1 = arith.extui %0 : i1 to i32
    %c0_i32_0 = arith.constant 0 : i32
    %2 = arith.cmpi ne, %1, %c0_i32_0 : i32
    scf.if %2 {
      %cst_8 = arith.constant 0.000000e+00 : f32
      %11 = vector.broadcast %cst_8 : f32 to vector<2x128xf32>
      %c0_9 = arith.constant 0 : index
      %c0_10 = arith.constant 0 : index
      %12 = vector.load %arg5[%c0_9, %c0_10] : memref<2x128xf32, #tpu.memory_space<vmem>>, vector<2x128xf32>
      tpu.vector_store %arg5[%c0_9, %c0_10], %11 {strides = array<i32>} : memref<2x128xf32, #tpu.memory_space<vmem>>, vector<2x128xf32>,
    } else {
    }
    %c0 = arith.constant 0 : index
    %c0_1 = arith.constant 0 : index
    %3 = vector.load %arg5[%c0, %c0_1] : memref<2x128xf32, #tpu.memory_space<vmem>>, vector<2x128xf32>
    %c0_2 = arith.constant 0 : index
    %c0_3 = arith.constant 0 : index
    %c0_4 = arith.constant 0 : index
    %4 = vector.load %arg1[%c0_2, %c0_3, %c0_4] : memref<2x32x128xf32, #tpu.memory_space<vmem>>, vector<2x32x128xf32>
    %cst = arith.constant dense<0.000000e+00> : vector<2x128xf32>
    %5 = vector.multi_reduction <add>, %4, %cst [1] : vector<2x32x128xf32> to vector<2x128xf32>
    %6 = arith.addf %3, %5 : vector<2x128xf32>
    %c0_5 = arith.constant 0 : index
    %c0_6 = arith.constant 0 : index
    %7 = vector.load %arg5[%c0_5, %c0_6] : memref<2x128xf32, #tpu.memory_space<vmem>>, vector<2x128xf32>
    tpu.vector_store %arg5[%c0_5, %c0_6], %6 {strides = array<i32>} : memref<2x128xf32, #tpu.memory_space<vmem>>, vector<2x128xf32>,
    %c1_i32 = arith.constant 1 : i32
    %8 = arith.cmpi eq, %arg0, %c1_i32 : i32
    %9 = arith.extui %8 : i1 to i32
    %c0_i32_7 = arith.constant 0 : i32
    %10 = arith.cmpi ne, %9, %c0_i32_7 : i32
    scf.if %10 {
      %c0_8 = arith.constant 0 : index
      %c0_9 = arith.constant 0 : index
      %11 = vector.load %arg5[%c0_8, %c0_9] : memref<2x128xf32, #tpu.memory_space<vmem>>, vector<2x128xf32>
      %cst_10 = arith.constant 1.562500e-02 : f32
      %12 = vector.broadcast %cst_10 : f32 to vector<2x128xf32>
      %13 = arith.mulf %11, %12 : vector<2x128xf32>
      %14 = arith.truncf %13 : vector<2x128xf32> to vector<2x128xbf16>
      %c0_11 = arith.constant 0 : index
      %c0_12 = arith.constant 0 : index
      %15 = vector.load %arg2[%c0_11, %c0_12] : memref<128x128xbf16, #tpu.memory_space<vmem>>, vector<128x128xbf16>
      %cst_13 = arith.constant dense<0.000000e+00> : vector<2x128xf32>
      %16 = tpu.matmul %14, %15, %cst_13 {dimension_numbers = #tpu.dot_dimension_numbers<[1], [0], [0], [1], [0, 0, 1, 1], [], []>} : vector<2x128xbf16>, vector<128x128xbf16>, vector<2x128xf32> -> vector<2x128xf32>
      %c0_14 = arith.constant 0 : index
      %c0_15 = arith.constant 0 : index
      %17 = vector.load %arg3[%c0_14, %c0_15] : memref<1x128xf32, #tpu.memory_space<vmem>>, vector<1x128xf32>
      %18 = vector.broadcast %17 : vector<1x128xf32> to vector<2x128xf32>
      %19 = arith.addf %16, %18 : vector<2x128xf32>
      %c0_16 = arith.constant 0 : index
      %c0_17 = arith.constant 0 : index
      %20 = vector.load %arg4[%c0_16, %c0_17] : memref<2x128xf32, #tpu.memory_space<vmem>>, vector<2x128xf32>
      tpu.vector_store %arg4[%c0_16, %c0_17], %19 {strides = array<i32>} : memref<2x128xf32, #tpu.memory_space<vmem>>, vector<2x128xf32>,
    } else {
    }
    return
  }
  func.func @transform_0(%arg0: i32) -> (i32, i32, i32) {
    %c0_i32 = arith.constant 0 : i32
    %c0_i32_0 = arith.constant 0 : i32
    %c0_i32_1 = arith.constant 0 : i32
    return %c0_i32, %arg0, %c0_i32_0 : i32, i32, i32
  }
  func.func @transform_1(%arg0: i32) -> (i32, i32) {
    %c0_i32 = arith.constant 0 : i32
    %c0_i32_0 = arith.constant 0 : i32
    %c0_i32_1 = arith.constant 0 : i32
    return %c0_i32, %c0_i32_0 : i32, i32
  }
  func.func @transform_2(%arg0: i32) -> (i32, i32) {
    %c0_i32 = arith.constant 0 : i32
    %c0_i32_0 = arith.constant 0 : i32
    %c0_i32_1 = arith.constant 0 : i32
    return %c0_i32, %c0_i32_0 : i32, i32
  }
  func.func @transform_3(%arg0: i32) -> (i32, i32) {
    %c0_i32 = arith.constant 0 : i32
    %c0_i32_0 = arith.constant 0 : i32
    %c0_i32_1 = arith.constant 0 : i32
    return %c0_i32, %c0_i32_0 : i32, i32
  }
}

</mosaic_0001>

<llo_original>
// kernel: wavemix_forward.7
$region0: #{wavemix_forward.7}
  #allocation0 [shape = 'u32[]', space=smem, size = 0x4, offset = 0x4, fixed_abs, tag = 'smem constant byte address 0x4 - core index']
  #allocation1 [shape = 'u32[144,128]{1,0:T(1,128)}', space=vmem, size = 0x12000, scoped, tag = 'internal scratch']
  %s0 = inlined_call_operand.vmem [shape: f32[2,18,18,1], index: 0, kind: input, shape index: {}]
  %s1 = inlined_call_operand.vmem [shape: bf16[9,16], index: 1, kind: input, shape index: {}]
  %s2 = inlined_call_operand.vmem [shape: f32[1,16], index: 2, kind: input, shape index: {}]
  %s3 = inlined_call_operand.vmem [shape: f32[2,256,16], index: 3, kind: output, shape index: {}]
  %s4 = sld [smem:[#allocation0]]
  $region45: #{wavemix_forward.7} parent=0
    _
  %s6 = ssub.s32 1, %s4
  %s7 = scalar_select 0, %s6, %s4
  loop: start=0, step=1, limit=4
  $region2: #{wavemix_forward.7} parent=0 // loop_pre_header
    _
  $region3: #{wavemix_forward.7} parent=0 // loop_header
    %s9 = sphi 0, %s13
    %p10 = scmp.ge.s32.totalorder %s9, 4
    %s19 = sphi 0, %s21
    %s22 = sphi 0, %s19
    %s23 = sphi 0, %s22
    %s39 = sphi 0, %s23
    %s43 = sphi 0, %s43
    %s45 = sphi 0, %s43
    %s46 = sphi 0, %s45
    %s60 = sphi 0, %s46
    %s64 = sphi 0, %s64
    %s66 = sphi 0, %s64
    %s67 = sphi 0, %s66
    %s81 = sphi 0, %s67
    %s87 = sphi 0, %s89
    %s90 = sphi 0, %s87
    %s91 = sphi 0, %s90
    %s107 = sphi 0, %s91
  $region4: #{wavemix_forward.7} parent=0 // loop_header_branch
    %12 = sbr.rel (%p10) target = $region8
  $region5: #{wavemix_forward.7} parent=0 // loop_body
    %s14 = ssub.s32 %s9, 1
    %s15 = ssub.s32 %s9, 2
    %s16 = sadd.s32 %s9, 1
    %s17 = ssub.s32 %s9, %s16
    %p18 = scmp.eq.s32.totalorder %s17, 0
    %s20 = sadd.s32 %s19, 1
    %s21 = scalar_select %p18, %s19, %s20
    %p24 = pneg %p18
    %p25 = scmp.eq.s32.totalorder %s9, 1
    %p26 = por %p24, %p25
    %p27 = scmp.ne.s32.totalorder %s19, %s22
    %p28 = scmp.eq.s32.totalorder %s9, 0
    %p29 = por %p27, %p28
    %p30 = scmp.ne.s32.totalorder %s19, %s22
    %p31 = scmp.eq.s32.totalorder %s14, 1
    %p32 = por %p30, %p31
    %p33 = scmp.ne.s32.totalorder %s22, %s23
    %p34 = scmp.eq.s32.totalorder %s14, 0
    %p35 = por %p33, %p34
    %p36 = scmp.ne.s32.totalorder %s22, %s23
    %p37 = scmp.eq.s32.totalorder %s15, 1
    %p38 = por %p36, %p37
    %p40 = scmp.ne.s32.totalorder %s23, %s39
    %p41 = scmp.eq.s32.totalorder %s15, 0
    %p42 = por %p40, %p41
    %s44 = sadd.s32 %s43, 1
    %p47 = scmp.eq.s32.totalorder %s9, 1
    %p48 = scmp.ne.s32.totalorder %s43, %s45
    %p49 = scmp.eq.s32.totalorder %s9, 0
    %p50 = por %p48, %p49
    %p51 = scmp.ne.s32.totalorder %s43, %s45
    %p52 = scmp.eq.s32.totalorder %s14, 1
    %p53 = por %p51, %p52
    %p54 = scmp.ne.s32.totalorder %s45, %s46
    %p55 = scmp.eq.s32.totalorder %s14, 0
    %p56 = por %p54, %p55
    %p57 = scmp.ne.s32.totalorder %s45, %s46
    %p58 = scmp.eq.s32.totalorder %s15, 1
    %p59 = por %p57, %p58
    %p61 = scmp.ne.s32.totalorder %s46, %s60
    %p62 = scmp.eq.s32.totalorder %s15, 0
    %p63 = por %p61, %p62
    %s65 = sadd.s32 %s64, 1
    %p68 = scmp.eq.s32.totalorder %s9, 1
    %p69 = scmp.ne.s32.totalorder %s64, %s66
    %p70 = scmp.eq.s32.totalorder %s9, 0
    %p71 = por %p69, %p70
    %p72 = scmp.ne.s32.totalorder %s64, %s66
    %p73 = scmp.eq.s32.totalorder %s14, 1
    %p74 = por %p72, %p73
    %p75 = scmp.ne.s32.totalorder %s66, %s67
    %p76 = scmp.eq.s32.totalorder %s14, 0
    %p77 = por %p75, %p76
    %p78 = scmp.ne.s32.totalorder %s66, %s67
    %p79 = scmp.eq.s32.totalorder %s15, 1
    %p80 = por %p78, %p79
    %p82 = scmp.ne.s32.totalorder %s67, %s81
    %p83 = scmp.eq.s32.totalorder %s15, 0
    %p84 = por %p82, %p83
    %s85 = ssub.s32 %s9, %s16
    %p86 = scmp.eq.s32.totalorder %s85, 0
    %s88 = sadd.s32 %s87, 1
    %s89 = scalar_select %p86, %s87, %s88
    %p92 = pneg %p86
    %p93 = scmp.eq.s32.totalorder %s9, 1
    %p94 = por %p92, %p93
    %p95 = scmp.ne.s32.totalorder %s87, %s90
    %p96 = scmp.eq.s32.totalorder %s9, 0
    %p97 = por %p95, %p96
    %p98 = scmp.ne.s32.totalorder %s87, %s90
    %p99 = scmp.eq.s32.totalorder %s14, 1
    %p100 = por %p98, %p99
    %p101 = scmp.ne.s32.totalorder %s90, %s91
    %p102 = scmp.eq.s32.totalorder %s14, 0
    %p103 = por %p101, %p102
    %p104 = scmp.ne.s32.totalorder %s90, %s91
    %p105 = scmp.eq.s32.totalorder %s15, 1
    %p106 = por %p104, %p105
    %p108 = scmp.ne.s32.totalorder %s91, %s107
    %p109 = scmp.eq.s32.totalorder %s15, 0
    %p110 = por %p108, %p109
    %p111 = scmp.le.s32.totalorder 1, %s9
    %p112 = scmp.lt.s32.totalorder %s9, 3
    %p113 = pnand %p111, %p112
    %p114 = pneg %p113
    // Predicated region
    $region9: #{wavemix_forward.7} parent=5 // pred_check
      _
    $region10: #{wavemix_forward.7} parent=5 // pred_check_branch
      %116 = sbr.rel (%p113) target = $region12
    $region11: #{wavemix_forward.7} parent=5 // pred_region
      %s117 = ssub.s32 %s9, 1
      // Predicated region
      $region13: #{wavemix_forward.7} parent=11 // pred_check
        %p118 = pneg %p56
      $region14: #{wavemix_forward.7} parent=11 // pred_check_branch
        %120 = sbr.rel (%p118) target = $region16
      $region15: #{wavemix_forward.7} parent=11 // pred_region
        _
      $region16: #{wavemix_forward.7} parent=11 // pred_fallthru
        _
      // Predicated region
      $region17: #{wavemix_forward.7} parent=11 // pred_check
        %p121 = pneg %p77
      $region18: #{wavemix_forward.7} parent=11 // pred_check_branch
        %123 = sbr.rel (%p121) target = $region20
      $region19: #{wavemix_forward.7} parent=11 // pred_region
        _
      $region20: #{wavemix_forward.7} parent=11 // pred_fallthru
        _
    $region12: #{wavemix_forward.7} parent=5 // pred_fallthru
      _
    %p124 = scmp.lt.s32.totalorder %s9, 2
    // Predicated region
    $region21: #{wavemix_forward.7} parent=5 // pred_check
      %p125 = pneg %p124
    $region22: #{wavemix_forward.7} parent=5 // pred_check_branch
      %127 = sbr.rel (%p125) target = $region24
    $region23: #{wavemix_forward.7} parent=5 // pred_region
      // Predicated region
      $region25: #{wavemix_forward.7} parent=23 // pred_check
        %p128 = pneg %p29
      $region26: #{wavemix_forward.7} parent=23 // pred_check_branch
        %130 = sbr.rel (%p128) target = $region28
      $region27: #{wavemix_forward.7} parent=23 // pred_region
        %p131 = scmp.lt.s32.totalorder %s9, 1
        %s132 = scalar_select %p131, %s9, 1
        %s133 = smul.addr %s132, 54
        %s134 = smul.addr %s133, 8
        %s135 = scalar_lea.vmem %s0, %s134
      $region28: #{wavemix_forward.7} parent=23 // pred_fallthru
        _
    $region24: #{wavemix_forward.7} parent=5 // pred_fallthru
      _
    %p136 = scmp.le.s32.totalorder 1, %s9
    %p137 = scmp.lt.s32.totalorder %s9, 3
    %p138 = pnand %p136, %p137
    %p139 = pneg %p138
    // Predicated region
    $region29: #{wavemix_forward.7} parent=5 // pred_check
      _
    $region30: #{wavemix_forward.7} parent=5 // pred_check_branch
      %141 = sbr.rel (%p138) target = $region32
    $region31: #{wavemix_forward.7} parent=5 // pred_region
      %s142 = ssub.s32 %s9, 1
      %p143 = scmp.lt.s32.totalorder %s14, 1
      %s144 = scalar_select %p143, %s14, 1
      %s145 = smul.addr %s144, 54
      %s146 = smul.addr %s145, 8
      %s147 = scalar_lea.vmem %s0, %s146
      %p148 = pneg %p35
      %p149 = pneg %p32
      %p150 = pneg %p56
      %p151 = pneg %p53
      %p152 = pneg %p77
      %p153 = pneg %p74
      %p154 = pneg %p103
      %p155 = pneg %p100
      %p156 = scmp.lt.s32.totalorder %s14, 1
      %s157 = scalar_select %p156, %s14, 1
      %s158 = smul.addr %s157, 32
      %s159 = smul.addr %s158, 8
      %s160 = scalar_lea.vmem %s3, %s159
      %p161 = scmp.lt.s32.totalorder %s14, 1
      %s162 = scalar_select %p161, %s14, 1
      %s163 = smul.addr %s162, 54
      %s164 = smul.addr %s163, 8
      %s165 = scalar_lea.vmem %s0, %s164
      %p166 = scmp.lt.s32.totalorder %s14, 1
      %s167 = scalar_select %p166, %s14, 1
      %s168 = smul.addr %s167, 32
      %s169 = smul.addr %s168, 8
      %s170 = scalar_lea.vmem %s3, %s169
      %v172 = vld [vmem:[%s165] sm:$0xff]
      %v173 = vld [vmem:[%s165 + $0x8] sm:$0xff]
      %v174 = vld [vmem:[%s165 + $0x10] sm:$0x3]
      %v175 = vld [vmem:[%s165 + $0x18] sm:$0xff]
      %v176 = vld [vmem:[%s165 + $0x20] sm:$0xff]
      %v177 = vld [vmem:[%s165 + $0x28] sm:$0x3]
      %v178 = vld [vmem:[%s165 + $0x30] sm:$0xff]
      %v179 = vld [vmem:[%s165 + $0x38] sm:$0xff]
      %v180 = vld [vmem:[%s165 + $0x40] sm:$0x3]
      %v181 = vld [vmem:[%s165 + $0x48] sm:$0xff]
      %v182 = vld [vmem:[%s165 + $0x50] sm:$0xff]
      %v183 = vld [vmem:[%s165 + $0x58] sm:$0x3]
      %v184 = vld [vmem:[%s165 + $0x60] sm:$0xff]
      %v185 = vld [vmem:[%s165 + $0x68] sm:$0xff]
      %v186 = vld [vmem:[%s165 + $0x70] sm:$0x3]
      %v187 = vld [vmem:[%s165 + $0x78] sm:$0xff]
      %v188 = vld [vmem:[%s165 + $0x80] sm:$0xff]
      %v189 = vld [vmem:[%s165 + $0x88] sm:$0x3]
      %v190 = vld [vmem:[%s165 + $0x90] sm:$0xff]
      %v191 = vld [vmem:[%s165 + $0x98] sm:$0xff]
      %v192 = vld [vmem:[%s165 + $0xa0] sm:$0x3]
      %v193 = vld [vmem:[%s165 + $0xa8] sm:$0xff]
      %v194 = vld [vmem:[%s165 + $0xb0] sm:$0xff]
      %v195 = vld [vmem:[%s165 + $0xb8] sm:$0x3]
      %v196 = vld [vmem:[%s165 + $0xc0] sm:$0xff]
      %v197 = vld [vmem:[%s165 + $0xc8] sm:$0xff]
      %v198 = vld [vmem:[%s165 + $0xd0] sm:$0x3]
      %v199 = vld [vmem:[%s165 + $0xd8] sm:$0xff]
      %v200 = vld [vmem:[%s165 + $0xe0] sm:$0xff]
      %v201 = vld [vmem:[%s165 + $0xe8] sm:$0x3]
      %v202 = vld [vmem:[%s165 + $0xf0] sm:$0xff]
      %v203 = vld [vmem:[%s165 + $0xf8] sm:$0xff]
      %v204 = vld [vmem:[%s165 + $0x100] sm:$0x3]
      %v205 = vld [vmem:[%s165 + $0x108] sm:$0xff]
      %v206 = vld [vmem:[%s165 + $0x110] sm:$0xff]
      %v207 = vld [vmem:[%s165 + $0x118] sm:$0x3]
      %v208 = vld [vmem:[%s165 + $0x120] sm:$0xff]
      %v209 = vld [vmem:[%s165 + $0x128] sm:$0xff]
      %v210 = vld [vmem:[%s165 + $0x130] sm:$0x3]
      %v211 = vld [vmem:[%s165 + $0x138] sm:$0xff]
      %v212 = vld [vmem:[%s165 + $0x140] sm:$0xff]
      %v213 = vld [vmem:[%s165 + $0x148] sm:$0x3]
      %v214 = vld [vmem:[%s165 + $0x150] sm:$0xff]
      %v215 = vld [vmem:[%s165 + $0x158] sm:$0xff]
      %v216 = vld [vmem:[%s165 + $0x160] sm:$0x3]
      %v217 = vld [vmem:[%s165 + $0x168] sm:$0xff]
      %v218 = vld [vmem:[%s165 + $0x170] sm:$0xff]
      %v219 = vld [vmem:[%s165 + $0x178] sm:$0x3]
      %v220 = vld [vmem:[%s165 + $0x180] sm:$0xff]
      %v221 = vld [vmem:[%s165 + $0x188] sm:$0xff]
      %v222 = vld [vmem:[%s165 + $0x190] sm:$0x3]
      %v223 = vld [vmem:[%s165 + $0x198] sm:$0xff]
      %v224 = vld [vmem:[%s165 + $0x1a0] sm:$0xff]
      %v225 = vld [vmem:[%s165 + $0x1a8] sm:$0x3]
      %vm274 = vcmask 1046528
      %v275 = vrot.slane %v172, 1
      %v276 = vrot.slane %v173, 1
      %v277 = vsel %vm274, %v275, %v276
      %v278 = vrot.slane %v174, 1
      %v279 = vsel %vm274, %v276, %v278
      %v280 = vrot.slane %v175, 1
      %v281 = vrot.slane %v176, 1
      %v282 = vsel %vm274, %v280, %v281
      %v283 = vrot.slane %v177, 1
      %v284 = vsel %vm274, %v281, %v283
      %v285 = vrot.slane %v178, 1
      %v286 = vrot.slane %v179, 1
      %v287 = vsel %vm274, %v285, %v286
      %v288 = vrot.slane %v180, 1
      %v289 = vsel %vm274, %v286, %v288
      %v290 = vrot.slane %v181, 1
      %v291 = vrot.slane %v182, 1
      %v292 = vsel %vm274, %v290, %v291
      %v293 = vrot.slane %v183, 1
      %v294 = vsel %vm274, %v291, %v293
      %v295 = vrot.slane %v184, 1
      %v296 = vrot.slane %v185, 1
      %v297 = vsel %vm274, %v295, %v296
      %v298 = vrot.slane %v186, 1
      %v299 = vsel %vm274, %v296, %v298
      %v300 = vrot.slane %v187, 1
      %v301 = vrot.slane %v188, 1
      %v302 = vsel %vm274, %v300, %v301
      %v303 = vrot.slane %v189, 1
      %v304 = vsel %vm274, %v301, %v303
      %v305 = vrot.slane %v190, 1
      %v306 = vrot.slane %v191, 1
      %v307 = vsel %vm274, %v305, %v306
      %v308 = vrot.slane %v192, 1
      %v309 = vsel %vm274, %v306, %v308
      %v310 = vrot.slane %v193, 1
      %v311 = vrot.slane %v194, 1
      %v312 = vsel %vm274, %v310, %v311
      %v313 = vrot.slane %v195, 1
      %v314 = vsel %vm274, %v311, %v313
      %v315 = vrot.slane %v196, 1
      %v316 = vrot.slane %v197, 1
      %v317 = vsel %vm274, %v315, %v316
      %v318 = vrot.slane %v198, 1
      %v319 = vsel %vm274, %v316, %v318
      %v320 = vrot.slane %v199, 1
      %v321 = vrot.slane %v200, 1
      %v322 = vsel %vm274, %v320, %v321
      %v323 = vrot.slane %v201, 1
      %v324 = vsel %vm274, %v321, %v323
      %v325 = vrot.slane %v202, 1
      %v326 = vrot.slane %v203, 1
      %v327 = vsel %vm274, %v325, %v326
      %v328 = vrot.slane %v204, 1
      %v329 = vsel %vm274, %v326, %v328
      %v330 = vrot.slane %v205, 1
      %v331 = vrot.slane %v206, 1
      %v332 = vsel %vm274, %v330, %v331
      %v333 = vrot.slane %v207, 1
      %v334 = vsel %vm274, %v331, %v333
      %v335 = vrot.slane %v208, 1
      %v336 = vrot.slane %v209, 1
      %v337 = vsel %vm274, %v335, %v336
      %v338 = vrot.slane %v210, 1
      %v339 = vsel %vm274, %v336, %v338
      %v340 = vrot.slane %v211, 1
      %v341 = vrot.slane %v212, 1
      %v342 = vsel %vm274, %v340, %v341
      %v343 = vrot.slane %v213, 1
      %v344 = vsel %vm274, %v341, %v343
      %v345 = vrot.slane %v214, 1
      %v346 = vrot.slane %v215, 1
      %v347 = vsel %vm274, %v345, %v346
      %v348 = vrot.slane %v216, 1
      %v349 = vsel %vm274, %v346, %v348
      %v350 = vrot.slane %v217, 1
      %v351 = vrot.slane %v218, 1
      %v352 = vsel %vm274, %v350, %v351
      %v353 = vrot.slane %v219, 1
      %v354 = vsel %vm274, %v351, %v353
      %vm355 = vcmask 1045504
      %v356 = vrot.slane %v172, 2
      %v357 = vrot.slane %v173, 2
      %v358 = vsel %vm355, %v356, %v357
      %v359 = vrot.slane %v174, 2
      %v360 = vsel %vm355, %v357, %v359
      %v361 = vrot.slane %v175, 2
      %v362 = vrot.slane %v176, 2
      %v363 = vsel %vm355, %v361, %v362
      %v364 = vrot.slane %v177, 2
      %v365 = vsel %vm355, %v362, %v364
      %v366 = vrot.slane %v178, 2
      %v367 = vrot.slane %v179, 2
      %v368 = vsel %vm355, %v366, %v367
      %v369 = vrot.slane %v180, 2
      %v370 = vsel %vm355, %v367, %v369
      %v371 = vrot.slane %v181, 2
      %v372 = vrot.slane %v182, 2
      %v373 = vsel %vm355, %v371, %v372
      %v374 = vrot.slane %v183, 2
      %v375 = vsel %vm355, %v372, %v374
      %v376 = vrot.slane %v184, 2
      %v377 = vrot.slane %v185, 2
      %v378 = vsel %vm355, %v376, %v377
      %v379 = vrot.slane %v186, 2
      %v380 = vsel %vm355, %v377, %v379
      %v381 = vrot.slane %v187, 2
      %v382 = vrot.slane %v188, 2
      %v383 = vsel %vm355, %v381, %v382
      %v384 = vrot.slane %v189, 2
      %v385 = vsel %vm355, %v382, %v384
      %v386 = vrot.slane %v190, 2
      %v387 = vrot.slane %v191, 2
      %v388 = vsel %vm355, %v386, %v387
      %v389 = vrot.slane %v192, 2
      %v390 = vsel %vm355, %v387, %v389
      %v391 = vrot.slane %v193, 2
      %v392 = vrot.slane %v194, 2
      %v393 = vsel %vm355, %v391, %v392
      %v394 = vrot.slane %v195, 2
      %v395 = vsel %vm355, %v392, %v394
      %v396 = vrot.slane %v196, 2
      %v397 = vrot.slane %v197, 2
      %v398 = vsel %vm355, %v396, %v397
      %v399 = vrot.slane %v198, 2
      %v400 = vsel %vm355, %v397, %v399
      %v401 = vrot.slane %v199, 2
      %v402 = vrot.slane %v200, 2
      %v403 = vsel %vm355, %v401, %v402
      %v404 = vrot.slane %v201, 2
      %v405 = vsel %vm355, %v402, %v404
      %v406 = vrot.slane %v202, 2
      %v407 = vrot.slane %v203, 2
      %v408 = vsel %vm355, %v406, %v407
      %v409 = vrot.slane %v204, 2
      %v410 = vsel %vm355, %v407, %v409
      %v411 = vrot.slane %v205, 2
      %v412 = vrot.slane %v206, 2
      %v413 = vsel %vm355, %v411, %v412
      %v414 = vrot.slane %v207, 2
      %v415 = vsel %vm355, %v412, %v414
      %v416 = vrot.slane %v208, 2
      %v417 = vrot.slane %v209, 2
      %v418 = vsel %vm355, %v416, %v417
      %v419 = vrot.slane %v210, 2
      %v420 = vsel %vm355, %v417, %v419
      %v421 = vrot.slane %v211, 2
      %v422 = vrot.slane %v212, 2
      %v423 = vsel %vm355, %v421, %v422
      %v424 = vrot.slane %v213, 2
      %v425 = vsel %vm355, %v422, %v424
      %v426 = vrot.slane %v214, 2
      %v427 = vrot.slane %v215, 2
      %v428 = vsel %vm355, %v426, %v427
      %v429 = vrot.slane %v216, 2
      %v430 = vsel %vm355, %v427, %v429
      %v431 = vrot.slane %v217, 2
      %v432 = vrot.slane %v218, 2
      %v433 = vsel %vm355, %v431, %v432
      %v434 = vrot.slane %v219, 2
      %v435 = vsel %vm355, %v432, %v434
      %v439 = vrot.slane %v220, 1
      %v440 = vrot.slane %v221, 1
      %v441 = vsel %vm274, %v439, %v440
      %v442 = vrot.slane %v222, 1
      %v443 = vsel %vm274, %v440, %v442
      %v444 = vrot.slane %v220, 2
      %v445 = vrot.slane %v221, 2
      %v446 = vsel %vm355, %v444, %v445
      %v447 = vrot.slane %v222, 2
      %v448 = vsel %vm355, %v445, %v447
      %v452 = vrot.slane %v223, 1
      %v453 = vrot.slane %v224, 1
      %v454 = vsel %vm274, %v452, %v453
      %v455 = vrot.slane %v225, 1
      %v456 = vsel %vm274, %v453, %v455
      %v457 = vrot.slane %v223, 2
      %v458 = vrot.slane %v224, 2
      %v459 = vsel %vm355, %v457, %v458
      %v460 = vrot.slane %v225, 2
      %v461 = vsel %vm355, %v458, %v460
      %462 = vrot.lane.b32.xlu0 %v277, 1
      %v463 = vpop.permute.xlu0 %462
      %464 = vrot.lane.b32.xlu0 %v279, 1
      %v465 = vpop.permute.xlu0 %464
      %466 = vrot.lane.b32.xlu0 %v282, 1
      %v467 = vpop.permute.xlu0 %466
      %468 = vrot.lane.b32.xlu0 %v284, 1
      %v469 = vpop.permute.xlu0 %468
      %470 = vrot.lane.b32.xlu0 %v287, 1
      %v471 = vpop.permute.xlu0 %470
      %472 = vrot.lane.b32.xlu0 %v289, 1
      %v473 = vpop.permute.xlu0 %472
      %474 = vrot.lane.b32.xlu0 %v292, 1
      %v475 = vpop.permute.xlu0 %474
      %476 = vrot.lane.b32.xlu0 %v294, 1
      %v477 = vpop.permute.xlu0 %476
      %478 = vrot.lane.b32.xlu0 %v297, 1
      %v479 = vpop.permute.xlu0 %478
      %480 = vrot.lane.b32.xlu0 %v299, 1
      %v481 = vpop.permute.xlu0 %480
      %482 = vrot.lane.b32.xlu0 %v302, 1
      %v483 = vpop.permute.xlu0 %482
      %484 = vrot.lane.b32.xlu0 %v304, 1
      %v485 = vpop.permute.xlu0 %484
      %486 = vrot.lane.b32.xlu0 %v307, 1
      %v487 = vpop.permute.xlu0 %486
      %488 = vrot.lane.b32.xlu0 %v309, 1
      %v489 = vpop.permute.xlu0 %488
      %490 = vrot.lane.b32.xlu0 %v312, 1
      %v491 = vpop.permute.xlu0 %490
      %492 = vrot.lane.b32.xlu0 %v314, 1
      %v493 = vpop.permute.xlu0 %492
      %494 = vrot.lane.b32.xlu0 %v317, 1
      %v495 = vpop.permute.xlu0 %494
      %496 = vrot.lane.b32.xlu0 %v319, 1
      %v497 = vpop.permute.xlu0 %496
      %498 = vrot.lane.b32.xlu0 %v322, 1
      %v499 = vpop.permute.xlu0 %498
      %500 = vrot.lane.b32.xlu0 %v324, 1
      %v501 = vpop.permute.xlu0 %500
      %502 = vrot.lane.b32.xlu0 %v327, 1
      %v503 = vpop.permute.xlu0 %502
      %504 = vrot.lane.b32.xlu0 %v329, 1
      %v505 = vpop.permute.xlu0 %504
      %506 = vrot.lane.b32.xlu0 %v332, 1
      %v507 = vpop.permute.xlu0 %506
      %508 = vrot.lane.b32.xlu0 %v334, 1
      %v509 = vpop.permute.xlu0 %508
      %510 = vrot.lane.b32.xlu0 %v337, 1
      %v511 = vpop.permute.xlu0 %510
      %512 = vrot.lane.b32.xlu0 %v339, 1
      %v513 = vpop.permute.xlu0 %512
      %514 = vrot.lane.b32.xlu0 %v342, 1
      %v515 = vpop.permute.xlu0 %514
      %516 = vrot.lane.b32.xlu0 %v344, 1
      %v517 = vpop.permute.xlu0 %516
      %518 = vrot.lane.b32.xlu0 %v347, 1
      %v519 = vpop.permute.xlu0 %518
      %520 = vrot.lane.b32.xlu0 %v349, 1
      %v521 = vpop.permute.xlu0 %520
      %522 = vrot.lane.b32.xlu0 %v352, 1
      %v523 = vpop.permute.xlu0 %522
      %524 = vrot.lane.b32.xlu0 %v354, 1
      %v525 = vpop.permute.xlu0 %524
      %558 = vrot.lane.b32.xlu0 %v358, 2
      %v559 = vpop.permute.xlu0 %558
      %560 = vrot.lane.b32.xlu0 %v360, 2
      %v561 = vpop.permute.xlu0 %560
      %562 = vrot.lane.b32.xlu0 %v363, 2
      %v563 = vpop.permute.xlu0 %562
      %564 = vrot.lane.b32.xlu0 %v365, 2
      %v565 = vpop.permute.xlu0 %564
      %566 = vrot.lane.b32.xlu0 %v368, 2
      %v567 = vpop.permute.xlu0 %566
      %568 = vrot.lane.b32.xlu0 %v370, 2
      %v569 = vpop.permute.xlu0 %568
      %570 = vrot.lane.b32.xlu0 %v373, 2
      %v571 = vpop.permute.xlu0 %570
      %572 = vrot.lane.b32.xlu0 %v375, 2
      %v573 = vpop.permute.xlu0 %572
      %574 = vrot.lane.b32.xlu0 %v378, 2
      %v575 = vpop.permute.xlu0 %574
      %576 = vrot.lane.b32.xlu0 %v380, 2
      %v577 = vpop.permute.xlu0 %576
      %578 = vrot.lane.b32.xlu0 %v383, 2
      %v579 = vpop.permute.xlu0 %578
      %580 = vrot.lane.b32.xlu0 %v385, 2
      %v581 = vpop.permute.xlu0 %580
      %582 = vrot.lane.b32.xlu0 %v388, 2
      %v583 = vpop.permute.xlu0 %582
      %584 = vrot.lane.b32.xlu0 %v390, 2
      %v585 = vpop.permute.xlu0 %584
      %586 = vrot.lane.b32.xlu0 %v393, 2
      %v587 = vpop.permute.xlu0 %586
      %588 = vrot.lane.b32.xlu0 %v395, 2
      %v589 = vpop.permute.xlu0 %588
      %590 = vrot.lane.b32.xlu0 %v398, 2
      %v591 = vpop.permute.xlu0 %590
      %592 = vrot.lane.b32.xlu0 %v400, 2
      %v593 = vpop.permute.xlu0 %592
      %594 = vrot.lane.b32.xlu0 %v403, 2
      %v595 = vpop.permute.xlu0 %594
      %596 = vrot.lane.b32.xlu0 %v405, 2
      %v597 = vpop.permute.xlu0 %596
      %598 = vrot.lane.b32.xlu0 %v408, 2
      %v599 = vpop.permute.xlu0 %598
      %600 = vrot.lane.b32.xlu0 %v410, 2
      %v601 = vpop.permute.xlu0 %600
      %602 = vrot.lane.b32.xlu0 %v413, 2
      %v603 = vpop.permute.xlu0 %602
      %604 = vrot.lane.b32.xlu0 %v415, 2
      %v605 = vpop.permute.xlu0 %604
      %606 = vrot.lane.b32.xlu0 %v418, 2
      %v607 = vpop.permute.xlu0 %606
      %608 = vrot.lane.b32.xlu0 %v420, 2
      %v609 = vpop.permute.xlu0 %608
      %610 = vrot.lane.b32.xlu0 %v423, 2
      %v611 = vpop.permute.xlu0 %610
      %612 = vrot.lane.b32.xlu0 %v425, 2
      %v613 = vpop.permute.xlu0 %612
      %614 = vrot.lane.b32.xlu0 %v428, 2
      %v615 = vpop.permute.xlu0 %614
      %616 = vrot.lane.b32.xlu0 %v430, 2
      %v617 = vpop.permute.xlu0 %616
      %618 = vrot.lane.b32.xlu0 %v433, 2
      %v619 = vpop.permute.xlu0 %618
      %620 = vrot.lane.b32.xlu0 %v435, 2
      %v621 = vpop.permute.xlu0 %620
      %654 = vrot.lane.b32.xlu0 %v175, 3
      %v655 = vpop.permute.xlu0 %654
      %656 = vrot.lane.b32.xlu0 %v176, 3
      %v657 = vpop.permute.xlu0 %656
      %658 = vrot.lane.b32.xlu0 %v178, 3
      %v659 = vpop.permute.xlu0 %658
      %660 = vrot.lane.b32.xlu0 %v179, 3
      %v661 = vpop.permute.xlu0 %660
      %662 = vrot.lane.b32.xlu0 %v181, 3
      %v663 = vpop.permute.xlu0 %662
      %664 = vrot.lane.b32.xlu0 %v182, 3
      %v665 = vpop.permute.xlu0 %664
      %666 = vrot.lane.b32.xlu0 %v184, 3
      %v667 = vpop.permute.xlu0 %666
      %668 = vrot.lane.b32.xlu0 %v185, 3
      %v669 = vpop.permute.xlu0 %668
      %670 = vrot.lane.b32.xlu0 %v187, 3
      %v671 = vpop.permute.xlu0 %670
      %672 = vrot.lane.b32.xlu0 %v188, 3
      %v673 = vpop.permute.xlu0 %672
      %674 = vrot.lane.b32.xlu0 %v190, 3
      %v675 = vpop.permute.xlu0 %674
      %676 = vrot.lane.b32.xlu0 %v191, 3
      %v677 = vpop.permute.xlu0 %676
      %678 = vrot.lane.b32.xlu0 %v193, 3
      %v679 = vpop.permute.xlu0 %678
      %680 = vrot.lane.b32.xlu0 %v194, 3
      %v681 = vpop.permute.xlu0 %680
      %682 = vrot.lane.b32.xlu0 %v196, 3
      %v683 = vpop.permute.xlu0 %682
      %684 = vrot.lane.b32.xlu0 %v197, 3
      %v685 = vpop.permute.xlu0 %684
      %686 = vrot.lane.b32.xlu0 %v199, 3
      %v687 = vpop.permute.xlu0 %686
      %688 = vrot.lane.b32.xlu0 %v200, 3
      %v689 = vpop.permute.xlu0 %688
      %690 = vrot.lane.b32.xlu0 %v202, 3
      %v691 = vpop.permute.xlu0 %690
      %692 = vrot.lane.b32.xlu0 %v203, 3
      %v693 = vpop.permute.xlu0 %692
      %694 = vrot.lane.b32.xlu0 %v205, 3
      %v695 = vpop.permute.xlu0 %694
      %696 = vrot.lane.b32.xlu0 %v206, 3
      %v697 = vpop.permute.xlu0 %696
      %698 = vrot.lane.b32.xlu0 %v208, 3
      %v699 = vpop.permute.xlu0 %698
      %700 = vrot.lane.b32.xlu0 %v209, 3
      %v701 = vpop.permute.xlu0 %700
      %702 = vrot.lane.b32.xlu0 %v211, 3
      %v703 = vpop.permute.xlu0 %702
      %704 = vrot.lane.b32.xlu0 %v212, 3
      %v705 = vpop.permute.xlu0 %704
      %706 = vrot.lane.b32.xlu0 %v214, 3
      %v707 = vpop.permute.xlu0 %706
      %708 = vrot.lane.b32.xlu0 %v215, 3
      %v709 = vpop.permute.xlu0 %708
      %710 = vrot.lane.b32.xlu0 %v217, 3
      %v711 = vpop.permute.xlu0 %710
      %712 = vrot.lane.b32.xlu0 %v218, 3
      %v713 = vpop.permute.xlu0 %712
      %714 = vrot.lane.b32.xlu0 %v220, 3
      %v715 = vpop.permute.xlu0 %714
      %716 = vrot.lane.b32.xlu0 %v221, 3
      %v717 = vpop.permute.xlu0 %716
      %750 = vrot.lane.b32.xlu0 %v282, 4
      %v751 = vpop.permute.xlu0 %750
      %752 = vrot.lane.b32.xlu0 %v284, 4
      %v753 = vpop.permute.xlu0 %752
      %754 = vrot.lane.b32.xlu0 %v287, 4
      %v755 = vpop.permute.xlu0 %754
      %756 = vrot.lane.b32.xlu0 %v289, 4
      %v757 = vpop.permute.xlu0 %756
      %758 = vrot.lane.b32.xlu0 %v292, 4
      %v759 = vpop.permute.xlu0 %758
      %760 = vrot.lane.b32.xlu0 %v294, 4
      %v761 = vpop.permute.xlu0 %760
      %762 = vrot.lane.b32.xlu0 %v297, 4
      %v763 = vpop.permute.xlu0 %762
      %764 = vrot.lane.b32.xlu0 %v299, 4
      %v765 = vpop.permute.xlu0 %764
      %766 = vrot.lane.b32.xlu0 %v302, 4
      %v767 = vpop.permute.xlu0 %766
      %768 = vrot.lane.b32.xlu0 %v304, 4
      %v769 = vpop.permute.xlu0 %768
      %770 = vrot.lane.b32.xlu0 %v307, 4
      %v771 = vpop.permute.xlu0 %770
      %772 = vrot.lane.b32.xlu0 %v309, 4
      %v773 = vpop.permute.xlu0 %772
      %774 = vrot.lane.b32.xlu0 %v312, 4
      %v775 = vpop.permute.xlu0 %774
      %776 = vrot.lane.b32.xlu0 %v314, 4
      %v777 = vpop.permute.xlu0 %776
      %778 = vrot.lane.b32.xlu0 %v317, 4
      %v779 = vpop.permute.xlu0 %778
      %780 = vrot.lane.b32.xlu0 %v319, 4
      %v781 = vpop.permute.xlu0 %780
      %782 = vrot.lane.b32.xlu0 %v322, 4
      %v783 = vpop.permute.xlu0 %782
      %784 = vrot.lane.b32.xlu0 %v324, 4
      %v785 = vpop.permute.xlu0 %784
      %786 = vrot.lane.b32.xlu0 %v327, 4
      %v787 = vpop.permute.xlu0 %786
      %788 = vrot.lane.b32.xlu0 %v329, 4
      %v789 = vpop.permute.xlu0 %788
      %790 = vrot.lane.b32.xlu0 %v332, 4
      %v791 = vpop.permute.xlu0 %790
      %792 = vrot.lane.b32.xlu0 %v334, 4
      %v793 = vpop.permute.xlu0 %792
      %794 = vrot.lane.b32.xlu0 %v337, 4
      %v795 = vpop.permute.xlu0 %794
      %796 = vrot.lane.b32.xlu0 %v339, 4
      %v797 = vpop.permute.xlu0 %796
      %798 = vrot.lane.b32.xlu0 %v342, 4
      %v799 = vpop.permute.xlu0 %798
      %800 = vrot.lane.b32.xlu0 %v344, 4
      %v801 = vpop.permute.xlu0 %800
      %802 = vrot.lane.b32.xlu0 %v347, 4
      %v803 = vpop.permute.xlu0 %802
      %804 = vrot.lane.b32.xlu0 %v349, 4
      %v805 = vpop.permute.xlu0 %804
      %806 = vrot.lane.b32.xlu0 %v352, 4
      %v807 = vpop.permute.xlu0 %806
      %808 = vrot.lane.b32.xlu0 %v354, 4
      %v809 = vpop.permute.xlu0 %808
      %810 = vrot.lane.b32.xlu0 %v441, 4
      %v811 = vpop.permute.xlu0 %810
      %812 = vrot.lane.b32.xlu0 %v443, 4
      %v813 = vpop.permute.xlu0 %812
      %846 = vrot.lane.b32.xlu0 %v363, 5
      %v847 = vpop.permute.xlu0 %846
      %848 = vrot.lane.b32.xlu0 %v365, 5
      %v849 = vpop.permute.xlu0 %848
      %850 = vrot.lane.b32.xlu0 %v368, 5
      %v851 = vpop.permute.xlu0 %850
      %852 = vrot.lane.b32.xlu0 %v370, 5
      %v853 = vpop.permute.xlu0 %852
      %854 = vrot.lane.b32.xlu0 %v373, 5
      %v855 = vpop.permute.xlu0 %854
      %856 = vrot.lane.b32.xlu0 %v375, 5
      %v857 = vpop.permute.xlu0 %856
      %858 = vrot.lane.b32.xlu0 %v378, 5
      %v859 = vpop.permute.xlu0 %858
      %860 = vrot.lane.b32.xlu0 %v380, 5
      %v861 = vpop.permute.xlu0 %860
      %862 = vrot.lane.b32.xlu0 %v383, 5
      %v863 = vpop.permute.xlu0 %862
      %864 = vrot.lane.b32.xlu0 %v385, 5
      %v865 = vpop.permute.xlu0 %864
      %866 = vrot.lane.b32.xlu0 %v388, 5
      %v867 = vpop.permute.xlu0 %866
      %868 = vrot.lane.b32.xlu0 %v390, 5
      %v869 = vpop.permute.xlu0 %868
      %870 = vrot.lane.b32.xlu0 %v393, 5
      %v871 = vpop.permute.xlu0 %870
      %872 = vrot.lane.b32.xlu0 %v395, 5
      %v873 = vpop.permute.xlu0 %872
      %874 = vrot.lane.b32.xlu0 %v398, 5
      %v875 = vpop.permute.xlu0 %874
      %876 = vrot.lane.b32.xlu0 %v400, 5
      %v877 = vpop.permute.xlu0 %876
      %878 = vrot.lane.b32.xlu0 %v403, 5
      %v879 = vpop.permute.xlu0 %878
      %880 = vrot.lane.b32.xlu0 %v405, 5
      %v881 = vpop.permute.xlu0 %880
      %882 = vrot.lane.b32.xlu0 %v408, 5
      %v883 = vpop.permute.xlu0 %882
      %884 = vrot.lane.b32.xlu0 %v410, 5
      %v885 = vpop.permute.xlu0 %884
      %886 = vrot.lane.b32.xlu0 %v413, 5
      %v887 = vpop.permute.xlu0 %886
      %888 = vrot.lane.b32.xlu0 %v415, 5
      %v889 = vpop.permute.xlu0 %888
      %890 = vrot.lane.b32.xlu0 %v418, 5
      %v891 = vpop.permute.xlu0 %890
      %892 = vrot.lane.b32.xlu0 %v420, 5
      %v893 = vpop.permute.xlu0 %892
      %894 = vrot.lane.b32.xlu0 %v423, 5
      %v895 = vpop.permute.xlu0 %894
      %896 = vrot.lane.b32.xlu0 %v425, 5
      %v897 = vpop.permute.xlu0 %896
      %898 = vrot.lane.b32.xlu0 %v428, 5
      %v899 = vpop.permute.xlu0 %898
      %900 = vrot.lane.b32.xlu0 %v430, 5
      %v901 = vpop.permute.xlu0 %900
      %902 = vrot.lane.b32.xlu0 %v433, 5
      %v903 = vpop.permute.xlu0 %902
      %904 = vrot.lane.b32.xlu0 %v435, 5
      %v905 = vpop.permute.xlu0 %904
      %906 = vrot.lane.b32.xlu0 %v446, 5
      %v907 = vpop.permute.xlu0 %906
      %908 = vrot.lane.b32.xlu0 %v448, 5
      %v909 = vpop.permute.xlu0 %908
      %942 = vrot.lane.b32.xlu0 %v178, 6
      %v943 = vpop.permute.xlu0 %942
      %944 = vrot.lane.b32.xlu0 %v179, 6
      %v945 = vpop.permute.xlu0 %944
      %946 = vrot.lane.b32.xlu0 %v181, 6
      %v947 = vpop.permute.xlu0 %946
      %948 = vrot.lane.b32.xlu0 %v182, 6
      %v949 = vpop.permute.xlu0 %948
      %950 = vrot.lane.b32.xlu0 %v184, 6
      %v951 = vpop.permute.xlu0 %950
      %952 = vrot.lane.b32.xlu0 %v185, 6
      %v953 = vpop.permute.xlu0 %952
      %954 = vrot.lane.b32.xlu0 %v187, 6
      %v955 = vpop.permute.xlu0 %954
      %956 = vrot.lane.b32.xlu0 %v188, 6
      %v957 = vpop.permute.xlu0 %956
      %958 = vrot.lane.b32.xlu0 %v190, 6
      %v959 = vpop.permute.xlu0 %958
      %960 = vrot.lane.b32.xlu0 %v191, 6
      %v961 = vpop.permute.xlu0 %960
      %962 = vrot.lane.b32.xlu0 %v193, 6
      %v963 = vpop.permute.xlu0 %962
      %964 = vrot.lane.b32.xlu0 %v194, 6
      %v965 = vpop.permute.xlu0 %964
      %966 = vrot.lane.b32.xlu0 %v196, 6
      %v967 = vpop.permute.xlu0 %966
      %968 = vrot.lane.b32.xlu0 %v197, 6
      %v969 = vpop.permute.xlu0 %968
      %970 = vrot.lane.b32.xlu0 %v199, 6
      %v971 = vpop.permute.xlu0 %970
      %972 = vrot.lane.b32.xlu0 %v200, 6
      %v973 = vpop.permute.xlu0 %972
      %974 = vrot.lane.b32.xlu0 %v202, 6
      %v975 = vpop.permute.xlu0 %974
      %976 = vrot.lane.b32.xlu0 %v203, 6
      %v977 = vpop.permute.xlu0 %976
      %978 = vrot.lane.b32.xlu0 %v205, 6
      %v979 = vpop.permute.xlu0 %978
      %980 = vrot.lane.b32.xlu0 %v206, 6
      %v981 = vpop.permute.xlu0 %980
      %982 = vrot.lane.b32.xlu0 %v208, 6
      %v983 = vpop.permute.xlu0 %982
      %984 = vrot.lane.b32.xlu0 %v209, 6
      %v985 = vpop.permute.xlu0 %984
      %986 = vrot.lane.b32.xlu0 %v211, 6
      %v987 = vpop.permute.xlu0 %986
      %988 = vrot.lane.b32.xlu0 %v212, 6
      %v989 = vpop.permute.xlu0 %988
      %990 = vrot.lane.b32.xlu0 %v214, 6
      %v991 = vpop.permute.xlu0 %990
      %992 = vrot.lane.b32.xlu0 %v215, 6
      %v993 = vpop.permute.xlu0 %992
      %994 = vrot.lane.b32.xlu0 %v217, 6
      %v995 = vpop.permute.xlu0 %994
      %996 = vrot.lane.b32.xlu0 %v218, 6
      %v997 = vpop.permute.xlu0 %996
      %998 = vrot.lane.b32.xlu0 %v220, 6
      %v999 = vpop.permute.xlu0 %998
      %1000 = vrot.lane.b32.xlu0 %v221, 6
      %v1001 = vpop.permute.xlu0 %1000
      %1002 = vrot.lane.b32.xlu0 %v223, 6
      %v1003 = vpop.permute.xlu0 %1002
      %1004 = vrot.lane.b32.xlu0 %v224, 6
      %v1005 = vpop.permute.xlu0 %1004
      %1038 = vrot.lane.b32.xlu0 %v287, 7
      %v1039 = vpop.permute.xlu0 %1038
      %1040 = vrot.lane.b32.xlu0 %v289, 7
      %v1041 = vpop.permute.xlu0 %1040
      %1042 = vrot.lane.b32.xlu0 %v292, 7
      %v1043 = vpop.permute.xlu0 %1042
      %1044 = vrot.lane.b32.xlu0 %v294, 7
      %v1045 = vpop.permute.xlu0 %1044
      %1046 = vrot.lane.b32.xlu0 %v297, 7
      %v1047 = vpop.permute.xlu0 %1046
      %1048 = vrot.lane.b32.xlu0 %v299, 7
      %v1049 = vpop.permute.xlu0 %1048
      %1050 = vrot.lane.b32.xlu0 %v302, 7
      %v1051 = vpop.permute.xlu0 %1050
      %1052 = vrot.lane.b32.xlu0 %v304, 7
      %v1053 = vpop.permute.xlu0 %1052
      %1054 = vrot.lane.b32.xlu0 %v307, 7
      %v1055 = vpop.permute.xlu0 %1054
      %1056 = vrot.lane.b32.xlu0 %v309, 7
      %v1057 = vpop.permute.xlu0 %1056
      %1058 = vrot.lane.b32.xlu0 %v312, 7
      %v1059 = vpop.permute.xlu0 %1058
      %1060 = vrot.lane.b32.xlu0 %v314, 7
      %v1061 = vpop.permute.xlu0 %1060
      %1062 = vrot.lane.b32.xlu0 %v317, 7
      %v1063 = vpop.permute.xlu0 %1062
      %1064 = vrot.lane.b32.xlu0 %v319, 7
      %v1065 = vpop.permute.xlu0 %1064
      %1066 = vrot.lane.b32.xlu0 %v322, 7
      %v1067 = vpop.permute.xlu0 %1066
      %1068 = vrot.lane.b32.xlu0 %v324, 7
      %v1069 = vpop.permute.xlu0 %1068
      %1070 = vrot.lane.b32.xlu0 %v327, 7
      %v1071 = vpop.permute.xlu0 %1070
      %1072 = vrot.lane.b32.xlu0 %v329, 7
      %v1073 = vpop.permute.xlu0 %1072
      %1074 = vrot.lane.b32.xlu0 %v332, 7
      %v1075 = vpop.permute.xlu0 %1074
      %1076 = vrot.lane.b32.xlu0 %v334, 7
      %v1077 = vpop.permute.xlu0 %1076
      %1078 = vrot.lane.b32.xlu0 %v337, 7
      %v1079 = vpop.permute.xlu0 %1078
      %1080 = vrot.lane.b32.xlu0 %v339, 7
      %v1081 = vpop.permute.xlu0 %1080
      %1082 = vrot.lane.b32.xlu0 %v342, 7
      %v1083 = vpop.permute.xlu0 %1082
      %1084 = vrot.lane.b32.xlu0 %v344, 7
      %v1085 = vpop.permute.xlu0 %1084
      %1086 = vrot.lane.b32.xlu0 %v347, 7
      %v1087 = vpop.permute.xlu0 %1086
      %1088 = vrot.lane.b32.xlu0 %v349, 7
      %v1089 = vpop.permute.xlu0 %1088
      %1090 = vrot.lane.b32.xlu0 %v352, 7
      %v1091 = vpop.permute.xlu0 %1090
      %1092 = vrot.lane.b32.xlu0 %v354, 7
      %v1093 = vpop.permute.xlu0 %1092
      %1094 = vrot.lane.b32.xlu0 %v441, 7
      %v1095 = vpop.permute.xlu0 %1094
      %1096 = vrot.lane.b32.xlu0 %v443, 7
      %v1097 = vpop.permute.xlu0 %1096
      %1098 = vrot.lane.b32.xlu0 %v454, 7
      %v1099 = vpop.permute.xlu0 %1098
      %1100 = vrot.lane.b32.xlu0 %v456, 7
      %v1101 = vpop.permute.xlu0 %1100
      %1134 = vrot.lane.b32.xlu0 %v368, 8
      %v1135 = vpop.permute.xlu0 %1134
      %1136 = vrot.lane.b32.xlu0 %v370, 8
      %v1137 = vpop.permute.xlu0 %1136
      %1138 = vrot.lane.b32.xlu0 %v373, 8
      %v1139 = vpop.permute.xlu0 %1138
      %1140 = vrot.lane.b32.xlu0 %v375, 8
      %v1141 = vpop.permute.xlu0 %1140
      %1142 = vrot.lane.b32.xlu0 %v378, 8
      %v1143 = vpop.permute.xlu0 %1142
      %1144 = vrot.lane.b32.xlu0 %v380, 8
      %v1145 = vpop.permute.xlu0 %1144
      %1146 = vrot.lane.b32.xlu0 %v383, 8
      %v1147 = vpop.permute.xlu0 %1146
      %1148 = vrot.lane.b32.xlu0 %v385, 8
      %v1149 = vpop.permute.xlu0 %1148
      %1150 = vrot.lane.b32.xlu0 %v388, 8
      %v1151 = vpop.permute.xlu0 %1150
      %1152 = vrot.lane.b32.xlu0 %v390, 8
      %v1153 = vpop.permute.xlu0 %1152
      %1154 = vrot.lane.b32.xlu0 %v393, 8
      %v1155 = vpop.permute.xlu0 %1154
      %1156 = vrot.lane.b32.xlu0 %v395, 8
      %v1157 = vpop.permute.xlu0 %1156
      %1158 = vrot.lane.b32.xlu0 %v398, 8
      %v1159 = vpop.permute.xlu0 %1158
      %1160 = vrot.lane.b32.xlu0 %v400, 8
      %v1161 = vpop.permute.xlu0 %1160
      %1162 = vrot.lane.b32.xlu0 %v403, 8
      %v1163 = vpop.permute.xlu0 %1162
      %1164 = vrot.lane.b32.xlu0 %v405, 8
      %v1165 = vpop.permute.xlu0 %1164
      %1166 = vrot.lane.b32.xlu0 %v408, 8
      %v1167 = vpop.permute.xlu0 %1166
      %1168 = vrot.lane.b32.xlu0 %v410, 8
      %v1169 = vpop.permute.xlu0 %1168
      %1170 = vrot.lane.b32.xlu0 %v413, 8
      %v1171 = vpop.permute.xlu0 %1170
      %1172 = vrot.lane.b32.xlu0 %v415, 8
      %v1173 = vpop.permute.xlu0 %1172
      %1174 = vrot.lane.b32.xlu0 %v418, 8
      %v1175 = vpop.permute.xlu0 %1174
      %1176 = vrot.lane.b32.xlu0 %v420, 8
      %v1177 = vpop.permute.xlu0 %1176
      %1178 = vrot.lane.b32.xlu0 %v423, 8
      %v1179 = vpop.permute.xlu0 %1178
      %1180 = vrot.lane.b32.xlu0 %v425, 8
      %v1181 = vpop.permute.xlu0 %1180
      %1182 = vrot.lane.b32.xlu0 %v428, 8
      %v1183 = vpop.permute.xlu0 %1182
      %1184 = vrot.lane.b32.xlu0 %v430, 8
      %v1185 = vpop.permute.xlu0 %1184
      %1186 = vrot.lane.b32.xlu0 %v433, 8
      %v1187 = vpop.permute.xlu0 %1186
      %1188 = vrot.lane.b32.xlu0 %v435, 8
      %v1189 = vpop.permute.xlu0 %1188
      %1190 = vrot.lane.b32.xlu0 %v446, 8
      %v1191 = vpop.permute.xlu0 %1190
      %1192 = vrot.lane.b32.xlu0 %v448, 8
      %v1193 = vpop.permute.xlu0 %1192
      %1194 = vrot.lane.b32.xlu0 %v459, 8
      %v1195 = vpop.permute.xlu0 %1194
      %1196 = vrot.lane.b32.xlu0 %v461, 8
      %v1197 = vpop.permute.xlu0 %1196
      %vm1230 = vcmask 7168
      %v1231 = vsel %vm1230, %v172, %v463
      %v1232 = vsel %vm1230, %v173, %v465
      %v1233 = vsel %vm1230, %v175, %v467
      %v1234 = vsel %vm1230, %v176, %v469
      %v1235 = vsel %vm1230, %v178, %v471
      %v1236 = vsel %vm1230, %v179, %v473
      %v1237 = vsel %vm1230, %v181, %v475
      %v1238 = vsel %vm1230, %v182, %v477
      %v1239 = vsel %vm1230, %v184, %v479
      %v1240 = vsel %vm1230, %v185, %v481
      %v1241 = vsel %vm1230, %v187, %v483
      %v1242 = vsel %vm1230, %v188, %v485
      %v1243 = vsel %vm1230, %v190, %v487
      %v1244 = vsel %vm1230, %v191, %v489
      %v1245 = vsel %vm1230, %v193, %v491
      %v1246 = vsel %vm1230, %v194, %v493
      %v1247 = vsel %vm1230, %v196, %v495
      %v1248 = vsel %vm1230, %v197, %v497
      %v1249 = vsel %vm1230, %v199, %v499
      %v1250 = vsel %vm1230, %v200, %v501
      %v1251 = vsel %vm1230, %v202, %v503
      %v1252 = vsel %vm1230, %v203, %v505
      %v1253 = vsel %vm1230, %v205, %v507
      %v1254 = vsel %vm1230, %v206, %v509
      %v1255 = vsel %vm1230, %v208, %v511
      %v1256 = vsel %vm1230, %v209, %v513
      %v1257 = vsel %vm1230, %v211, %v515
      %v1258 = vsel %vm1230, %v212, %v517
      %v1259 = vsel %vm1230, %v214, %v519
      %v1260 = vsel %vm1230, %v215, %v521
      %v1261 = vsel %vm1230, %v217, %v523
      %v1262 = vsel %vm1230, %v218, %v525
      %vm1263 = vcmask 15360
      %v1264 = vsel %vm1263, %v1231, %v559
      %v1265 = vsel %vm1263, %v1232, %v561
      %v1266 = vsel %vm1263, %v1233, %v563
      %v1267 = vsel %vm1263, %v1234, %v565
      %v1268 = vsel %vm1263, %v1235, %v567
      %v1269 = vsel %vm1263, %v1236, %v569
      %v1270 = vsel %vm1263, %v1237, %v571
      %v1271 = vsel %vm1263, %v1238, %v573
      %v1272 = vsel %vm1263, %v1239, %v575
      %v1273 = vsel %vm1263, %v1240, %v577
      %v1274 = vsel %vm1263, %v1241, %v579
      %v1275 = vsel %vm1263, %v1242, %v581
      %v1276 = vsel %vm1263, %v1243, %v583
      %v1277 = vsel %vm1263, %v1244, %v585
      %v1278 = vsel %vm1263, %v1245, %v587
      %v1279 = vsel %vm1263, %v1246, %v589
      %v1280 = vsel %vm1263, %v1247, %v591
      %v1281 = vsel %vm1263, %v1248, %v593
      %v1282 = vsel %vm1263, %v1249, %v595
      %v1283 = vsel %vm1263, %v1250, %v597
      %v1284 = vsel %vm1263, %v1251, %v599
      %v1285 = vsel %vm1263, %v1252, %v601
      %v1286 = vsel %vm1263, %v1253, %v603
      %v1287 = vsel %vm1263, %v1254, %v605
      %v1288 = vsel %vm1263, %v1255, %v607
      %v1289 = vsel %vm1263, %v1256, %v609
      %v1290 = vsel %vm1263, %v1257, %v611
      %v1291 = vsel %vm1263, %v1258, %v613
      %v1292 = vsel %vm1263, %v1259, %v615
      %v1293 = vsel %vm1263, %v1260, %v617
      %v1294 = vsel %vm1263, %v1261, %v619
      %v1295 = vsel %vm1263, %v1262, %v621
      %vm1296 = vcmask 23552
      %v1297 = vsel %vm1296, %v1264, %v655
      %v1298 = vsel %vm1296, %v1265, %v657
      %v1299 = vsel %vm1296, %v1266, %v659
      %v1300 = vsel %vm1296, %v1267, %v661
      %v1301 = vsel %vm1296, %v1268, %v663
      %v1302 = vsel %vm1296, %v1269, %v665
      %v1303 = vsel %vm1296, %v1270, %v667
      %v1304 = vsel %vm1296, %v1271, %v669
      %v1305 = vsel %vm1296, %v1272, %v671
      %v1306 = vsel %vm1296, %v1273, %v673
      %v1307 = vsel %vm1296, %v1274, %v675
      %v1308 = vsel %vm1296, %v1275, %v677
      %v1309 = vsel %vm1296, %v1276, %v679
      %v1310 = vsel %vm1296, %v1277, %v681
      %v1311 = vsel %vm1296, %v1278, %v683
      %v1312 = vsel %vm1296, %v1279, %v685
      %v1313 = vsel %vm1296, %v1280, %v687
      %v1314 = vsel %vm1296, %v1281, %v689
      %v1315 = vsel %vm1296, %v1282, %v691
      %v1316 = vsel %vm1296, %v1283, %v693
      %v1317 = vsel %vm1296, %v1284, %v695
      %v1318 = vsel %vm1296, %v1285, %v697
      %v1319 = vsel %vm1296, %v1286, %v699
      %v1320 = vsel %vm1296, %v1287, %v701
      %v1321 = vsel %vm1296, %v1288, %v703
      %v1322 = vsel %vm1296, %v1289, %v705
      %v1323 = vsel %vm1296, %v1290, %v707
      %v1324 = vsel %vm1296, %v1291, %v709
      %v1325 = vsel %vm1296, %v1292, %v711
      %v1326 = vsel %vm1296, %v1293, %v713
      %v1327 = vsel %vm1296, %v1294, %v715
      %v1328 = vsel %vm1296, %v1295, %v717
      %vm1329 = vcmask 31744
      %v1330 = vsel %vm1329, %v1297, %v751
      %v1331 = vsel %vm1329, %v1298, %v753
      %v1332 = vsel %vm1329, %v1299, %v755
      %v1333 = vsel %vm1329, %v1300, %v757
      %v1334 = vsel %vm1329, %v1301, %v759
      %v1335 = vsel %vm1329, %v1302, %v761
      %v1336 = vsel %vm1329, %v1303, %v763
      %v1337 = vsel %vm1329, %v1304, %v765
      %v1338 = vsel %vm1329, %v1305, %v767
      %v1339 = vsel %vm1329, %v1306, %v769
      %v1340 = vsel %vm1329, %v1307, %v771
      %v1341 = vsel %vm1329, %v1308, %v773
      %v1342 = vsel %vm1329, %v1309, %v775
      %v1343 = vsel %vm1329, %v1310, %v777
      %v1344 = vsel %vm1329, %v1311, %v779
      %v1345 = vsel %vm1329, %v1312, %v781
      %v1346 = vsel %vm1329, %v1313, %v783
      %v1347 = vsel %vm1329, %v1314, %v785
      %v1348 = vsel %vm1329, %v1315, %v787
      %v1349 = vsel %vm1329, %v1316, %v789
      %v1350 = vsel %vm1329, %v1317, %v791
      %v1351 = vsel %vm1329, %v1318, %v793
      %v1352 = vsel %vm1329, %v1319, %v795
      %v1353 = vsel %vm1329, %v1320, %v797
      %v1354 = vsel %vm1329, %v1321, %v799
      %v1355 = vsel %vm1329, %v1322, %v801
      %v1356 = vsel %vm1329, %v1323, %v803
      %v1357 = vsel %vm1329, %v1324, %v805
      %v1358 = vsel %vm1329, %v1325, %v807
      %v1359 = vsel %vm1329, %v1326, %v809
      %v1360 = vsel %vm1329, %v1327, %v811
      %v1361 = vsel %vm1329, %v1328, %v813
      %vm1362 = vcmask 39936
      %v1363 = vsel %vm1362, %v1330, %v847
      %v1364 = vsel %vm1362, %v1331, %v849
      %v1365 = vsel %vm1362, %v1332, %v851
      %v1366 = vsel %vm1362, %v1333, %v853
      %v1367 = vsel %vm1362, %v1334, %v855
      %v1368 = vsel %vm1362, %v1335, %v857
      %v1369 = vsel %vm1362, %v1336, %v859
      %v1370 = vsel %vm1362, %v1337, %v861
      %v1371 = vsel %vm1362, %v1338, %v863
      %v1372 = vsel %vm1362, %v1339, %v865
      %v1373 = vsel %vm1362, %v1340, %v867
      %v1374 = vsel %vm1362, %v1341, %v869
      %v1375 = vsel %vm1362, %v1342, %v871
      %v1376 = vsel %vm1362, %v1343, %v873
      %v1377 = vsel %vm1362, %v1344, %v875
      %v1378 = vsel %vm1362, %v1345, %v877
      %v1379 = vsel %vm1362, %v1346, %v879
      %v1380 = vsel %vm1362, %v1347, %v881
      %v1381 = vsel %vm1362, %v1348, %v883
      %v1382 = vsel %vm1362, %v1349, %v885
      %v1383 = vsel %vm1362, %v1350, %v887
      %v1384 = vsel %vm1362, %v1351, %v889
      %v1385 = vsel %vm1362, %v1352, %v891
      %v1386 = vsel %vm1362, %v1353, %v893
      %v1387 = vsel %vm1362, %v1354, %v895
      %v1388 = vsel %vm1362, %v1355, %v897
      %v1389 = vsel %vm1362, %v1356, %v899
      %v1390 = vsel %vm1362, %v1357, %v901
      %v1391 = vsel %vm1362, %v1358, %v903
      %v1392 = vsel %vm1362, %v1359, %v905
      %v1393 = vsel %vm1362, %v1360, %v907
      %v1394 = vsel %vm1362, %v1361, %v909
      %vm1395 = vcmask 48128
      %v1396 = vsel %vm1395, %v1363, %v943
      %v1397 = vsel %vm1395, %v1364, %v945
      %v1398 = vsel %vm1395, %v1365, %v947
      %v1399 = vsel %vm1395, %v1366, %v949
      %v1400 = vsel %vm1395, %v1367, %v951
      %v1401 = vsel %vm1395, %v1368, %v953
      %v1402 = vsel %vm1395, %v1369, %v955
      %v1403 = vsel %vm1395, %v1370, %v957
      %v1404 = vsel %vm1395, %v1371, %v959
      %v1405 = vsel %vm1395, %v1372, %v961
      %v1406 = vsel %vm1395, %v1373, %v963
      %v1407 = vsel %vm1395, %v1374, %v965
      %v1408 = vsel %vm1395, %v1375, %v967
      %v1409 = vsel %vm1395, %v1376, %v969
      %v1410 = vsel %vm1395, %v1377, %v971
      %v1411 = vsel %vm1395, %v1378, %v973
      %v1412 = vsel %vm1395, %v1379, %v975
      %v1413 = vsel %vm1395, %v1380, %v977
      %v1414 = vsel %vm1395, %v1381, %v979
      %v1415 = vsel %vm1395, %v1382, %v981
      %v1416 = vsel %vm1395, %v1383, %v983
      %v1417 = vsel %vm1395, %v1384, %v985
      %v1418 = vsel %vm1395, %v1385, %v987
      %v1419 = vsel %vm1395, %v1386, %v989
      %v1420 = vsel %vm1395, %v1387, %v991
      %v1421 = vsel %vm1395, %v1388, %v993
      %v1422 = vsel %vm1395, %v1389, %v995
      %v1423 = vsel %vm1395, %v1390, %v997
      %v1424 = vsel %vm1395, %v1391, %v999
      %v1425 = vsel %vm1395, %v1392, %v1001
      %v1426 = vsel %vm1395, %v1393, %v1003
      %v1427 = vsel %vm1395, %v1394, %v1005
      %vm1428 = vcmask 56320
      %v1429 = vsel %vm1428, %v1396, %v1039
      %v1430 = vsel %vm1428, %v1397, %v1041
      %v1431 = vsel %vm1428, %v1398, %v1043
      %v1432 = vsel %vm1428, %v1399, %v1045
      %v1433 = vsel %vm1428, %v1400, %v1047
      %v1434 = vsel %vm1428, %v1401, %v1049
      %v1435 = vsel %vm1428, %v1402, %v1051
      %v1436 = vsel %vm1428, %v1403, %v1053
      %v1437 = vsel %vm1428, %v1404, %v1055
      %v1438 = vsel %vm1428, %v1405, %v1057
      %v1439 = vsel %vm1428, %v1406, %v1059
      %v1440 = vsel %vm1428, %v1407, %v1061
      %v1441 = vsel %vm1428, %v1408, %v1063
      %v1442 = vsel %vm1428, %v1409, %v1065
      %v1443 = vsel %vm1428, %v1410, %v1067
      %v1444 = vsel %vm1428, %v1411, %v1069
      %v1445 = vsel %vm1428, %v1412, %v1071
      %v1446 = vsel %vm1428, %v1413, %v1073
      %v1447 = vsel %vm1428, %v1414, %v1075
      %v1448 = vsel %vm1428, %v1415, %v1077
      %v1449 = vsel %vm1428, %v1416, %v1079
      %v1450 = vsel %vm1428, %v1417, %v1081
      %v1451 = vsel %vm1428, %v1418, %v1083
      %v1452 = vsel %vm1428, %v1419, %v1085
      %v1453 = vsel %vm1428, %v1420, %v1087
      %v1454 = vsel %vm1428, %v1421, %v1089
      %v1455 = vsel %vm1428, %v1422, %v1091
      %v1456 = vsel %vm1428, %v1423, %v1093
      %v1457 = vsel %vm1428, %v1424, %v1095
      %v1458 = vsel %vm1428, %v1425, %v1097
      %v1459 = vsel %vm1428, %v1426, %v1099
      %v1460 = vsel %vm1428, %v1427, %v1101
      %vm1461 = vcmask 64512
      %v1462 = vsel %vm1461, %v1429, %v1135
      %v1463 = vsel %vm1461, %v1430, %v1137
      %v1464 = vsel %vm1461, %v1431, %v1139
      %v1465 = vsel %vm1461, %v1432, %v1141
      %v1466 = vsel %vm1461, %v1433, %v1143
      %v1467 = vsel %vm1461, %v1434, %v1145
      %v1468 = vsel %vm1461, %v1435, %v1147
      %v1469 = vsel %vm1461, %v1436, %v1149
      %v1470 = vsel %vm1461, %v1437, %v1151
      %v1471 = vsel %vm1461, %v1438, %v1153
      %v1472 = vsel %vm1461, %v1439, %v1155
      %v1473 = vsel %vm1461, %v1440, %v1157
      %v1474 = vsel %vm1461, %v1441, %v1159
      %v1475 = vsel %vm1461, %v1442, %v1161
      %v1476 = vsel %vm1461, %v1443, %v1163
      %v1477 = vsel %vm1461, %v1444, %v1165
      %v1478 = vsel %vm1461, %v1445, %v1167
      %v1479 = vsel %vm1461, %v1446, %v1169
      %v1480 = vsel %vm1461, %v1447, %v1171
      %v1481 = vsel %vm1461, %v1448, %v1173
      %v1482 = vsel %vm1461, %v1449, %v1175
      %v1483 = vsel %vm1461, %v1450, %v1177
      %v1484 = vsel %vm1461, %v1451, %v1179
      %v1485 = vsel %vm1461, %v1452, %v1181
      %v1486 = vsel %vm1461, %v1453, %v1183
      %v1487 = vsel %vm1461, %v1454, %v1185
      %v1488 = vsel %vm1461, %v1455, %v1187
      %v1489 = vsel %vm1461, %v1456, %v1189
      %v1490 = vsel %vm1461, %v1457, %v1191
      %v1491 = vsel %vm1461, %v1458, %v1193
      %v1492 = vsel %vm1461, %v1459, %v1195
      %v1493 = vsel %vm1461, %v1460, %v1197
      %v1494 = vpack.c.bf16 %v1463, %v1462
      %v1495 = vpack.c.bf16 %v1465, %v1464
      %v1496 = vpack.c.bf16 %v1467, %v1466
      %v1497 = vpack.c.bf16 %v1469, %v1468
      %v1498 = vpack.c.bf16 %v1471, %v1470
      %v1499 = vpack.c.bf16 %v1473, %v1472
      %v1500 = vpack.c.bf16 %v1475, %v1474
      %v1501 = vpack.c.bf16 %v1477, %v1476
      %v1502 = vpack.c.bf16 %v1479, %v1478
      %v1503 = vpack.c.bf16 %v1481, %v1480
      %v1504 = vpack.c.bf16 %v1483, %v1482
      %v1505 = vpack.c.bf16 %v1485, %v1484
      %v1506 = vpack.c.bf16 %v1487, %v1486
      %v1507 = vpack.c.bf16 %v1489, %v1488
      %v1508 = vpack.c.bf16 %v1491, %v1490
      %v1509 = vpack.c.bf16 %v1493, %v1492
      %v1510 = vld [vmem:[%s1] sm:$0xf]
      %v1511 = vld [vmem:[%s1 + $0x4] sm:$0x1]
      %v1512 = vld [vmem:[%s2] sm:$0x1]
      %v1514 = vlaneseq
      %v1515 = vshrl.u32 %v1514, 7
      %v1516 = vsub.s32 0, %v1515
      %v1517 = vrot.slane %v1512, %v1516
      %v1521 = vunpack.c.l.b16 %v1510
      %v1522 = vunpack.c.l.b16 %v1511
      %v1523 = vpack.c.b16 %v1522, %v1521
      %vm1524 = vcmask 72704
      %v1526 = vsel %vm1524, %v1494, 0
      %v1529 = vsel %vm1524, %v1495, 0
      %v1532 = vsel %vm1524, %v1496, 0
      %v1535 = vsel %vm1524, %v1497, 0
      %v1538 = vsel %vm1524, %v1498, 0
      %v1541 = vsel %vm1524, %v1499, 0
      %v1544 = vsel %vm1524, %v1500, 0
      %v1547 = vsel %vm1524, %v1501, 0
      %v1550 = vsel %vm1524, %v1502, 0
      %v1553 = vsel %vm1524, %v1503, 0
      %v1556 = vsel %vm1524, %v1504, 0
      %v1559 = vsel %vm1524, %v1505, 0
      %v1562 = vsel %vm1524, %v1506, 0
      %v1565 = vsel %vm1524, %v1507, 0
      %v1568 = vsel %vm1524, %v1508, 0
      %v1571 = vsel %vm1524, %v1509, 0
      %vm1573 = vcmask 1043456
      %vm1574 = vcmask 1044480
      %v1575 = vsel %vm1573, 4294967295, 65535
      %v1576 = vsel %vm1574, %v1575, 0
      %v1578 = vand.u32 %v1523, %v1576
      %1580 = vmatprep.subr.bf16.mxu0 0
      %1581 = vmatpush1.bf16.msra.mxu0 %v1578
      %1582 = vmatprep.subr.bf16.mxu0 0
      %1583 = vmatpush1.bf16.msra.mxu0 0
      %1584 = vmatprep.subr.bf16.mxu0 0
      %1585 = vmatpush1.bf16.msra.mxu0 0
      %1586 = vmatprep.subr.bf16.mxu0 0
      %1587 = vmatpush1.bf16.msra.mxu0 0
      %1588 = vmatprep.subr.bf16.mxu0 0
      %1589 = vmatpush1.bf16.msra.mxu0 0
      %1590 = vmatprep.subr.bf16.mxu0 0
      %1591 = vmatpush1.bf16.msra.mxu0 0
      %1592 = vmatprep.subr.bf16.mxu0 0
      %1593 = vmatpush1.bf16.msra.mxu0 0
      %1594 = vmatprep.subr.bf16.mxu0 0
      %1595 = vmatpush1.bf16.msra.mxu0 0
      %1596 = vmatprep.subr.bf16.mxu0 0
      %1597 = vmatpush1.bf16.msra.mxu0 0
      %1598 = vmatprep.subr.bf16.mxu0 0
      %1599 = vmatpush1.bf16.msra.mxu0 0
      %1600 = vmatprep.subr.bf16.mxu0 0
      %1601 = vmatpush1.bf16.msra.mxu0 0
      %1602 = vmatprep.subr.bf16.mxu0 0
      %1603 = vmatpush1.bf16.msra.mxu0 0
      %1604 = vmatprep.subr.bf16.mxu0 0
      %1605 = vmatpush1.bf16.msra.mxu0 0
      %1606 = vmatprep.subr.bf16.mxu0 0
      %1607 = vmatpush1.bf16.msra.mxu0 0
      %1608 = vmatprep.subr.bf16.mxu0 0
      %1609 = vmatpush1.bf16.msra.mxu0 0
      %1610 = vmatprep.subr.bf16.mxu0 0
      %1611 = vmatpush1.bf16.msra.mxu0 0
      %1612 = vmatprep.mubr.bf16.mxu0 0
      %1613 = vmatmul.mubr.bf16.gmra.mrb[0].mxu0 %v1526
      %v1614 = vpop.f32.mrb[0].mxu0
      %v1615 = vadd.f32 %v1517, %v1614
      %v1616 = vpop.f32.mrb[0].mxu0
      %v1617 = vpop.f32.mrb[0].mxu0
      %v1618 = vadd.f32 %v1517, %v1617
      %v1619 = vpop.f32.mrb[0].mxu0
      %1620 = vmatprep.mubr.bf16.mxu0 0
      %1621 = vmatmul.mubr.bf16.gmra.mrb[0].mxu0 %v1529
      %v1622 = vpop.f32.mrb[0].mxu0
      %v1623 = vadd.f32 %v1517, %v1622
      %v1624 = vpop.f32.mrb[0].mxu0
      %v1625 = vpop.f32.mrb[0].mxu0
      %v1626 = vadd.f32 %v1517, %v1625
      %v1627 = vpop.f32.mrb[0].mxu0
      %1628 = vmatprep.mubr.bf16.mxu0 0
      %1629 = vmatmul.mubr.bf16.gmra.mrb[0].mxu0 %v1532
      %v1630 = vpop.f32.mrb[0].mxu0
      %v1631 = vadd.f32 %v1517, %v1630
      %v1632 = vpop.f32.mrb[0].mxu0
      %v1633 = vpop.f32.mrb[0].mxu0
      %v1634 = vadd.f32 %v1517, %v1633
      %v1635 = vpop.f32.mrb[0].mxu0
      %1636 = vmatprep.mubr.bf16.mxu0 0
      %1637 = vmatmul.mubr.bf16.gmra.mrb[0].mxu0 %v1535
      %v1638 = vpop.f32.mrb[0].mxu0
      %v1639 = vadd.f32 %v1517, %v1638
      %v1640 = vpop.f32.mrb[0].mxu0
      %v1641 = vpop.f32.mrb[0].mxu0
      %v1642 = vadd.f32 %v1517, %v1641
      %v1643 = vpop.f32.mrb[0].mxu0
      %1644 = vmatprep.mubr.bf16.mxu0 0
      %1645 = vmatmul.mubr.bf16.gmra.mrb[0].mxu0 %v1538
      %v1646 = vpop.f32.mrb[0].mxu0
      %v1647 = vadd.f32 %v1517, %v1646
      %v1648 = vpop.f32.mrb[0].mxu0
      %v1649 = vpop.f32.mrb[0].mxu0
      %v1650 = vadd.f32 %v1517, %v1649
      %v1651 = vpop.f32.mrb[0].mxu0
      %1652 = vmatprep.mubr.bf16.mxu0 0
      %1653 = vmatmul.mubr.bf16.gmra.mrb[0].mxu0 %v1541
      %v1654 = vpop.f32.mrb[0].mxu0
      %v1655 = vadd.f32 %v1517, %v1654
      %v1656 = vpop.f32.mrb[0].mxu0
      %v1657 = vpop.f32.mrb[0].mxu0
      %v1658 = vadd.f32 %v1517, %v1657
      %v1659 = vpop.f32.mrb[0].mxu0
      %1660 = vmatprep.mubr.bf16.mxu0 0
      %1661 = vmatmul.mubr.bf16.gmra.mrb[0].mxu0 %v1544
      %v1662 = vpop.f32.mrb[0].mxu0
      %v1663 = vadd.f32 %v1517, %v1662
      %v1664 = vpop.f32.mrb[0].mxu0
      %v1665 = vpop.f32.mrb[0].mxu0
      %v1666 = vadd.f32 %v1517, %v1665
      %v1667 = vpop.f32.mrb[0].mxu0
      %1668 = vmatprep.mubr.bf16.mxu0 0
      %1669 = vmatmul.mubr.bf16.gmra.mrb[0].mxu0 %v1547
      %v1670 = vpop.f32.mrb[0].mxu0
      %v1671 = vadd.f32 %v1517, %v1670
      %v1672 = vpop.f32.mrb[0].mxu0
      %v1673 = vpop.f32.mrb[0].mxu0
      %v1674 = vadd.f32 %v1517, %v1673
      %v1675 = vpop.f32.mrb[0].mxu0
      %1676 = vmatprep.mubr.bf16.mxu0 0
      %1677 = vmatmul.mubr.bf16.gmra.mrb[0].mxu0 %v1550
      %v1678 = vpop.f32.mrb[0].mxu0
      %v1679 = vadd.f32 %v1517, %v1678
      %v1680 = vpop.f32.mrb[0].mxu0
      %v1681 = vpop.f32.mrb[0].mxu0
      %v1682 = vadd.f32 %v1517, %v1681
      %v1683 = vpop.f32.mrb[0].mxu0
      %1684 = vmatprep.mubr.bf16.mxu0 0
      %1685 = vmatmul.mubr.bf16.gmra.mrb[0].mxu0 %v1553
      %v1686 = vpop.f32.mrb[0].mxu0
      %v1687 = vadd.f32 %v1517, %v1686
      %v1688 = vpop.f32.mrb[0].mxu0
      %v1689 = vpop.f32.mrb[0].mxu0
      %v1690 = vadd.f32 %v1517, %v1689
      %v1691 = vpop.f32.mrb[0].mxu0
      %1692 = vmatprep.mubr.bf16.mxu0 0
      %1693 = vmatmul.mubr.bf16.gmra.mrb[0].mxu0 %v1556
      %v1694 = vpop.f32.mrb[0].mxu0
      %v1695 = vadd.f32 %v1517, %v1694
      %v1696 = vpop.f32.mrb[0].mxu0
      %v1697 = vpop.f32.mrb[0].mxu0
      %v1698 = vadd.f32 %v1517, %v1697
      %v1699 = vpop.f32.mrb[0].mxu0
      %1700 = vmatprep.mubr.bf16.mxu0 0
      %1701 = vmatmul.mubr.bf16.gmra.mrb[0].mxu0 %v1559
      %v1702 = vpop.f32.mrb[0].mxu0
      %v1703 = vadd.f32 %v1517, %v1702
      %v1704 = vpop.f32.mrb[0].mxu0
      %v1705 = vpop.f32.mrb[0].mxu0
      %v1706 = vadd.f32 %v1517, %v1705
      %v1707 = vpop.f32.mrb[0].mxu0
      %1708 = vmatprep.mubr.bf16.mxu0 0
      %1709 = vmatmul.mubr.bf16.gmra.mrb[0].mxu0 %v1562
      %v1710 = vpop.f32.mrb[0].mxu0
      %v1711 = vadd.f32 %v1517, %v1710
      %v1712 = vpop.f32.mrb[0].mxu0
      %v1713 = vpop.f32.mrb[0].mxu0
      %v1714 = vadd.f32 %v1517, %v1713
      %v1715 = vpop.f32.mrb[0].mxu0
      %1716 = vmatprep.mubr.bf16.mxu0 0
      %1717 = vmatmul.mubr.bf16.gmra.mrb[0].mxu0 %v1565
      %v1718 = vpop.f32.mrb[0].mxu0
      %v1719 = vadd.f32 %v1517, %v1718
      %v1720 = vpop.f32.mrb[0].mxu0
      %v1721 = vpop.f32.mrb[0].mxu0
      %v1722 = vadd.f32 %v1517, %v1721
      %v1723 = vpop.f32.mrb[0].mxu0
      %1724 = vmatprep.mubr.bf16.mxu0 0
      %1725 = vmatmul.mubr.bf16.gmra.mrb[0].mxu0 %v1568
      %v1726 = vpop.f32.mrb[0].mxu0
      %v1727 = vadd.f32 %v1517, %v1726
      %v1728 = vpop.f32.mrb[0].mxu0
      %v1729 = vpop.f32.mrb[0].mxu0
      %v1730 = vadd.f32 %v1517, %v1729
      %v1731 = vpop.f32.mrb[0].mxu0
      %1732 = vmatprep.mubr.bf16.mxu0 0
      %1733 = vmatmul.mubr.bf16.gmra.mrb[0].mxu0 %v1571
      %v1734 = vpop.f32.mrb[0].mxu0
      %v1735 = vadd.f32 %v1517, %v1734
      %v1736 = vpop.f32.mrb[0].mxu0
      %v1737 = vpop.f32.mrb[0].mxu0
      %v1738 = vadd.f32 %v1517, %v1737
      %v1739 = vpop.f32.mrb[0].mxu0
      %1740 = vdwg.mxu0
      %vm1741 = vcmask 130048
      %1742 = vst.msk [vmem:[%s170] sm:$0xff] %vm1741, %v1615
      %1743 = vst.msk [vmem:[%s170 + $0x8] sm:$0xff] %vm1741, %v1618
      %1744 = vst.msk [vmem:[%s170 + $0x10] sm:$0xff] %vm1741, %v1623
      %1745 = vst.msk [vmem:[%s170 + $0x18] sm:$0xff] %vm1741, %v1626
      %1746 = vst.msk [vmem:[%s170 + $0x20] sm:$0xff] %vm1741, %v1631
      %1747 = vst.msk [vmem:[%s170 + $0x28] sm:$0xff] %vm1741, %v1634
      %1748 = vst.msk [vmem:[%s170 + $0x30] sm:$0xff] %vm1741, %v1639
      %1749 = vst.msk [vmem:[%s170 + $0x38] sm:$0xff] %vm1741, %v1642
      %1750 = vst.msk [vmem:[%s170 + $0x40] sm:$0xff] %vm1741, %v1647
      %1751 = vst.msk [vmem:[%s170 + $0x48] sm:$0xff] %vm1741, %v1650
      %1752 = vst.msk [vmem:[%s170 + $0x50] sm:$0xff] %vm1741, %v1655
      %1753 = vst.msk [vmem:[%s170 + $0x58] sm:$0xff] %vm1741, %v1658
      %1754 = vst.msk [vmem:[%s170 + $0x60] sm:$0xff] %vm1741, %v1663
      %1755 = vst.msk [vmem:[%s170 + $0x68] sm:$0xff] %vm1741, %v1666
      %1756 = vst.msk [vmem:[%s170 + $0x70] sm:$0xff] %vm1741, %v1671
      %1757 = vst.msk [vmem:[%s170 + $0x78] sm:$0xff] %vm1741, %v1674
      %1758 = vst.msk [vmem:[%s170 + $0x80] sm:$0xff] %vm1741, %v1679
      %1759 = vst.msk [vmem:[%s170 + $0x88] sm:$0xff] %vm1741, %v1682
      %1760 = vst.msk [vmem:[%s170 + $0x90] sm:$0xff] %vm1741, %v1687
      %1761 = vst.msk [vmem:[%s170 + $0x98] sm:$0xff] %vm1741, %v1690
      %1762 = vst.msk [vmem:[%s170 + $0xa0] sm:$0xff] %vm1741, %v1695
      %1763 = vst.msk [vmem:[%s170 + $0xa8] sm:$0xff] %vm1741, %v1698
      %1764 = vst.msk [vmem:[%s170 + $0xb0] sm:$0xff] %vm1741, %v1703
      %1765 = vst.msk [vmem:[%s170 + $0xb8] sm:$0xff] %vm1741, %v1706
      %1766 = vst.msk [vmem:[%s170 + $0xc0] sm:$0xff] %vm1741, %v1711
      %1767 = vst.msk [vmem:[%s170 + $0xc8] sm:$0xff] %vm1741, %v1714
      %1768 = vst.msk [vmem:[%s170 + $0xd0] sm:$0xff] %vm1741, %v1719
      %1769 = vst.msk [vmem:[%s170 + $0xd8] sm:$0xff] %vm1741, %v1722
      %1770 = vst.msk [vmem:[%s170 + $0xe0] sm:$0xff] %vm1741, %v1727
      %1771 = vst.msk [vmem:[%s170 + $0xe8] sm:$0xff] %vm1741, %v1730
      %1772 = vst.msk [vmem:[%s170 + $0xf0] sm:$0xff] %vm1741, %v1735
      %1773 = vst.msk [vmem:[%s170 + $0xf8] sm:$0xff] %vm1741, %v1738
      %p1774 = scmp.lt.s32.totalorder %s14, 1
      %s1775 = scalar_select %p1774, %s14, 1
      %s1776 = smul.addr %s1775, 32
      %s1777 = smul.addr %s1776, 8
      %s1778 = scalar_lea.vmem %s3, %s1777
      // Predicated region
      $region33: #{wavemix_forward.7} parent=31 // pred_check
        %p1779 = pneg %p100
      $region34: #{wavemix_forward.7} parent=31 // pred_check_branch
        %1781 = sbr.rel (%p1779) target = $region36
      $region35: #{wavemix_forward.7} parent=31 // pred_region
        _
      $region36: #{wavemix_forward.7} parent=31 // pred_fallthru
        _
    $region32: #{wavemix_forward.7} parent=5 // pred_fallthru
      _
    %p1782 = scmp.le.s32.totalorder 2, %s9
    // Predicated region
    $region37: #{wavemix_forward.7} parent=5 // pred_check
      %p1783 = pneg %p1782
    $region38: #{wavemix_forward.7} parent=5 // pred_check_branch
      %1785 = sbr.rel (%p1783) target = $region40
    $region39: #{wavemix_forward.7} parent=5 // pred_region
      %s1786 = ssub.s32 %s9, 2
      // Predicated region
      $region41: #{wavemix_forward.7} parent=39 // pred_check
        %p1787 = pneg %p106
      $region42: #{wavemix_forward.7} parent=39 // pred_check_branch
        %1789 = sbr.rel (%p1787) target = $region44
      $region43: #{wavemix_forward.7} parent=39 // pred_region
        %p1790 = scmp.lt.s32.totalorder %s15, 1
        %s1791 = scalar_select %p1790, %s15, 1
        %s1792 = smul.addr %s1791, 32
        %s1793 = smul.addr %s1792, 8
        %s1794 = scalar_lea.vmem %s3, %s1793
      $region44: #{wavemix_forward.7} parent=39 // pred_fallthru
        _
    $region40: #{wavemix_forward.7} parent=5 // pred_fallthru
      _
  $region6: #{wavemix_forward.7} parent=0 // loop_footer
    %s13 = sadd.s32 1, %s9
  $region7: #{wavemix_forward.7} parent=0 // loop_footer_branch
    %8 = sbr.rel target = $region3
  $region8: #{wavemix_forward.7} parent=0 // loop_exit
    _

// kernel: wavemix_forward.8
$region0: #{wavemix_forward.8}
  #allocation0 [shape = 'u32[]', space=smem, size = 0x4, offset = 0x4, fixed_abs, tag = 'smem constant byte address 0x4 - core index']
  #allocation1 [shape = 'u32[144,128]{1,0:T(1,128)}', space=vmem, size = 0x12000, scoped, tag = 'internal scratch']
  %s0 = inlined_call_operand.vmem [shape: f32[2,18,18,16], index: 0, kind: input, shape index: {}]
  %s1 = inlined_call_operand.vmem [shape: bf16[144,32], index: 1, kind: input, shape index: {}]
  %s2 = inlined_call_operand.vmem [shape: f32[1,32], index: 2, kind: input, shape index: {}]
  %s3 = inlined_call_operand.vmem [shape: f32[2,256,32], index: 3, kind: output, shape index: {}]
  %s4 = sld [smem:[#allocation0]]
  $region45: #{wavemix_forward.8} parent=0
    _
  %s6 = ssub.s32 1, %s4
  %s7 = scalar_select 0, %s6, %s4
  loop: start=0, step=1, limit=4
  $region2: #{wavemix_forward.8} parent=0 // loop_pre_header
    _
  $region3: #{wavemix_forward.8} parent=0 // loop_header
    %s9 = sphi 0, %s13
    %p10 = scmp.ge.s32.totalorder %s9, 4
    %s19 = sphi 0, %s21
    %s22 = sphi 0, %s19
    %s23 = sphi 0, %s22
    %s39 = sphi 0, %s23
    %s43 = sphi 0, %s43
    %s45 = sphi 0, %s43
    %s46 = sphi 0, %s45
    %s60 = sphi 0, %s46
    %s64 = sphi 0, %s64
    %s66 = sphi 0, %s64
    %s67 = sphi 0, %s66
    %s81 = sphi 0, %s67
    %s87 = sphi 0, %s89
    %s90 = sphi 0, %s87
    %s91 = sphi 0, %s90
    %s107 = sphi 0, %s91
  $region4: #{wavemix_forward.8} parent=0 // loop_header_branch
    %12 = sbr.rel (%p10) target = $region8
  $region5: #{wavemix_forward.8} parent=0 // loop_body
    %s14 = ssub.s32 %s9, 1
    %s15 = ssub.s32 %s9, 2
    %s16 = sadd.s32 %s9, 1
    %s17 = ssub.s32 %s9, %s16
    %p18 = scmp.eq.s32.totalorder %s17, 0
    %s20 = sadd.s32 %s19, 1
    %s21 = scalar_select %p18, %s19, %s20
    %p24 = pneg %p18
    %p25 = scmp.eq.s32.totalorder %s9, 1
    %p26 = por %p24, %p25
    %p27 = scmp.ne.s32.totalorder %s19, %s22
    %p28 = scmp.eq.s32.totalorder %s9, 0
    %p29 = por %p27, %p28
    %p30 = scmp.ne.s32.totalorder %s19, %s22
    %p31 = scmp.eq.s32.totalorder %s14, 1
    %p32 = por %p30, %p31
    %p33 = scmp.ne.s32.totalorder %s22, %s23
    %p34 = scmp.eq.s32.totalorder %s14, 0
    %p35 = por %p33, %p34
    %p36 = scmp.ne.s32.totalorder %s22, %s23
    %p37 = scmp.eq.s32.totalorder %s15, 1
    %p38 = por %p36, %p37
    %p40 = scmp.ne.s32.totalorder %s23, %s39
    %p41 = scmp.eq.s32.totalorder %s15, 0
    %p42 = por %p40, %p41
    %s44 = sadd.s32 %s43, 1
    %p47 = scmp.eq.s32.totalorder %s9, 1
    %p48 = scmp.ne.s32.totalorder %s43, %s45
    %p49 = scmp.eq.s32.totalorder %s9, 0
    %p50 = por %p48, %p49
    %p51 = scmp.ne.s32.totalorder %s43, %s45
    %p52 = scmp.eq.s32.totalorder %s14, 1
    %p53 = por %p51, %p52
    %p54 = scmp.ne.s32.totalorder %s45, %s46
    %p55 = scmp.eq.s32.totalorder %s14, 0
    %p56 = por %p54, %p55
    %p57 = scmp.ne.s32.totalorder %s45, %s46
    %p58 = scmp.eq.s32.totalorder %s15, 1
    %p59 = por %p57, %p58
    %p61 = scmp.ne.s32.totalorder %s46, %s60
    %p62 = scmp.eq.s32.totalorder %s15, 0
    %p63 = por %p61, %p62
    %s65 = sadd.s32 %s64, 1
    %p68 = scmp.eq.s32.totalorder %s9, 1
    %p69 = scmp.ne.s32.totalorder %s64, %s66
    %p70 = scmp.eq.s32.totalorder %s9, 0
    %p71 = por %p69, %p70
    %p72 = scmp.ne.s32.totalorder %s64, %s66
    %p73 = scmp.eq.s32.totalorder %s14, 1
    %p74 = por %p72, %p73
    %p75 = scmp.ne.s32.totalorder %s66, %s67
    %p76 = scmp.eq.s32.totalorder %s14, 0
    %p77 = por %p75, %p76
    %p78 = scmp.ne.s32.totalorder %s66, %s67
    %p79 = scmp.eq.s32.totalorder %s15, 1
    %p80 = por %p78, %p79
    %p82 = scmp.ne.s32.totalorder %s67, %s81
    %p83 = scmp.eq.s32.totalorder %s15, 0
    %p84 = por %p82, %p83
    %s85 = ssub.s32 %s9, %s16
    %p86 = scmp.eq.s32.totalorder %s85, 0
    %s88 = sadd.s32 %s87, 1
    %s89 = scalar_select %p86, %s87, %s88
    %p92 = pneg %p86
    %p93 = scmp.eq.s32.totalorder %s9, 1
    %p94 = por %p92, %p93
    %p95 = scmp.ne.s32.totalorder %s87, %s90
    %p96 = scmp.eq.s32.totalorder %s9, 0
    %p97 = por %p95, %p96
    %p98 = scmp.ne.s32.totalorder %s87, %s90
    %p99 = scmp.eq.s32.totalorder %s14, 1
    %p100 = por %p98, %p99
    %p101 = scmp.ne.s32.totalorder %s90, %s91
    %p102 = scmp.eq.s32.totalorder %s14, 0
    %p103 = por %p101, %p102
    %p104 = scmp.ne.s32.totalorder %s90, %s91
    %p105 = scmp.eq.s32.totalorder %s15, 1
    %p106 = por %p104, %p105
    %p108 = scmp.ne.s32.totalorder %s91, %s107
    %p109 = scmp.eq.s32.totalorder %s15, 0
    %p110 = por %p108, %p109
    %p111 = scmp.le.s32.totalorder 1, %s9
    %p112 = scmp.lt.s32.totalorder %s9, 3
    %p113 = pnand %p111, %p112
    %p114 = pneg %p113
    // Predicated region
    $region9: #{wavemix_forward.8} parent=5 // pred_check
      _
    $region10: #{wavemix_forward.8} parent=5 // pred_check_branch
      %116 = sbr.rel (%p113) target = $region12
    $region11: #{wavemix_forward.8} parent=5 // pred_region
      %s117 = ssub.s32 %s9, 1
      // Predicated region
      $region13: #{wavemix_forward.8} parent=11 // pred_check
        %p118 = pneg %p56
      $region14: #{wavemix_forward.8} parent=11 // pred_check_branch
        %120 = sbr.rel (%p118) target = $region16
      $region15: #{wavemix_forward.8} parent=11 // pred_region
        _
      $region16: #{wavemix_forward.8} parent=11 // pred_fallthru
        _
      // Predicated region
      $region17: #{wavemix_forward.8} parent=11 // pred_check
        %p121 = pneg %p77
      $region18: #{wavemix_forward.8} parent=11 // pred_check_branch
        %123 = sbr.rel (%p121) target = $region20
      $region19: #{wavemix_forward.8} parent=11 // pred_region
        _
      $region20: #{wavemix_forward.8} parent=11 // pred_fallthru
        _
    $region12: #{wavemix_forward.8} parent=5 // pred_fallthru
      _
    %p124 = scmp.lt.s32.totalorder %s9, 2
    // Predicated region
    $region21: #{wavemix_forward.8} parent=5 // pred_check
      %p125 = pneg %p124
    $region22: #{wavemix_forward.8} parent=5 // pred_check_branch
      %127 = sbr.rel (%p125) target = $region24
    $region23: #{wavemix_forward.8} parent=5 // pred_region
      // Predicated region
      $region25: #{wavemix_forward.8} parent=23 // pred_check
        %p128 = pneg %p29
      $region26: #{wavemix_forward.8} parent=23 // pred_check_branch
        %130 = sbr.rel (%p128) target = $region28
      $region27: #{wavemix_forward.8} parent=23 // pred_region
        %p131 = scmp.lt.s32.totalorder %s9, 1
        %s132 = scalar_select %p131, %s9, 1
        %s133 = smul.addr %s132, 54
        %s134 = smul.addr %s133, 8
        %s135 = scalar_lea.vmem %s0, %s134
      $region28: #{wavemix_forward.8} parent=23 // pred_fallthru
        _
    $region24: #{wavemix_forward.8} parent=5 // pred_fallthru
      _
    %p136 = scmp.le.s32.totalorder 1, %s9
    %p137 = scmp.lt.s32.totalorder %s9, 3
    %p138 = pnand %p136, %p137
    %p139 = pneg %p138
    // Predicated region
    $region29: #{wavemix_forward.8} parent=5 // pred_check
      _
    $region30: #{wavemix_forward.8} parent=5 // pred_check_branch
      %141 = sbr.rel (%p138) target = $region32
    $region31: #{wavemix_forward.8} parent=5 // pred_region
      %s142 = ssub.s32 %s9, 1
      %p143 = scmp.lt.s32.totalorder %s14, 1
      %s144 = scalar_select %p143, %s14, 1
      %s145 = smul.addr %s144, 54
      %s146 = smul.addr %s145, 8
      %s147 = scalar_lea.vmem %s0, %s146
      %p148 = pneg %p35
      %p149 = pneg %p32
      %p150 = pneg %p56
      %p151 = pneg %p53
      %p152 = pneg %p77
      %p153 = pneg %p74
      %p154 = pneg %p103
      %p155 = pneg %p100
      %p156 = scmp.lt.s32.totalorder %s14, 1
      %s157 = scalar_select %p156, %s14, 1
      %s158 = smul.addr %s157, 32
      %s159 = smul.addr %s158, 8
      %s160 = scalar_lea.vmem %s3, %s159
      %p161 = scmp.lt.s32.totalorder %s14, 1
      %s162 = scalar_select %p161, %s14, 1
      %s163 = smul.addr %s162, 54
      %s164 = smul.addr %s163, 8
      %s165 = scalar_lea.vmem %s0, %s164
      %p166 = scmp.lt.s32.totalorder %s14, 1
      %s167 = scalar_select %p166, %s14, 1
      %s168 = smul.addr %s167, 32
      %s169 = smul.addr %s168, 8
      %s170 = scalar_lea.vmem %s3, %s169
      %v172 = vld [vmem:[%s165] sm:$0xff]
      %v173 = vld [vmem:[%s165 + $0x8] sm:$0xff]
      %v174 = vld [vmem:[%s165 + $0x10] sm:$0x3]
      %v175 = vld [vmem:[%s165 + $0x18] sm:$0xff]
      %v176 = vld [vmem:[%s165 + $0x20] sm:$0xff]
      %v177 = vld [vmem:[%s165 + $0x28] sm:$0x3]
      %v178 = vld [vmem:[%s165 + $0x30] sm:$0xff]
      %v179 = vld [vmem:[%s165 + $0x38] sm:$0xff]
      %v180 = vld [vmem:[%s165 + $0x40] sm:$0x3]
      %v181 = vld [vmem:[%s165 + $0x48] sm:$0xff]
      %v182 = vld [vmem:[%s165 + $0x50] sm:$0xff]
      %v183 = vld [vmem:[%s165 + $0x58] sm:$0x3]
      %v184 = vld [vmem:[%s165 + $0x60] sm:$0xff]
      %v185 = vld [vmem:[%s165 + $0x68] sm:$0xff]
      %v186 = vld [vmem:[%s165 + $0x70] sm:$0x3]
      %v187 = vld [vmem:[%s165 + $0x78] sm:$0xff]
      %v188 = vld [vmem:[%s165 + $0x80] sm:$0xff]
      %v189 = vld [vmem:[%s165 + $0x88] sm:$0x3]
      %v190 = vld [vmem:[%s165 + $0x90] sm:$0xff]
      %v191 = vld [vmem:[%s165 + $0x98] sm:$0xff]
      %v192 = vld [vmem:[%s165 + $0xa0] sm:$0x3]
      %v193 = vld [vmem:[%s165 + $0xa8] sm:$0xff]
      %v194 = vld [vmem:[%s165 + $0xb0] sm:$0xff]
      %v195 = vld [vmem:[%s165 + $0xb8] sm:$0x3]
      %v196 = vld [vmem:[%s165 + $0xc0] sm:$0xff]
      %v197 = vld [vmem:[%s165 + $0xc8] sm:$0xff]
      %v198 = vld [vmem:[%s165 + $0xd0] sm:$0x3]
      %v199 = vld [vmem:[%s165 + $0xd8] sm:$0xff]
      %v200 = vld [vmem:[%s165 + $0xe0] sm:$0xff]
      %v201 = vld [vmem:[%s165 + $0xe8] sm:$0x3]
      %v202 = vld [vmem:[%s165 + $0xf0] sm:$0xff]
      %v203 = vld [vmem:[%s165 + $0xf8] sm:$0xff]
      %v204 = vld [vmem:[%s165 + $0x100] sm:$0x3]
      %v205 = vld [vmem:[%s165 + $0x108] sm:$0xff]
      %v206 = vld [vmem:[%s165 + $0x110] sm:$0xff]
      %v207 = vld [vmem:[%s165 + $0x118] sm:$0x3]
      %v208 = vld [vmem:[%s165 + $0x120] sm:$0xff]
      %v209 = vld [vmem:[%s165 + $0x128] sm:$0xff]
      %v210 = vld [vmem:[%s165 + $0x130] sm:$0x3]
      %v211 = vld [vmem:[%s165 + $0x138] sm:$0xff]
      %v212 = vld [vmem:[%s165 + $0x140] sm:$0xff]
      %v213 = vld [vmem:[%s165 + $0x148] sm:$0x3]
      %v214 = vld [vmem:[%s165 + $0x150] sm:$0xff]
      %v215 = vld [vmem:[%s165 + $0x158] sm:$0xff]
      %v216 = vld [vmem:[%s165 + $0x160] sm:$0x3]
      %v217 = vld [vmem:[%s165 + $0x168] sm:$0xff]
      %v218 = vld [vmem:[%s165 + $0x170] sm:$0xff]
      %v219 = vld [vmem:[%s165 + $0x178] sm:$0x3]
      %v220 = vld [vmem:[%s165 + $0x180] sm:$0xff]
      %v221 = vld [vmem:[%s165 + $0x188] sm:$0xff]
      %v222 = vld [vmem:[%s165 + $0x190] sm:$0x3]
      %v223 = vld [vmem:[%s165 + $0x198] sm:$0xff]
      %v224 = vld [vmem:[%s165 + $0x1a0] sm:$0xff]
      %v225 = vld [vmem:[%s165 + $0x1a8] sm:$0x3]
      %vm274 = vcmask 1046528
      %v275 = vrot.slane %v172, 1
      %v276 = vrot.slane %v173, 1
      %v277 = vsel %vm274, %v275, %v276
      %v278 = vrot.slane %v174, 1
      %v279 = vsel %vm274, %v276, %v278
      %v280 = vrot.slane %v175, 1
      %v281 = vrot.slane %v176, 1
      %v282 = vsel %vm274, %v280, %v281
      %v283 = vrot.slane %v177, 1
      %v284 = vsel %vm274, %v281, %v283
      %v285 = vrot.slane %v178, 1
      %v286 = vrot.slane %v179, 1
      %v287 = vsel %vm274, %v285, %v286
      %v288 = vrot.slane %v180, 1
      %v289 = vsel %vm274, %v286, %v288
      %v290 = vrot.slane %v181, 1
      %v291 = vrot.slane %v182, 1
      %v292 = vsel %vm274, %v290, %v291
      %v293 = vrot.slane %v183, 1
      %v294 = vsel %vm274, %v291, %v293
      %v295 = vrot.slane %v184, 1
      %v296 = vrot.slane %v185, 1
      %v297 = vsel %vm274, %v295, %v296
      %v298 = vrot.slane %v186, 1
      %v299 = vsel %vm274, %v296, %v298
      %v300 = vrot.slane %v187, 1
      %v301 = vrot.slane %v188, 1
      %v302 = vsel %vm274, %v300, %v301
      %v303 = vrot.slane %v189, 1
      %v304 = vsel %vm274, %v301, %v303
      %v305 = vrot.slane %v190, 1
      %v306 = vrot.slane %v191, 1
      %v307 = vsel %vm274, %v305, %v306
      %v308 = vrot.slane %v192, 1
      %v309 = vsel %vm274, %v306, %v308
      %v310 = vrot.slane %v193, 1
      %v311 = vrot.slane %v194, 1
      %v312 = vsel %vm274, %v310, %v311
      %v313 = vrot.slane %v195, 1
      %v314 = vsel %vm274, %v311, %v313
      %v315 = vrot.slane %v196, 1
      %v316 = vrot.slane %v197, 1
      %v317 = vsel %vm274, %v315, %v316
      %v318 = vrot.slane %v198, 1
      %v319 = vsel %vm274, %v316, %v318
      %v320 = vrot.slane %v199, 1
      %v321 = vrot.slane %v200, 1
      %v322 = vsel %vm274, %v320, %v321
      %v323 = vrot.slane %v201, 1
      %v324 = vsel %vm274, %v321, %v323
      %v325 = vrot.slane %v202, 1
      %v326 = vrot.slane %v203, 1
      %v327 = vsel %vm274, %v325, %v326
      %v328 = vrot.slane %v204, 1
      %v329 = vsel %vm274, %v326, %v328
      %v330 = vrot.slane %v205, 1
      %v331 = vrot.slane %v206, 1
      %v332 = vsel %vm274, %v330, %v331
      %v333 = vrot.slane %v207, 1
      %v334 = vsel %vm274, %v331, %v333
      %v335 = vrot.slane %v208, 1
      %v336 = vrot.slane %v209, 1
      %v337 = vsel %vm274, %v335, %v336
      %v338 = vrot.slane %v210, 1
      %v339 = vsel %vm274, %v336, %v338
      %v340 = vrot.slane %v211, 1
      %v341 = vrot.slane %v212, 1
      %v342 = vsel %vm274, %v340, %v341
      %v343 = vrot.slane %v213, 1
      %v344 = vsel %vm274, %v341, %v343
      %v345 = vrot.slane %v214, 1
      %v346 = vrot.slane %v215, 1
      %v347 = vsel %vm274, %v345, %v346
      %v348 = vrot.slane %v216, 1
      %v349 = vsel %vm274, %v346, %v348
      %v350 = vrot.slane %v217, 1
      %v351 = vrot.slane %v218, 1
      %v352 = vsel %vm274, %v350, %v351
      %v353 = vrot.slane %v219, 1
      %v354 = vsel %vm274, %v351, %v353
      %vm355 = vcmask 1045504
      %v356 = vrot.slane %v172, 2
      %v357 = vrot.slane %v173, 2
      %v358 = vsel %vm355, %v356, %v357
      %v359 = vrot.slane %v174, 2
      %v360 = vsel %vm355, %v357, %v359
      %v361 = vrot.slane %v175, 2
      %v362 = vrot.slane %v176, 2
      %v363 = vsel %vm355, %v361, %v362
      %v364 = vrot.slane %v177, 2
      %v365 = vsel %vm355, %v362, %v364
      %v366 = vrot.slane %v178, 2
      %v367 = vrot.slane %v179, 2
      %v368 = vsel %vm355, %v366, %v367
      %v369 = vrot.slane %v180, 2
      %v370 = vsel %vm355, %v367, %v369
      %v371 = vrot.slane %v181, 2
      %v372 = vrot.slane %v182, 2
      %v373 = vsel %vm355, %v371, %v372
      %v374 = vrot.slane %v183, 2
      %v375 = vsel %vm355, %v372, %v374
      %v376 = vrot.slane %v184, 2
      %v377 = vrot.slane %v185, 2
      %v378 = vsel %vm355, %v376, %v377
      %v379 = vrot.slane %v186, 2
      %v380 = vsel %vm355, %v377, %v379
      %v381 = vrot.slane %v187, 2
      %v382 = vrot.slane %v188, 2
      %v383 = vsel %vm355, %v381, %v382
      %v384 = vrot.slane %v189, 2
      %v385 = vsel %vm355, %v382, %v384
      %v386 = vrot.slane %v190, 2
      %v387 = vrot.slane %v191, 2
      %v388 = vsel %vm355, %v386, %v387
      %v389 = vrot.slane %v192, 2
      %v390 = vsel %vm355, %v387, %v389
      %v391 = vrot.slane %v193, 2
      %v392 = vrot.slane %v194, 2
      %v393 = vsel %vm355, %v391, %v392
      %v394 = vrot.slane %v195, 2
      %v395 = vsel %vm355, %v392, %v394
      %v396 = vrot.slane %v196, 2
      %v397 = vrot.slane %v197, 2
      %v398 = vsel %vm355, %v396, %v397
      %v399 = vrot.slane %v198, 2
      %v400 = vsel %vm355, %v397, %v399
      %v401 = vrot.slane %v199, 2
      %v402 = vrot.slane %v200, 2
      %v403 = vsel %vm355, %v401, %v402
      %v404 = vrot.slane %v201, 2
      %v405 = vsel %vm355, %v402, %v404
      %v406 = vrot.slane %v202, 2
      %v407 = vrot.slane %v203, 2
      %v408 = vsel %vm355, %v406, %v407
      %v409 = vrot.slane %v204, 2
      %v410 = vsel %vm355, %v407, %v409
      %v411 = vrot.slane %v205, 2
      %v412 = vrot.slane %v206, 2
      %v413 = vsel %vm355, %v411, %v412
      %v414 = vrot.slane %v207, 2
      %v415 = vsel %vm355, %v412, %v414
      %v416 = vrot.slane %v208, 2
      %v417 = vrot.slane %v209, 2
      %v418 = vsel %vm355, %v416, %v417
      %v419 = vrot.slane %v210, 2
      %v420 = vsel %vm355, %v417, %v419
      %v421 = vrot.slane %v211, 2
      %v422 = vrot.slane %v212, 2
      %v423 = vsel %vm355, %v421, %v422
      %v424 = vrot.slane %v213, 2
      %v425 = vsel %vm355, %v422, %v424
      %v426 = vrot.slane %v214, 2
      %v427 = vrot.slane %v215, 2
      %v428 = vsel %vm355, %v426, %v427
      %v429 = vrot.slane %v216, 2
      %v430 = vsel %vm355, %v427, %v429
      %v431 = vrot.slane %v217, 2
      %v432 = vrot.slane %v218, 2
      %v433 = vsel %vm355, %v431, %v432
      %v434 = vrot.slane %v219, 2
      %v435 = vsel %vm355, %v432, %v434
      %v439 = vrot.slane %v220, 1
      %v440 = vrot.slane %v221, 1
      %v441 = vsel %vm274, %v439, %v440
      %v442 = vrot.slane %v222, 1
      %v443 = vsel %vm274, %v440, %v442
      %v444 = vrot.slane %v220, 2
      %v445 = vrot.slane %v221, 2
      %v446 = vsel %vm355, %v444, %v445
      %v447 = vrot.slane %v222, 2
      %v448 = vsel %vm355, %v445, %v447
      %v452 = vrot.slane %v223, 1
      %v453 = vrot.slane %v224, 1
      %v454 = vsel %vm274, %v452, %v453
      %v455 = vrot.slane %v225, 1
      %v456 = vsel %vm274, %v453, %v455
      %v457 = vrot.slane %v223, 2
      %v458 = vrot.slane %v224, 2
      %v459 = vsel %vm355, %v457, %v458
      %v460 = vrot.slane %v225, 2
      %v461 = vsel %vm355, %v458, %v460
      %494 = vrot.lane.b32.xlu0 %v277, 16
      %v495 = vpop.permute.xlu0 %494
      %496 = vrot.lane.b32.xlu0 %v279, 16
      %v497 = vpop.permute.xlu0 %496
      %498 = vrot.lane.b32.xlu0 %v282, 16
      %v499 = vpop.permute.xlu0 %498
      %500 = vrot.lane.b32.xlu0 %v284, 16
      %v501 = vpop.permute.xlu0 %500
      %502 = vrot.lane.b32.xlu0 %v287, 16
      %v503 = vpop.permute.xlu0 %502
      %504 = vrot.lane.b32.xlu0 %v289, 16
      %v505 = vpop.permute.xlu0 %504
      %506 = vrot.lane.b32.xlu0 %v292, 16
      %v507 = vpop.permute.xlu0 %506
      %508 = vrot.lane.b32.xlu0 %v294, 16
      %v509 = vpop.permute.xlu0 %508
      %510 = vrot.lane.b32.xlu0 %v297, 16
      %v511 = vpop.permute.xlu0 %510
      %512 = vrot.lane.b32.xlu0 %v299, 16
      %v513 = vpop.permute.xlu0 %512
      %514 = vrot.lane.b32.xlu0 %v302, 16
      %v515 = vpop.permute.xlu0 %514
      %516 = vrot.lane.b32.xlu0 %v304, 16
      %v517 = vpop.permute.xlu0 %516
      %518 = vrot.lane.b32.xlu0 %v307, 16
      %v519 = vpop.permute.xlu0 %518
      %520 = vrot.lane.b32.xlu0 %v309, 16
      %v521 = vpop.permute.xlu0 %520
      %522 = vrot.lane.b32.xlu0 %v312, 16
      %v523 = vpop.permute.xlu0 %522
      %524 = vrot.lane.b32.xlu0 %v314, 16
      %v525 = vpop.permute.xlu0 %524
      %526 = vrot.lane.b32.xlu0 %v317, 16
      %v527 = vpop.permute.xlu0 %526
      %528 = vrot.lane.b32.xlu0 %v319, 16
      %v529 = vpop.permute.xlu0 %528
      %530 = vrot.lane.b32.xlu0 %v322, 16
      %v531 = vpop.permute.xlu0 %530
      %532 = vrot.lane.b32.xlu0 %v324, 16
      %v533 = vpop.permute.xlu0 %532
      %534 = vrot.lane.b32.xlu0 %v327, 16
      %v535 = vpop.permute.xlu0 %534
      %536 = vrot.lane.b32.xlu0 %v329, 16
      %v537 = vpop.permute.xlu0 %536
      %538 = vrot.lane.b32.xlu0 %v332, 16
      %v539 = vpop.permute.xlu0 %538
      %540 = vrot.lane.b32.xlu0 %v334, 16
      %v541 = vpop.permute.xlu0 %540
      %542 = vrot.lane.b32.xlu0 %v337, 16
      %v543 = vpop.permute.xlu0 %542
      %544 = vrot.lane.b32.xlu0 %v339, 16
      %v545 = vpop.permute.xlu0 %544
      %546 = vrot.lane.b32.xlu0 %v342, 16
      %v547 = vpop.permute.xlu0 %546
      %548 = vrot.lane.b32.xlu0 %v344, 16
      %v549 = vpop.permute.xlu0 %548
      %550 = vrot.lane.b32.xlu0 %v347, 16
      %v551 = vpop.permute.xlu0 %550
      %552 = vrot.lane.b32.xlu0 %v349, 16
      %v553 = vpop.permute.xlu0 %552
      %554 = vrot.lane.b32.xlu0 %v352, 16
      %v555 = vpop.permute.xlu0 %554
      %556 = vrot.lane.b32.xlu0 %v354, 16
      %v557 = vpop.permute.xlu0 %556
      %590 = vrot.lane.b32.xlu0 %v358, 32
      %v591 = vpop.permute.xlu0 %590
      %592 = vrot.lane.b32.xlu0 %v360, 32
      %v593 = vpop.permute.xlu0 %592
      %594 = vrot.lane.b32.xlu0 %v363, 32
      %v595 = vpop.permute.xlu0 %594
      %596 = vrot.lane.b32.xlu0 %v365, 32
      %v597 = vpop.permute.xlu0 %596
      %598 = vrot.lane.b32.xlu0 %v368, 32
      %v599 = vpop.permute.xlu0 %598
      %600 = vrot.lane.b32.xlu0 %v370, 32
      %v601 = vpop.permute.xlu0 %600
      %602 = vrot.lane.b32.xlu0 %v373, 32
      %v603 = vpop.permute.xlu0 %602
      %604 = vrot.lane.b32.xlu0 %v375, 32
      %v605 = vpop.permute.xlu0 %604
      %606 = vrot.lane.b32.xlu0 %v378, 32
      %v607 = vpop.permute.xlu0 %606
      %608 = vrot.lane.b32.xlu0 %v380, 32
      %v609 = vpop.permute.xlu0 %608
      %610 = vrot.lane.b32.xlu0 %v383, 32
      %v611 = vpop.permute.xlu0 %610
      %612 = vrot.lane.b32.xlu0 %v385, 32
      %v613 = vpop.permute.xlu0 %612
      %614 = vrot.lane.b32.xlu0 %v388, 32
      %v615 = vpop.permute.xlu0 %614
      %616 = vrot.lane.b32.xlu0 %v390, 32
      %v617 = vpop.permute.xlu0 %616
      %618 = vrot.lane.b32.xlu0 %v393, 32
      %v619 = vpop.permute.xlu0 %618
      %620 = vrot.lane.b32.xlu0 %v395, 32
      %v621 = vpop.permute.xlu0 %620
      %622 = vrot.lane.b32.xlu0 %v398, 32
      %v623 = vpop.permute.xlu0 %622
      %624 = vrot.lane.b32.xlu0 %v400, 32
      %v625 = vpop.permute.xlu0 %624
      %626 = vrot.lane.b32.xlu0 %v403, 32
      %v627 = vpop.permute.xlu0 %626
      %628 = vrot.lane.b32.xlu0 %v405, 32
      %v629 = vpop.permute.xlu0 %628
      %630 = vrot.lane.b32.xlu0 %v408, 32
      %v631 = vpop.permute.xlu0 %630
      %632 = vrot.lane.b32.xlu0 %v410, 32
      %v633 = vpop.permute.xlu0 %632
      %634 = vrot.lane.b32.xlu0 %v413, 32
      %v635 = vpop.permute.xlu0 %634
      %636 = vrot.lane.b32.xlu0 %v415, 32
      %v637 = vpop.permute.xlu0 %636
      %638 = vrot.lane.b32.xlu0 %v418, 32
      %v639 = vpop.permute.xlu0 %638
      %640 = vrot.lane.b32.xlu0 %v420, 32
      %v641 = vpop.permute.xlu0 %640
      %642 = vrot.lane.b32.xlu0 %v423, 32
      %v643 = vpop.permute.xlu0 %642
      %644 = vrot.lane.b32.xlu0 %v425, 32
      %v645 = vpop.permute.xlu0 %644
      %646 = vrot.lane.b32.xlu0 %v428, 32
      %v647 = vpop.permute.xlu0 %646
      %648 = vrot.lane.b32.xlu0 %v430, 32
      %v649 = vpop.permute.xlu0 %648
      %650 = vrot.lane.b32.xlu0 %v433, 32
      %v651 = vpop.permute.xlu0 %650
      %652 = vrot.lane.b32.xlu0 %v435, 32
      %v653 = vpop.permute.xlu0 %652
      %686 = vrot.lane.b32.xlu0 %v175, 48
      %v687 = vpop.permute.xlu0 %686
      %688 = vrot.lane.b32.xlu0 %v176, 48
      %v689 = vpop.permute.xlu0 %688
      %690 = vrot.lane.b32.xlu0 %v178, 48
      %v691 = vpop.permute.xlu0 %690
      %692 = vrot.lane.b32.xlu0 %v179, 48
      %v693 = vpop.permute.xlu0 %692
      %694 = vrot.lane.b32.xlu0 %v181, 48
      %v695 = vpop.permute.xlu0 %694
      %696 = vrot.lane.b32.xlu0 %v182, 48
      %v697 = vpop.permute.xlu0 %696
      %698 = vrot.lane.b32.xlu0 %v184, 48
      %v699 = vpop.permute.xlu0 %698
      %700 = vrot.lane.b32.xlu0 %v185, 48
      %v701 = vpop.permute.xlu0 %700
      %702 = vrot.lane.b32.xlu0 %v187, 48
      %v703 = vpop.permute.xlu0 %702
      %704 = vrot.lane.b32.xlu0 %v188, 48
      %v705 = vpop.permute.xlu0 %704
      %706 = vrot.lane.b32.xlu0 %v190, 48
      %v707 = vpop.permute.xlu0 %706
      %708 = vrot.lane.b32.xlu0 %v191, 48
      %v709 = vpop.permute.xlu0 %708
      %710 = vrot.lane.b32.xlu0 %v193, 48
      %v711 = vpop.permute.xlu0 %710
      %712 = vrot.lane.b32.xlu0 %v194, 48
      %v713 = vpop.permute.xlu0 %712
      %714 = vrot.lane.b32.xlu0 %v196, 48
      %v715 = vpop.permute.xlu0 %714
      %716 = vrot.lane.b32.xlu0 %v197, 48
      %v717 = vpop.permute.xlu0 %716
      %718 = vrot.lane.b32.xlu0 %v199, 48
      %v719 = vpop.permute.xlu0 %718
      %720 = vrot.lane.b32.xlu0 %v200, 48
      %v721 = vpop.permute.xlu0 %720
      %722 = vrot.lane.b32.xlu0 %v202, 48
      %v723 = vpop.permute.xlu0 %722
      %724 = vrot.lane.b32.xlu0 %v203, 48
      %v725 = vpop.permute.xlu0 %724
      %726 = vrot.lane.b32.xlu0 %v205, 48
      %v727 = vpop.permute.xlu0 %726
      %728 = vrot.lane.b32.xlu0 %v206, 48
      %v729 = vpop.permute.xlu0 %728
      %730 = vrot.lane.b32.xlu0 %v208, 48
      %v731 = vpop.permute.xlu0 %730
      %732 = vrot.lane.b32.xlu0 %v209, 48
      %v733 = vpop.permute.xlu0 %732
      %734 = vrot.lane.b32.xlu0 %v211, 48
      %v735 = vpop.permute.xlu0 %734
      %736 = vrot.lane.b32.xlu0 %v212, 48
      %v737 = vpop.permute.xlu0 %736
      %738 = vrot.lane.b32.xlu0 %v214, 48
      %v739 = vpop.permute.xlu0 %738
      %740 = vrot.lane.b32.xlu0 %v215, 48
      %v741 = vpop.permute.xlu0 %740
      %742 = vrot.lane.b32.xlu0 %v217, 48
      %v743 = vpop.permute.xlu0 %742
      %744 = vrot.lane.b32.xlu0 %v218, 48
      %v745 = vpop.permute.xlu0 %744
      %746 = vrot.lane.b32.xlu0 %v220, 48
      %v747 = vpop.permute.xlu0 %746
      %748 = vrot.lane.b32.xlu0 %v221, 48
      %v749 = vpop.permute.xlu0 %748
      %782 = vrot.lane.b32.xlu0 %v282, 64
      %v783 = vpop.permute.xlu0 %782
      %784 = vrot.lane.b32.xlu0 %v284, 64
      %v785 = vpop.permute.xlu0 %784
      %786 = vrot.lane.b32.xlu0 %v287, 64
      %v787 = vpop.permute.xlu0 %786
      %788 = vrot.lane.b32.xlu0 %v289, 64
      %v789 = vpop.permute.xlu0 %788
      %790 = vrot.lane.b32.xlu0 %v292, 64
      %v791 = vpop.permute.xlu0 %790
      %792 = vrot.lane.b32.xlu0 %v294, 64
      %v793 = vpop.permute.xlu0 %792
      %794 = vrot.lane.b32.xlu0 %v297, 64
      %v795 = vpop.permute.xlu0 %794
      %796 = vrot.lane.b32.xlu0 %v299, 64
      %v797 = vpop.permute.xlu0 %796
      %798 = vrot.lane.b32.xlu0 %v302, 64
      %v799 = vpop.permute.xlu0 %798
      %800 = vrot.lane.b32.xlu0 %v304, 64
      %v801 = vpop.permute.xlu0 %800
      %802 = vrot.lane.b32.xlu0 %v307, 64
      %v803 = vpop.permute.xlu0 %802
      %804 = vrot.lane.b32.xlu0 %v309, 64
      %v805 = vpop.permute.xlu0 %804
      %806 = vrot.lane.b32.xlu0 %v312, 64
      %v807 = vpop.permute.xlu0 %806
      %808 = vrot.lane.b32.xlu0 %v314, 64
      %v809 = vpop.permute.xlu0 %808
      %810 = vrot.lane.b32.xlu0 %v317, 64
      %v811 = vpop.permute.xlu0 %810
      %812 = vrot.lane.b32.xlu0 %v319, 64
      %v813 = vpop.permute.xlu0 %812
      %814 = vrot.lane.b32.xlu0 %v322, 64
      %v815 = vpop.permute.xlu0 %814
      %816 = vrot.lane.b32.xlu0 %v324, 64
      %v817 = vpop.permute.xlu0 %816
      %818 = vrot.lane.b32.xlu0 %v327, 64
      %v819 = vpop.permute.xlu0 %818
      %820 = vrot.lane.b32.xlu0 %v329, 64
      %v821 = vpop.permute.xlu0 %820
      %822 = vrot.lane.b32.xlu0 %v332, 64
      %v823 = vpop.permute.xlu0 %822
      %824 = vrot.lane.b32.xlu0 %v334, 64
      %v825 = vpop.permute.xlu0 %824
      %826 = vrot.lane.b32.xlu0 %v337, 64
      %v827 = vpop.permute.xlu0 %826
      %828 = vrot.lane.b32.xlu0 %v339, 64
      %v829 = vpop.permute.xlu0 %828
      %830 = vrot.lane.b32.xlu0 %v342, 64
      %v831 = vpop.permute.xlu0 %830
      %832 = vrot.lane.b32.xlu0 %v344, 64
      %v833 = vpop.permute.xlu0 %832
      %834 = vrot.lane.b32.xlu0 %v347, 64
      %v835 = vpop.permute.xlu0 %834
      %836 = vrot.lane.b32.xlu0 %v349, 64
      %v837 = vpop.permute.xlu0 %836
      %838 = vrot.lane.b32.xlu0 %v352, 64
      %v839 = vpop.permute.xlu0 %838
      %840 = vrot.lane.b32.xlu0 %v354, 64
      %v841 = vpop.permute.xlu0 %840
      %842 = vrot.lane.b32.xlu0 %v441, 64
      %v843 = vpop.permute.xlu0 %842
      %844 = vrot.lane.b32.xlu0 %v443, 64
      %v845 = vpop.permute.xlu0 %844
      %878 = vrot.lane.b32.xlu0 %v363, 80
      %v879 = vpop.permute.xlu0 %878
      %880 = vrot.lane.b32.xlu0 %v365, 80
      %v881 = vpop.permute.xlu0 %880
      %882 = vrot.lane.b32.xlu0 %v368, 80
      %v883 = vpop.permute.xlu0 %882
      %884 = vrot.lane.b32.xlu0 %v370, 80
      %v885 = vpop.permute.xlu0 %884
      %886 = vrot.lane.b32.xlu0 %v373, 80
      %v887 = vpop.permute.xlu0 %886
      %888 = vrot.lane.b32.xlu0 %v375, 80
      %v889 = vpop.permute.xlu0 %888
      %890 = vrot.lane.b32.xlu0 %v378, 80
      %v891 = vpop.permute.xlu0 %890
      %892 = vrot.lane.b32.xlu0 %v380, 80
      %v893 = vpop.permute.xlu0 %892
      %894 = vrot.lane.b32.xlu0 %v383, 80
      %v895 = vpop.permute.xlu0 %894
      %896 = vrot.lane.b32.xlu0 %v385, 80
      %v897 = vpop.permute.xlu0 %896
      %898 = vrot.lane.b32.xlu0 %v388, 80
      %v899 = vpop.permute.xlu0 %898
      %900 = vrot.lane.b32.xlu0 %v390, 80
      %v901 = vpop.permute.xlu0 %900
      %902 = vrot.lane.b32.xlu0 %v393, 80
      %v903 = vpop.permute.xlu0 %902
      %904 = vrot.lane.b32.xlu0 %v395, 80
      %v905 = vpop.permute.xlu0 %904
      %906 = vrot.lane.b32.xlu0 %v398, 80
      %v907 = vpop.permute.xlu0 %906
      %908 = vrot.lane.b32.xlu0 %v400, 80
      %v909 = vpop.permute.xlu0 %908
      %910 = vrot.lane.b32.xlu0 %v403, 80
      %v911 = vpop.permute.xlu0 %910
      %912 = vrot.lane.b32.xlu0 %v405, 80
      %v913 = vpop.permute.xlu0 %912
      %914 = vrot.lane.b32.xlu0 %v408, 80
      %v915 = vpop.permute.xlu0 %914
      %916 = vrot.lane.b32.xlu0 %v410, 80
      %v917 = vpop.permute.xlu0 %916
      %918 = vrot.lane.b32.xlu0 %v413, 80
      %v919 = vpop.permute.xlu0 %918
      %920 = vrot.lane.b32.xlu0 %v415, 80
      %v921 = vpop.permute.xlu0 %920
      %922 = vrot.lane.b32.xlu0 %v418, 80
      %v923 = vpop.permute.xlu0 %922
      %924 = vrot.lane.b32.xlu0 %v420, 80
      %v925 = vpop.permute.xlu0 %924
      %926 = vrot.lane.b32.xlu0 %v423, 80
      %v927 = vpop.permute.xlu0 %926
      %928 = vrot.lane.b32.xlu0 %v425, 80
      %v929 = vpop.permute.xlu0 %928
      %930 = vrot.lane.b32.xlu0 %v428, 80
      %v931 = vpop.permute.xlu0 %930
      %932 = vrot.lane.b32.xlu0 %v430, 80
      %v933 = vpop.permute.xlu0 %932
      %934 = vrot.lane.b32.xlu0 %v433, 80
      %v935 = vpop.permute.xlu0 %934
      %936 = vrot.lane.b32.xlu0 %v435, 80
      %v937 = vpop.permute.xlu0 %936
      %938 = vrot.lane.b32.xlu0 %v446, 80
      %v939 = vpop.permute.xlu0 %938
      %940 = vrot.lane.b32.xlu0 %v448, 80
      %v941 = vpop.permute.xlu0 %940
      %974 = vrot.lane.b32.xlu0 %v178, 96
      %v975 = vpop.permute.xlu0 %974
      %976 = vrot.lane.b32.xlu0 %v179, 96
      %v977 = vpop.permute.xlu0 %976
      %978 = vrot.lane.b32.xlu0 %v181, 96
      %v979 = vpop.permute.xlu0 %978
      %980 = vrot.lane.b32.xlu0 %v182, 96
      %v981 = vpop.permute.xlu0 %980
      %982 = vrot.lane.b32.xlu0 %v184, 96
      %v983 = vpop.permute.xlu0 %982
      %984 = vrot.lane.b32.xlu0 %v185, 96
      %v985 = vpop.permute.xlu0 %984
      %986 = vrot.lane.b32.xlu0 %v187, 96
      %v987 = vpop.permute.xlu0 %986
      %988 = vrot.lane.b32.xlu0 %v188, 96
      %v989 = vpop.permute.xlu0 %988
      %990 = vrot.lane.b32.xlu0 %v190, 96
      %v991 = vpop.permute.xlu0 %990
      %992 = vrot.lane.b32.xlu0 %v191, 96
      %v993 = vpop.permute.xlu0 %992
      %994 = vrot.lane.b32.xlu0 %v193, 96
      %v995 = vpop.permute.xlu0 %994
      %996 = vrot.lane.b32.xlu0 %v194, 96
      %v997 = vpop.permute.xlu0 %996
      %998 = vrot.lane.b32.xlu0 %v196, 96
      %v999 = vpop.permute.xlu0 %998
      %1000 = vrot.lane.b32.xlu0 %v197, 96
      %v1001 = vpop.permute.xlu0 %1000
      %1002 = vrot.lane.b32.xlu0 %v199, 96
      %v1003 = vpop.permute.xlu0 %1002
      %1004 = vrot.lane.b32.xlu0 %v200, 96
      %v1005 = vpop.permute.xlu0 %1004
      %1006 = vrot.lane.b32.xlu0 %v202, 96
      %v1007 = vpop.permute.xlu0 %1006
      %1008 = vrot.lane.b32.xlu0 %v203, 96
      %v1009 = vpop.permute.xlu0 %1008
      %1010 = vrot.lane.b32.xlu0 %v205, 96
      %v1011 = vpop.permute.xlu0 %1010
      %1012 = vrot.lane.b32.xlu0 %v206, 96
      %v1013 = vpop.permute.xlu0 %1012
      %1014 = vrot.lane.b32.xlu0 %v208, 96
      %v1015 = vpop.permute.xlu0 %1014
      %1016 = vrot.lane.b32.xlu0 %v209, 96
      %v1017 = vpop.permute.xlu0 %1016
      %1018 = vrot.lane.b32.xlu0 %v211, 96
      %v1019 = vpop.permute.xlu0 %1018
      %1020 = vrot.lane.b32.xlu0 %v212, 96
      %v1021 = vpop.permute.xlu0 %1020
      %1022 = vrot.lane.b32.xlu0 %v214, 96
      %v1023 = vpop.permute.xlu0 %1022
      %1024 = vrot.lane.b32.xlu0 %v215, 96
      %v1025 = vpop.permute.xlu0 %1024
      %1026 = vrot.lane.b32.xlu0 %v217, 96
      %v1027 = vpop.permute.xlu0 %1026
      %1028 = vrot.lane.b32.xlu0 %v218, 96
      %v1029 = vpop.permute.xlu0 %1028
      %1030 = vrot.lane.b32.xlu0 %v220, 96
      %v1031 = vpop.permute.xlu0 %1030
      %1032 = vrot.lane.b32.xlu0 %v221, 96
      %v1033 = vpop.permute.xlu0 %1032
      %1034 = vrot.lane.b32.xlu0 %v223, 96
      %v1035 = vpop.permute.xlu0 %1034
      %1036 = vrot.lane.b32.xlu0 %v224, 96
      %v1037 = vpop.permute.xlu0 %1036
      %1070 = vrot.lane.b32.xlu0 %v287, 112
      %v1071 = vpop.permute.xlu0 %1070
      %1072 = vrot.lane.b32.xlu0 %v289, 112
      %v1073 = vpop.permute.xlu0 %1072
      %1074 = vrot.lane.b32.xlu0 %v292, 112
      %v1075 = vpop.permute.xlu0 %1074
      %1076 = vrot.lane.b32.xlu0 %v294, 112
      %v1077 = vpop.permute.xlu0 %1076
      %1078 = vrot.lane.b32.xlu0 %v297, 112
      %v1079 = vpop.permute.xlu0 %1078
      %1080 = vrot.lane.b32.xlu0 %v299, 112
      %v1081 = vpop.permute.xlu0 %1080
      %1082 = vrot.lane.b32.xlu0 %v302, 112
      %v1083 = vpop.permute.xlu0 %1082
      %1084 = vrot.lane.b32.xlu0 %v304, 112
      %v1085 = vpop.permute.xlu0 %1084
      %1086 = vrot.lane.b32.xlu0 %v307, 112
      %v1087 = vpop.permute.xlu0 %1086
      %1088 = vrot.lane.b32.xlu0 %v309, 112
      %v1089 = vpop.permute.xlu0 %1088
      %1090 = vrot.lane.b32.xlu0 %v312, 112
      %v1091 = vpop.permute.xlu0 %1090
      %1092 = vrot.lane.b32.xlu0 %v314, 112
      %v1093 = vpop.permute.xlu0 %1092
      %1094 = vrot.lane.b32.xlu0 %v317, 112
      %v1095 = vpop.permute.xlu0 %1094
      %1096 = vrot.lane.b32.xlu0 %v319, 112
      %v1097 = vpop.permute.xlu0 %1096
      %1098 = vrot.lane.b32.xlu0 %v322, 112
      %v1099 = vpop.permute.xlu0 %1098
      %1100 = vrot.lane.b32.xlu0 %v324, 112
      %v1101 = vpop.permute.xlu0 %1100
      %1102 = vrot.lane.b32.xlu0 %v327, 112
      %v1103 = vpop.permute.xlu0 %1102
      %1104 = vrot.lane.b32.xlu0 %v329, 112
      %v1105 = vpop.permute.xlu0 %1104
      %1106 = vrot.lane.b32.xlu0 %v332, 112
      %v1107 = vpop.permute.xlu0 %1106
      %1108 = vrot.lane.b32.xlu0 %v334, 112
      %v1109 = vpop.permute.xlu0 %1108
      %1110 = vrot.lane.b32.xlu0 %v337, 112
      %v1111 = vpop.permute.xlu0 %1110
      %1112 = vrot.lane.b32.xlu0 %v339, 112
      %v1113 = vpop.permute.xlu0 %1112
      %1114 = vrot.lane.b32.xlu0 %v342, 112
      %v1115 = vpop.permute.xlu0 %1114
      %1116 = vrot.lane.b32.xlu0 %v344, 112
      %v1117 = vpop.permute.xlu0 %1116
      %1118 = vrot.lane.b32.xlu0 %v347, 112
      %v1119 = vpop.permute.xlu0 %1118
      %1120 = vrot.lane.b32.xlu0 %v349, 112
      %v1121 = vpop.permute.xlu0 %1120
      %1122 = vrot.lane.b32.xlu0 %v352, 112
      %v1123 = vpop.permute.xlu0 %1122
      %1124 = vrot.lane.b32.xlu0 %v354, 112
      %v1125 = vpop.permute.xlu0 %1124
      %1126 = vrot.lane.b32.xlu0 %v441, 112
      %v1127 = vpop.permute.xlu0 %1126
      %1128 = vrot.lane.b32.xlu0 %v443, 112
      %v1129 = vpop.permute.xlu0 %1128
      %1130 = vrot.lane.b32.xlu0 %v454, 112
      %v1131 = vpop.permute.xlu0 %1130
      %1132 = vrot.lane.b32.xlu0 %v456, 112
      %v1133 = vpop.permute.xlu0 %1132
      %vm1166 = vcmask 130048
      %v1167 = vsel %vm1166, %v172, %v495
      %v1168 = vsel %vm1166, %v173, %v497
      %v1169 = vsel %vm1166, %v175, %v499
      %v1170 = vsel %vm1166, %v176, %v501
      %v1171 = vsel %vm1166, %v178, %v503
      %v1172 = vsel %vm1166, %v179, %v505
      %v1173 = vsel %vm1166, %v181, %v507
      %v1174 = vsel %vm1166, %v182, %v509
      %v1175 = vsel %vm1166, %v184, %v511
      %v1176 = vsel %vm1166, %v185, %v513
      %v1177 = vsel %vm1166, %v187, %v515
      %v1178 = vsel %vm1166, %v188, %v517
      %v1179 = vsel %vm1166, %v190, %v519
      %v1180 = vsel %vm1166, %v191, %v521
      %v1181 = vsel %vm1166, %v193, %v523
      %v1182 = vsel %vm1166, %v194, %v525
      %v1183 = vsel %vm1166, %v196, %v527
      %v1184 = vsel %vm1166, %v197, %v529
      %v1185 = vsel %vm1166, %v199, %v531
      %v1186 = vsel %vm1166, %v200, %v533
      %v1187 = vsel %vm1166, %v202, %v535
      %v1188 = vsel %vm1166, %v203, %v537
      %v1189 = vsel %vm1166, %v205, %v539
      %v1190 = vsel %vm1166, %v206, %v541
      %v1191 = vsel %vm1166, %v208, %v543
      %v1192 = vsel %vm1166, %v209, %v545
      %v1193 = vsel %vm1166, %v211, %v547
      %v1194 = vsel %vm1166, %v212, %v549
      %v1195 = vsel %vm1166, %v214, %v551
      %v1196 = vsel %vm1166, %v215, %v553
      %v1197 = vsel %vm1166, %v217, %v555
      %v1198 = vsel %vm1166, %v218, %v557
      %vm1199 = vcmask 261120
      %v1200 = vsel %vm1199, %v1167, %v591
      %v1201 = vsel %vm1199, %v1168, %v593
      %v1202 = vsel %vm1199, %v1169, %v595
      %v1203 = vsel %vm1199, %v1170, %v597
      %v1204 = vsel %vm1199, %v1171, %v599
      %v1205 = vsel %vm1199, %v1172, %v601
      %v1206 = vsel %vm1199, %v1173, %v603
      %v1207 = vsel %vm1199, %v1174, %v605
      %v1208 = vsel %vm1199, %v1175, %v607
      %v1209 = vsel %vm1199, %v1176, %v609
      %v1210 = vsel %vm1199, %v1177, %v611
      %v1211 = vsel %vm1199, %v1178, %v613
      %v1212 = vsel %vm1199, %v1179, %v615
      %v1213 = vsel %vm1199, %v1180, %v617
      %v1214 = vsel %vm1199, %v1181, %v619
      %v1215 = vsel %vm1199, %v1182, %v621
      %v1216 = vsel %vm1199, %v1183, %v623
      %v1217 = vsel %vm1199, %v1184, %v625
      %v1218 = vsel %vm1199, %v1185, %v627
      %v1219 = vsel %vm1199, %v1186, %v629
      %v1220 = vsel %vm1199, %v1187, %v631
      %v1221 = vsel %vm1199, %v1188, %v633
      %v1222 = vsel %vm1199, %v1189, %v635
      %v1223 = vsel %vm1199, %v1190, %v637
      %v1224 = vsel %vm1199, %v1191, %v639
      %v1225 = vsel %vm1199, %v1192, %v641
      %v1226 = vsel %vm1199, %v1193, %v643
      %v1227 = vsel %vm1199, %v1194, %v645
      %v1228 = vsel %vm1199, %v1195, %v647
      %v1229 = vsel %vm1199, %v1196, %v649
      %v1230 = vsel %vm1199, %v1197, %v651
      %v1231 = vsel %vm1199, %v1198, %v653
      %vm1232 = vcmask 392192
      %v1233 = vsel %vm1232, %v1200, %v687
      %v1234 = vsel %vm1232, %v1201, %v689
      %v1235 = vsel %vm1232, %v1202, %v691
      %v1236 = vsel %vm1232, %v1203, %v693
      %v1237 = vsel %vm1232, %v1204, %v695
      %v1238 = vsel %vm1232, %v1205, %v697
      %v1239 = vsel %vm1232, %v1206, %v699
      %v1240 = vsel %vm1232, %v1207, %v701
      %v1241 = vsel %vm1232, %v1208, %v703
      %v1242 = vsel %vm1232, %v1209, %v705
      %v1243 = vsel %vm1232, %v1210, %v707
      %v1244 = vsel %vm1232, %v1211, %v709
      %v1245 = vsel %vm1232, %v1212, %v711
      %v1246 = vsel %vm1232, %v1213, %v713
      %v1247 = vsel %vm1232, %v1214, %v715
      %v1248 = vsel %vm1232, %v1215, %v717
      %v1249 = vsel %vm1232, %v1216, %v719
      %v1250 = vsel %vm1232, %v1217, %v721
      %v1251 = vsel %vm1232, %v1218, %v723
      %v1252 = vsel %vm1232, %v1219, %v725
      %v1253 = vsel %vm1232, %v1220, %v727
      %v1254 = vsel %vm1232, %v1221, %v729
      %v1255 = vsel %vm1232, %v1222, %v731
      %v1256 = vsel %vm1232, %v1223, %v733
      %v1257 = vsel %vm1232, %v1224, %v735
      %v1258 = vsel %vm1232, %v1225, %v737
      %v1259 = vsel %vm1232, %v1226, %v739
      %v1260 = vsel %vm1232, %v1227, %v741
      %v1261 = vsel %vm1232, %v1228, %v743
      %v1262 = vsel %vm1232, %v1229, %v745
      %v1263 = vsel %vm1232, %v1230, %v747
      %v1264 = vsel %vm1232, %v1231, %v749
      %vm1265 = vcmask 523264
      %v1266 = vsel %vm1265, %v1233, %v783
      %v1267 = vsel %vm1265, %v1234, %v785
      %v1268 = vsel %vm1265, %v1235, %v787
      %v1269 = vsel %vm1265, %v1236, %v789
      %v1270 = vsel %vm1265, %v1237, %v791
      %v1271 = vsel %vm1265, %v1238, %v793
      %v1272 = vsel %vm1265, %v1239, %v795
      %v1273 = vsel %vm1265, %v1240, %v797
      %v1274 = vsel %vm1265, %v1241, %v799
      %v1275 = vsel %vm1265, %v1242, %v801
      %v1276 = vsel %vm1265, %v1243, %v803
      %v1277 = vsel %vm1265, %v1244, %v805
      %v1278 = vsel %vm1265, %v1245, %v807
      %v1279 = vsel %vm1265, %v1246, %v809
      %v1280 = vsel %vm1265, %v1247, %v811
      %v1281 = vsel %vm1265, %v1248, %v813
      %v1282 = vsel %vm1265, %v1249, %v815
      %v1283 = vsel %vm1265, %v1250, %v817
      %v1284 = vsel %vm1265, %v1251, %v819
      %v1285 = vsel %vm1265, %v1252, %v821
      %v1286 = vsel %vm1265, %v1253, %v823
      %v1287 = vsel %vm1265, %v1254, %v825
      %v1288 = vsel %vm1265, %v1255, %v827
      %v1289 = vsel %vm1265, %v1256, %v829
      %v1290 = vsel %vm1265, %v1257, %v831
      %v1291 = vsel %vm1265, %v1258, %v833
      %v1292 = vsel %vm1265, %v1259, %v835
      %v1293 = vsel %vm1265, %v1260, %v837
      %v1294 = vsel %vm1265, %v1261, %v839
      %v1295 = vsel %vm1265, %v1262, %v841
      %v1296 = vsel %vm1265, %v1263, %v843
      %v1297 = vsel %vm1265, %v1264, %v845
      %vm1298 = vcmask 654336
      %v1299 = vsel %vm1298, %v1266, %v879
      %v1300 = vsel %vm1298, %v1267, %v881
      %v1301 = vsel %vm1298, %v1268, %v883
      %v1302 = vsel %vm1298, %v1269, %v885
      %v1303 = vsel %vm1298, %v1270, %v887
      %v1304 = vsel %vm1298, %v1271, %v889
      %v1305 = vsel %vm1298, %v1272, %v891
      %v1306 = vsel %vm1298, %v1273, %v893
      %v1307 = vsel %vm1298, %v1274, %v895
      %v1308 = vsel %vm1298, %v1275, %v897
      %v1309 = vsel %vm1298, %v1276, %v899
      %v1310 = vsel %vm1298, %v1277, %v901
      %v1311 = vsel %vm1298, %v1278, %v903
      %v1312 = vsel %vm1298, %v1279, %v905
      %v1313 = vsel %vm1298, %v1280, %v907
      %v1314 = vsel %vm1298, %v1281, %v909
      %v1315 = vsel %vm1298, %v1282, %v911
      %v1316 = vsel %vm1298, %v1283, %v913
      %v1317 = vsel %vm1298, %v1284, %v915
      %v1318 = vsel %vm1298, %v1285, %v917
      %v1319 = vsel %vm1298, %v1286, %v919
      %v1320 = vsel %vm1298, %v1287, %v921
      %v1321 = vsel %vm1298, %v1288, %v923
      %v1322 = vsel %vm1298, %v1289, %v925
      %v1323 = vsel %vm1298, %v1290, %v927
      %v1324 = vsel %vm1298, %v1291, %v929
      %v1325 = vsel %vm1298, %v1292, %v931
      %v1326 = vsel %vm1298, %v1293, %v933
      %v1327 = vsel %vm1298, %v1294, %v935
      %v1328 = vsel %vm1298, %v1295, %v937
      %v1329 = vsel %vm1298, %v1296, %v939
      %v1330 = vsel %vm1298, %v1297, %v941
      %vm1331 = vcmask 785408
      %v1332 = vsel %vm1331, %v1299, %v975
      %v1333 = vsel %vm1331, %v1300, %v977
      %v1334 = vsel %vm1331, %v1301, %v979
      %v1335 = vsel %vm1331, %v1302, %v981
      %v1336 = vsel %vm1331, %v1303, %v983
      %v1337 = vsel %vm1331, %v1304, %v985
      %v1338 = vsel %vm1331, %v1305, %v987
      %v1339 = vsel %vm1331, %v1306, %v989
      %v1340 = vsel %vm1331, %v1307, %v991
      %v1341 = vsel %vm1331, %v1308, %v993
      %v1342 = vsel %vm1331, %v1309, %v995
      %v1343 = vsel %vm1331, %v1310, %v997
      %v1344 = vsel %vm1331, %v1311, %v999
      %v1345 = vsel %vm1331, %v1312, %v1001
      %v1346 = vsel %vm1331, %v1313, %v1003
      %v1347 = vsel %vm1331, %v1314, %v1005
      %v1348 = vsel %vm1331, %v1315, %v1007
      %v1349 = vsel %vm1331, %v1316, %v1009
      %v1350 = vsel %vm1331, %v1317, %v1011
      %v1351 = vsel %vm1331, %v1318, %v1013
      %v1352 = vsel %vm1331, %v1319, %v1015
      %v1353 = vsel %vm1331, %v1320, %v1017
      %v1354 = vsel %vm1331, %v1321, %v1019
      %v1355 = vsel %vm1331, %v1322, %v1021
      %v1356 = vsel %vm1331, %v1323, %v1023
      %v1357 = vsel %vm1331, %v1324, %v1025
      %v1358 = vsel %vm1331, %v1325, %v1027
      %v1359 = vsel %vm1331, %v1326, %v1029
      %v1360 = vsel %vm1331, %v1327, %v1031
      %v1361 = vsel %vm1331, %v1328, %v1033
      %v1362 = vsel %vm1331, %v1329, %v1035
      %v1363 = vsel %vm1331, %v1330, %v1037
      %vm1364 = vcmask 916480
      %v1365 = vsel %vm1364, %v1332, %v1071
      %v1366 = vsel %vm1364, %v1333, %v1073
      %v1367 = vsel %vm1364, %v1334, %v1075
      %v1368 = vsel %vm1364, %v1335, %v1077
      %v1369 = vsel %vm1364, %v1336, %v1079
      %v1370 = vsel %vm1364, %v1337, %v1081
      %v1371 = vsel %vm1364, %v1338, %v1083
      %v1372 = vsel %vm1364, %v1339, %v1085
      %v1373 = vsel %vm1364, %v1340, %v1087
      %v1374 = vsel %vm1364, %v1341, %v1089
      %v1375 = vsel %vm1364, %v1342, %v1091
      %v1376 = vsel %vm1364, %v1343, %v1093
      %v1377 = vsel %vm1364, %v1344, %v1095
      %v1378 = vsel %vm1364, %v1345, %v1097
      %v1379 = vsel %vm1364, %v1346, %v1099
      %v1380 = vsel %vm1364, %v1347, %v1101
      %v1381 = vsel %vm1364, %v1348, %v1103
      %v1382 = vsel %vm1364, %v1349, %v1105
      %v1383 = vsel %vm1364, %v1350, %v1107
      %v1384 = vsel %vm1364, %v1351, %v1109
      %v1385 = vsel %vm1364, %v1352, %v1111
      %v1386 = vsel %vm1364, %v1353, %v1113
      %v1387 = vsel %vm1364, %v1354, %v1115
      %v1388 = vsel %vm1364, %v1355, %v1117
      %v1389 = vsel %vm1364, %v1356, %v1119
      %v1390 = vsel %vm1364, %v1357, %v1121
      %v1391 = vsel %vm1364, %v1358, %v1123
      %v1392 = vsel %vm1364, %v1359, %v1125
      %v1393 = vsel %vm1364, %v1360, %v1127
      %v1394 = vsel %vm1364, %v1361, %v1129
      %v1395 = vsel %vm1364, %v1362, %v1131
      %v1396 = vsel %vm1364, %v1363, %v1133
      %v1397 = vpack.c.bf16 %v1366, %v1365
      %v1398 = vpack.c.bf16 %v370, %v368
      %v1399 = vpack.c.bf16 %v1368, %v1367
      %v1400 = vpack.c.bf16 %v375, %v373
      %v1401 = vpack.c.bf16 %v1370, %v1369
      %v1402 = vpack.c.bf16 %v380, %v378
      %v1403 = vpack.c.bf16 %v1372, %v1371
      %v1404 = vpack.c.bf16 %v385, %v383
      %v1405 = vpack.c.bf16 %v1374, %v1373
      %v1406 = vpack.c.bf16 %v390, %v388
      %v1407 = vpack.c.bf16 %v1376, %v1375
      %v1408 = vpack.c.bf16 %v395, %v393
      %v1409 = vpack.c.bf16 %v1378, %v1377
      %v1410 = vpack.c.bf16 %v400, %v398
      %v1411 = vpack.c.bf16 %v1380, %v1379
      %v1412 = vpack.c.bf16 %v405, %v403
      %v1413 = vpack.c.bf16 %v1382, %v1381
      %v1414 = vpack.c.bf16 %v410, %v408
      %v1415 = vpack.c.bf16 %v1384, %v1383
      %v1416 = vpack.c.bf16 %v415, %v413
      %v1417 = vpack.c.bf16 %v1386, %v1385
      %v1418 = vpack.c.bf16 %v420, %v418
      %v1419 = vpack.c.bf16 %v1388, %v1387
      %v1420 = vpack.c.bf16 %v425, %v423
      %v1421 = vpack.c.bf16 %v1390, %v1389
      %v1422 = vpack.c.bf16 %v430, %v428
      %v1423 = vpack.c.bf16 %v1392, %v1391
      %v1424 = vpack.c.bf16 %v435, %v433
      %v1425 = vpack.c.bf16 %v1394, %v1393
      %v1426 = vpack.c.bf16 %v448, %v446
      %v1427 = vpack.c.bf16 %v1396, %v1395
      %v1428 = vpack.c.bf16 %v461, %v459
      %v1429 = vld [vmem:[%s1] sm:$0xf]
      %v1430 = vld [vmem:[%s1 + $0x4] sm:$0xf]
      %v1431 = vld [vmem:[%s1 + $0x8] sm:$0xf]
      %v1432 = vld [vmem:[%s1 + $0xc] sm:$0xf]
      %v1433 = vld [vmem:[%s1 + $0x10] sm:$0xf]
      %v1434 = vld [vmem:[%s1 + $0x14] sm:$0xf]
      %v1435 = vld [vmem:[%s1 + $0x18] sm:$0xf]
      %v1436 = vld [vmem:[%s1 + $0x1c] sm:$0xf]
      %v1437 = vld [vmem:[%s1 + $0x20] sm:$0xf]
      %v1438 = vld [vmem:[%s1 + $0x24] sm:$0xf]
      %v1439 = vld [vmem:[%s1 + $0x28] sm:$0xf]
      %v1440 = vld [vmem:[%s1 + $0x2c] sm:$0xf]
      %v1441 = vld [vmem:[%s1 + $0x30] sm:$0xf]
      %v1442 = vld [vmem:[%s1 + $0x34] sm:$0xf]
      %v1443 = vld [vmem:[%s1 + $0x38] sm:$0xf]
      %v1444 = vld [vmem:[%s1 + $0x3c] sm:$0xf]
      %v1445 = vld [vmem:[%s1 + $0x40] sm:$0xf]
      %v1446 = vld [vmem:[%s1 + $0x44] sm:$0xf]
      %v1447 = vld [vmem:[%s2] sm:$0x1]
      %v1449 = vlaneseq
      %v1450 = vshrl.u32 %v1449, 7
      %v1451 = vsub.s32 0, %v1450
      %v1452 = vrot.slane %v1447, %v1451
      %v1472 = vunpack.c.l.b16 %v1429
      %v1473 = vunpack.c.l.b16 %v1430
      %v1474 = vunpack.c.l.b16 %v1431
      %v1475 = vunpack.c.l.b16 %v1432
      %v1476 = vunpack.c.l.b16 %v1433
      %v1477 = vunpack.c.l.b16 %v1434
      %v1478 = vunpack.c.l.b16 %v1435
      %v1479 = vunpack.c.l.b16 %v1436
      %v1480 = vunpack.c.l.b16 %v1437
      %v1481 = vunpack.c.l.b16 %v1438
      %v1482 = vunpack.c.l.b16 %v1439
      %v1483 = vunpack.c.l.b16 %v1440
      %v1484 = vunpack.c.l.b16 %v1441
      %v1485 = vunpack.c.l.b16 %v1442
      %v1486 = vunpack.c.l.b16 %v1443
      %v1487 = vunpack.c.l.b16 %v1444
      %v1488 = vunpack.c.l.b16 %v1445
      %v1489 = vunpack.c.l.b16 %v1446
      %v1490 = vpack.c.b16 %v1473, %v1472
      %v1491 = vpack.c.b16 %v1475, %v1474
      %v1492 = vpack.c.b16 %v1477, %v1476
      %v1493 = vpack.c.b16 %v1479, %v1478
      %v1494 = vpack.c.b16 %v1481, %v1480
      %v1495 = vpack.c.b16 %v1483, %v1482
      %v1496 = vpack.c.b16 %v1485, %v1484
      %v1497 = vpack.c.b16 %v1487, %v1486
      %v1498 = vpack.c.b16 %v1489, %v1488
      %v1509 = vsel %vm1166, %v1398, 0
      %v1512 = vsel %vm1166, %v1400, 0
      %v1515 = vsel %vm1166, %v1402, 0
      %v1518 = vsel %vm1166, %v1404, 0
      %v1521 = vsel %vm1166, %v1406, 0
      %v1524 = vsel %vm1166, %v1408, 0
      %v1527 = vsel %vm1166, %v1410, 0
      %v1530 = vsel %vm1166, %v1412, 0
      %v1533 = vsel %vm1166, %v1414, 0
      %v1536 = vsel %vm1166, %v1416, 0
      %v1539 = vsel %vm1166, %v1418, 0
      %v1542 = vsel %vm1166, %v1420, 0
      %v1545 = vsel %vm1166, %v1422, 0
      %v1548 = vsel %vm1166, %v1424, 0
      %v1551 = vsel %vm1166, %v1426, 0
      %v1554 = vsel %vm1166, %v1428, 0
      %1556 = vmatprep.subr.bf16.mxu0 0
      %1557 = vmatpush1.bf16.msra.mxu0 %v1490
      %1558 = vmatprep.subr.bf16.mxu0 0
      %1559 = vmatpush1.bf16.msra.mxu0 %v1491
      %1560 = vmatprep.subr.bf16.mxu0 0
      %1561 = vmatpush1.bf16.msra.mxu0 %v1492
      %1562 = vmatprep.subr.bf16.mxu0 0
      %1563 = vmatpush1.bf16.msra.mxu0 %v1493
      %1564 = vmatprep.subr.bf16.mxu0 0
      %1565 = vmatpush1.bf16.msra.mxu0 %v1494
      %1566 = vmatprep.subr.bf16.mxu0 0
      %1567 = vmatpush1.bf16.msra.mxu0 %v1495
      %1568 = vmatprep.subr.bf16.mxu0 0
      %1569 = vmatpush1.bf16.msra.mxu0 %v1496
      %1570 = vmatprep.subr.bf16.mxu0 0
      %1571 = vmatpush1.bf16.msra.mxu0 %v1497
      %1572 = vmatprep.subr.bf16.mxu0 0
      %1573 = vmatpush1.bf16.msra.mxu0 %v1498
      %1574 = vmatprep.subr.bf16.mxu0 0
      %1575 = vmatpush1.bf16.msra.mxu0 0
      %1576 = vmatprep.subr.bf16.mxu0 0
      %1577 = vmatpush1.bf16.msra.mxu0 0
      %1578 = vmatprep.subr.bf16.mxu0 0
      %1579 = vmatpush1.bf16.msra.mxu0 0
      %1580 = vmatprep.subr.bf16.mxu0 0
      %1581 = vmatpush1.bf16.msra.mxu0 0
      %1582 = vmatprep.subr.bf16.mxu0 0
      %1583 = vmatpush1.bf16.msra.mxu0 0
      %1584 = vmatprep.subr.bf16.mxu0 0
      %1585 = vmatpush1.bf16.msra.mxu0 0
      %1586 = vmatprep.subr.bf16.mxu0 0
      %1587 = vmatpush1.bf16.msra.mxu0 0
      %1588 = vmatprep.mubr.bf16.mxu0 %v1509
      %1589 = vmatmul.mubr.bf16.gmra.mrb[0].mxu0 %v1397
      %v1590 = vpop.f32.mrb[0].mxu0
      %v1591 = vadd.f32 %v1452, %v1590
      %v1592 = vpop.f32.mrb[0].mxu0
      %v1593 = vpop.f32.mrb[0].mxu0
      %v1594 = vadd.f32 %v1452, %v1593
      %v1595 = vpop.f32.mrb[0].mxu0
      %1596 = vmatprep.mubr.bf16.mxu0 %v1512
      %1597 = vmatmul.mubr.bf16.gmra.mrb[0].mxu0 %v1399
      %v1598 = vpop.f32.mrb[0].mxu0
      %v1599 = vadd.f32 %v1452, %v1598
      %v1600 = vpop.f32.mrb[0].mxu0
      %v1601 = vpop.f32.mrb[0].mxu0
      %v1602 = vadd.f32 %v1452, %v1601
      %v1603 = vpop.f32.mrb[0].mxu0
      %1604 = vmatprep.mubr.bf16.mxu0 %v1515
      %1605 = vmatmul.mubr.bf16.gmra.mrb[0].mxu0 %v1401
      %v1606 = vpop.f32.mrb[0].mxu0
      %v1607 = vadd.f32 %v1452, %v1606
      %v1608 = vpop.f32.mrb[0].mxu0
      %v1609 = vpop.f32.mrb[0].mxu0
      %v1610 = vadd.f32 %v1452, %v1609
      %v1611 = vpop.f32.mrb[0].mxu0
      %1612 = vmatprep.mubr.bf16.mxu0 %v1518
      %1613 = vmatmul.mubr.bf16.gmra.mrb[0].mxu0 %v1403
      %v1614 = vpop.f32.mrb[0].mxu0
      %v1615 = vadd.f32 %v1452, %v1614
      %v1616 = vpop.f32.mrb[0].mxu0
      %v1617 = vpop.f32.mrb[0].mxu0
      %v1618 = vadd.f32 %v1452, %v1617
      %v1619 = vpop.f32.mrb[0].mxu0
      %1620 = vmatprep.mubr.bf16.mxu0 %v1521
      %1621 = vmatmul.mubr.bf16.gmra.mrb[0].mxu0 %v1405
      %v1622 = vpop.f32.mrb[0].mxu0
      %v1623 = vadd.f32 %v1452, %v1622
      %v1624 = vpop.f32.mrb[0].mxu0
      %v1625 = vpop.f32.mrb[0].mxu0
      %v1626 = vadd.f32 %v1452, %v1625
      %v1627 = vpop.f32.mrb[0].mxu0
      %1628 = vmatprep.mubr.bf16.mxu0 %v1524
      %1629 = vmatmul.mubr.bf16.gmra.mrb[0].mxu0 %v1407
      %v1630 = vpop.f32.mrb[0].mxu0
      %v1631 = vadd.f32 %v1452, %v1630
      %v1632 = vpop.f32.mrb[0].mxu0
      %v1633 = vpop.f32.mrb[0].mxu0
      %v1634 = vadd.f32 %v1452, %v1633
      %v1635 = vpop.f32.mrb[0].mxu0
      %1636 = vmatprep.mubr.bf16.mxu0 %v1527
      %1637 = vmatmul.mubr.bf16.gmra.mrb[0].mxu0 %v1409
      %v1638 = vpop.f32.mrb[0].mxu0
      %v1639 = vadd.f32 %v1452, %v1638
      %v1640 = vpop.f32.mrb[0].mxu0
      %v1641 = vpop.f32.mrb[0].mxu0
      %v1642 = vadd.f32 %v1452, %v1641
      %v1643 = vpop.f32.mrb[0].mxu0
      %1644 = vmatprep.mubr.bf16.mxu0 %v1530
      %1645 = vmatmul.mubr.bf16.gmra.mrb[0].mxu0 %v1411
      %v1646 = vpop.f32.mrb[0].mxu0
      %v1647 = vadd.f32 %v1452, %v1646
      %v1648 = vpop.f32.mrb[0].mxu0
      %v1649 = vpop.f32.mrb[0].mxu0
      %v1650 = vadd.f32 %v1452, %v1649
      %v1651 = vpop.f32.mrb[0].mxu0
      %1652 = vmatprep.mubr.bf16.mxu0 %v1533
      %1653 = vmatmul.mubr.bf16.gmra.mrb[0].mxu0 %v1413
      %v1654 = vpop.f32.mrb[0].mxu0
      %v1655 = vadd.f32 %v1452, %v1654
      %v1656 = vpop.f32.mrb[0].mxu0
      %v1657 = vpop.f32.mrb[0].mxu0
      %v1658 = vadd.f32 %v1452, %v1657
      %v1659 = vpop.f32.mrb[0].mxu0
      %1660 = vmatprep.mubr.bf16.mxu0 %v1536
      %1661 = vmatmul.mubr.bf16.gmra.mrb[0].mxu0 %v1415
      %v1662 = vpop.f32.mrb[0].mxu0
      %v1663 = vadd.f32 %v1452, %v1662
      %v1664 = vpop.f32.mrb[0].mxu0
      %v1665 = vpop.f32.mrb[0].mxu0
      %v1666 = vadd.f32 %v1452, %v1665
      %v1667 = vpop.f32.mrb[0].mxu0
      %1668 = vmatprep.mubr.bf16.mxu0 %v1539
      %1669 = vmatmul.mubr.bf16.gmra.mrb[0].mxu0 %v1417
      %v1670 = vpop.f32.mrb[0].mxu0
      %v1671 = vadd.f32 %v1452, %v1670
      %v1672 = vpop.f32.mrb[0].mxu0
      %v1673 = vpop.f32.mrb[0].mxu0
      %v1674 = vadd.f32 %v1452, %v1673
      %v1675 = vpop.f32.mrb[0].mxu0
      %1676 = vmatprep.mubr.bf16.mxu0 %v1542
      %1677 = vmatmul.mubr.bf16.gmra.mrb[0].mxu0 %v1419
      %v1678 = vpop.f32.mrb[0].mxu0
      %v1679 = vadd.f32 %v1452, %v1678
      %v1680 = vpop.f32.mrb[0].mxu0
      %v1681 = vpop.f32.mrb[0].mxu0
      %v1682 = vadd.f32 %v1452, %v1681
      %v1683 = vpop.f32.mrb[0].mxu0
      %1684 = vmatprep.mubr.bf16.mxu0 %v1545
      %1685 = vmatmul.mubr.bf16.gmra.mrb[0].mxu0 %v1421
      %v1686 = vpop.f32.mrb[0].mxu0
      %v1687 = vadd.f32 %v1452, %v1686
      %v1688 = vpop.f32.mrb[0].mxu0
      %v1689 = vpop.f32.mrb[0].mxu0
      %v1690 = vadd.f32 %v1452, %v1689
      %v1691 = vpop.f32.mrb[0].mxu0
      %1692 = vmatprep.mubr.bf16.mxu0 %v1548
      %1693 = vmatmul.mubr.bf16.gmra.mrb[0].mxu0 %v1423
      %v1694 = vpop.f32.mrb[0].mxu0
      %v1695 = vadd.f32 %v1452, %v1694
      %v1696 = vpop.f32.mrb[0].mxu0
      %v1697 = vpop.f32.mrb[0].mxu0
      %v1698 = vadd.f32 %v1452, %v1697
      %v1699 = vpop.f32.mrb[0].mxu0
      %1700 = vmatprep.mubr.bf16.mxu0 %v1551
      %1701 = vmatmul.mubr.bf16.gmra.mrb[0].mxu0 %v1425
      %v1702 = vpop.f32.mrb[0].mxu0
      %v1703 = vadd.f32 %v1452, %v1702
      %v1704 = vpop.f32.mrb[0].mxu0
      %v1705 = vpop.f32.mrb[0].mxu0
      %v1706 = vadd.f32 %v1452, %v1705
      %v1707 = vpop.f32.mrb[0].mxu0
      %1708 = vmatprep.mubr.bf16.mxu0 %v1554
      %1709 = vmatmul.mubr.bf16.gmra.mrb[0].mxu0 %v1427
      %v1710 = vpop.f32.mrb[0].mxu0
      %v1711 = vadd.f32 %v1452, %v1710
      %v1712 = vpop.f32.mrb[0].mxu0
      %v1713 = vpop.f32.mrb[0].mxu0
      %v1714 = vadd.f32 %v1452, %v1713
      %v1715 = vpop.f32.mrb[0].mxu0
      %1716 = vdwg.mxu0
      %1717 = vst.msk [vmem:[%s170] sm:$0xff] %vm1199, %v1591
      %1718 = vst.msk [vmem:[%s170 + $0x8] sm:$0xff] %vm1199, %v1594
      %1719 = vst.msk [vmem:[%s170 + $0x10] sm:$0xff] %vm1199, %v1599
      %1720 = vst.msk [vmem:[%s170 + $0x18] sm:$0xff] %vm1199, %v1602
      %1721 = vst.msk [vmem:[%s170 + $0x20] sm:$0xff] %vm1199, %v1607
      %1722 = vst.msk [vmem:[%s170 + $0x28] sm:$0xff] %vm1199, %v1610
      %1723 = vst.msk [vmem:[%s170 + $0x30] sm:$0xff] %vm1199, %v1615
      %1724 = vst.msk [vmem:[%s170 + $0x38] sm:$0xff] %vm1199, %v1618
      %1725 = vst.msk [vmem:[%s170 + $0x40] sm:$0xff] %vm1199, %v1623
      %1726 = vst.msk [vmem:[%s170 + $0x48] sm:$0xff] %vm1199, %v1626
      %1727 = vst.msk [vmem:[%s170 + $0x50] sm:$0xff] %vm1199, %v1631
      %1728 = vst.msk [vmem:[%s170 + $0x58] sm:$0xff] %vm1199, %v1634
      %1729 = vst.msk [vmem:[%s170 + $0x60] sm:$0xff] %vm1199, %v1639
      %1730 = vst.msk [vmem:[%s170 + $0x68] sm:$0xff] %vm1199, %v1642
      %1731 = vst.msk [vmem:[%s170 + $0x70] sm:$0xff] %vm1199, %v1647
      %1732 = vst.msk [vmem:[%s170 + $0x78] sm:$0xff] %vm1199, %v1650
      %1733 = vst.msk [vmem:[%s170 + $0x80] sm:$0xff] %vm1199, %v1655
      %1734 = vst.msk [vmem:[%s170 + $0x88] sm:$0xff] %vm1199, %v1658
      %1735 = vst.msk [vmem:[%s170 + $0x90] sm:$0xff] %vm1199, %v1663
      %1736 = vst.msk [vmem:[%s170 + $0x98] sm:$0xff] %vm1199, %v1666
      %1737 = vst.msk [vmem:[%s170 + $0xa0] sm:$0xff] %vm1199, %v1671
      %1738 = vst.msk [vmem:[%s170 + $0xa8] sm:$0xff] %vm1199, %v1674
      %1739 = vst.msk [vmem:[%s170 + $0xb0] sm:$0xff] %vm1199, %v1679
      %1740 = vst.msk [vmem:[%s170 + $0xb8] sm:$0xff] %vm1199, %v1682
      %1741 = vst.msk [vmem:[%s170 + $0xc0] sm:$0xff] %vm1199, %v1687
      %1742 = vst.msk [vmem:[%s170 + $0xc8] sm:$0xff] %vm1199, %v1690
      %1743 = vst.msk [vmem:[%s170 + $0xd0] sm:$0xff] %vm1199, %v1695
      %1744 = vst.msk [vmem:[%s170 + $0xd8] sm:$0xff] %vm1199, %v1698
      %1745 = vst.msk [vmem:[%s170 + $0xe0] sm:$0xff] %vm1199, %v1703
      %1746 = vst.msk [vmem:[%s170 + $0xe8] sm:$0xff] %vm1199, %v1706
      %1747 = vst.msk [vmem:[%s170 + $0xf0] sm:$0xff] %vm1199, %v1711
      %1748 = vst.msk [vmem:[%s170 + $0xf8] sm:$0xff] %vm1199, %v1714
      %p1749 = scmp.lt.s32.totalorder %s14, 1
      %s1750 = scalar_select %p1749, %s14, 1
      %s1751 = smul.addr %s1750, 32
      %s1752 = smul.addr %s1751, 8
      %s1753 = scalar_lea.vmem %s3, %s1752
      // Predicated region
      $region33: #{wavemix_forward.8} parent=31 // pred_check
        %p1754 = pneg %p100
      $region34: #{wavemix_forward.8} parent=31 // pred_check_branch
        %1756 = sbr.rel (%p1754) target = $region36
      $region35: #{wavemix_forward.8} parent=31 // pred_region
        _
      $region36: #{wavemix_forward.8} parent=31 // pred_fallthru
        _
    $region32: #{wavemix_forward.8} parent=5 // pred_fallthru
      _
    %p1757 = scmp.le.s32.totalorder 2, %s9
    // Predicated region
    $region37: #{wavemix_forward.8} parent=5 // pred_check
      %p1758 = pneg %p1757
    $region38: #{wavemix_forward.8} parent=5 // pred_check_branch
      %1760 = sbr.rel (%p1758) target = $region40
    $region39: #{wavemix_forward.8} parent=5 // pred_region
      %s1761 = ssub.s32 %s9, 2
      // Predicated region
      $region41: #{wavemix_forward.8} parent=39 // pred_check
        %p1762 = pneg %p106
      $region42: #{wavemix_forward.8} parent=39 // pred_check_branch
        %1764 = sbr.rel (%p1762) target = $region44
      $region43: #{wavemix_forward.8} parent=39 // pred_region
        %p1765 = scmp.lt.s32.totalorder %s15, 1
        %s1766 = scalar_select %p1765, %s15, 1
        %s1767 = smul.addr %s1766, 32
        %s1768 = smul.addr %s1767, 8
        %s1769 = scalar_lea.vmem %s3, %s1768
      $region44: #{wavemix_forward.8} parent=39 // pred_fallthru
        _
    $region40: #{wavemix_forward.8} parent=5 // pred_fallthru
      _
  $region6: #{wavemix_forward.8} parent=0 // loop_footer
    %s13 = sadd.s32 1, %s9
  $region7: #{wavemix_forward.8} parent=0 // loop_footer_branch
    %8 = sbr.rel target = $region3
  $region8: #{wavemix_forward.8} parent=0 // loop_exit
    _

// kernel: wavemix_forward.9
$region0: #{wavemix_forward.9}
  #allocation0 [shape = 'u32[]', space=smem, size = 0x4, offset = 0x4, fixed_abs, tag = 'smem constant byte address 0x4 - core index']
  #allocation1 [shape = 'u32[144,128]{1,0:T(1,128)}', space=vmem, size = 0x12000, scoped, tag = 'internal scratch']
  %s0 = inlined_call_operand.vmem [shape: f32[128,128], index: 0, kind: input, shape index: {}]
  %s1 = inlined_call_operand.vmem [shape: bf16[128,64], index: 1, kind: input, shape index: {}]
  %s2 = inlined_call_operand.vmem [shape: f32[1,64], index: 2, kind: input, shape index: {}]
  %s3 = inlined_call_operand.vmem [shape: bf16[64,16], index: 3, kind: input, shape index: {}]
  %s4 = inlined_call_operand.vmem [shape: f32[1,16], index: 4, kind: input, shape index: {}]
  %s5 = inlined_call_operand.vmem [shape: f32[128,16], index: 5, kind: output, shape index: {}]
  %s6 = sld [smem:[#allocation0]]
  $region53: #{wavemix_forward.9} parent=0
    _
  %s8 = ssub.s32 1, %s6
  %s9 = scalar_select 0, %s8, %s6
  loop: start=0, step=1, limit=4
  $region2: #{wavemix_forward.9} parent=0 // loop_pre_header
    _
  $region3: #{wavemix_forward.9} parent=0 // loop_header
    %s11 = sphi 0, %s15
    %p12 = scmp.ge.s32.totalorder %s11, 4
    %s21 = sphi 0, %s23
    %s24 = sphi 0, %s21
    %s25 = sphi 0, %s24
    %s41 = sphi 0, %s25
    %s45 = sphi 0, %s45
    %s47 = sphi 0, %s45
    %s48 = sphi 0, %s47
    %s62 = sphi 0, %s48
    %s66 = sphi 0, %s66
    %s68 = sphi 0, %s66
    %s69 = sphi 0, %s68
    %s83 = sphi 0, %s69
    %s87 = sphi 0, %s87
    %s89 = sphi 0, %s87
    %s90 = sphi 0, %s89
    %s104 = sphi 0, %s90
    %s108 = sphi 0, %s108
    %s110 = sphi 0, %s108
    %s111 = sphi 0, %s110
    %s125 = sphi 0, %s111
    %s131 = sphi 0, %s133
    %s134 = sphi 0, %s131
    %s135 = sphi 0, %s134
    %s151 = sphi 0, %s135
  $region4: #{wavemix_forward.9} parent=0 // loop_header_branch
    %14 = sbr.rel (%p12) target = $region8
  $region5: #{wavemix_forward.9} parent=0 // loop_body
    %s16 = ssub.s32 %s11, 1
    %s17 = ssub.s32 %s11, 2
    %s18 = sadd.s32 %s11, 1
    %s19 = ssub.s32 %s11, %s18
    %p20 = scmp.eq.s32.totalorder %s19, 0
    %s22 = sadd.s32 %s21, 1
    %s23 = scalar_select %p20, %s21, %s22
    %p26 = pneg %p20
    %p27 = scmp.eq.s32.totalorder %s11, 1
    %p28 = por %p26, %p27
    %p29 = scmp.ne.s32.totalorder %s21, %s24
    %p30 = scmp.eq.s32.totalorder %s11, 0
    %p31 = por %p29, %p30
    %p32 = scmp.ne.s32.totalorder %s21, %s24
    %p33 = scmp.eq.s32.totalorder %s16, 1
    %p34 = por %p32, %p33
    %p35 = scmp.ne.s32.totalorder %s24, %s25
    %p36 = scmp.eq.s32.totalorder %s16, 0
    %p37 = por %p35, %p36
    %p38 = scmp.ne.s32.totalorder %s24, %s25
    %p39 = scmp.eq.s32.totalorder %s17, 1
    %p40 = por %p38, %p39
    %p42 = scmp.ne.s32.totalorder %s25, %s41
    %p43 = scmp.eq.s32.totalorder %s17, 0
    %p44 = por %p42, %p43
    %s46 = sadd.s32 %s45, 1
    %p49 = scmp.eq.s32.totalorder %s11, 1
    %p50 = scmp.ne.s32.totalorder %s45, %s47
    %p51 = scmp.eq.s32.totalorder %s11, 0
    %p52 = por %p50, %p51
    %p53 = scmp.ne.s32.totalorder %s45, %s47
    %p54 = scmp.eq.s32.totalorder %s16, 1
    %p55 = por %p53, %p54
    %p56 = scmp.ne.s32.totalorder %s47, %s48
    %p57 = scmp.eq.s32.totalorder %s16, 0
    %p58 = por %p56, %p57
    %p59 = scmp.ne.s32.totalorder %s47, %s48
    %p60 = scmp.eq.s32.totalorder %s17, 1
    %p61 = por %p59, %p60
    %p63 = scmp.ne.s32.totalorder %s48, %s62
    %p64 = scmp.eq.s32.totalorder %s17, 0
    %p65 = por %p63, %p64
    %s67 = sadd.s32 %s66, 1
    %p70 = scmp.eq.s32.totalorder %s11, 1
    %p71 = scmp.ne.s32.totalorder %s66, %s68
    %p72 = scmp.eq.s32.totalorder %s11, 0
    %p73 = por %p71, %p72
    %p74 = scmp.ne.s32.totalorder %s66, %s68
    %p75 = scmp.eq.s32.totalorder %s16, 1
    %p76 = por %p74, %p75
    %p77 = scmp.ne.s32.totalorder %s68, %s69
    %p78 = scmp.eq.s32.totalorder %s16, 0
    %p79 = por %p77, %p78
    %p80 = scmp.ne.s32.totalorder %s68, %s69
    %p81 = scmp.eq.s32.totalorder %s17, 1
    %p82 = por %p80, %p81
    %p84 = scmp.ne.s32.totalorder %s69, %s83
    %p85 = scmp.eq.s32.totalorder %s17, 0
    %p86 = por %p84, %p85
    %s88 = sadd.s32 %s87, 1
    %p91 = scmp.eq.s32.totalorder %s11, 1
    %p92 = scmp.ne.s32.totalorder %s87, %s89
    %p93 = scmp.eq.s32.totalorder %s11, 0
    %p94 = por %p92, %p93
    %p95 = scmp.ne.s32.totalorder %s87, %s89
    %p96 = scmp.eq.s32.totalorder %s16, 1
    %p97 = por %p95, %p96
    %p98 = scmp.ne.s32.totalorder %s89, %s90
    %p99 = scmp.eq.s32.totalorder %s16, 0
    %p100 = por %p98, %p99
    %p101 = scmp.ne.s32.totalorder %s89, %s90
    %p102 = scmp.eq.s32.totalorder %s17, 1
    %p103 = por %p101, %p102
    %p105 = scmp.ne.s32.totalorder %s90, %s104
    %p106 = scmp.eq.s32.totalorder %s17, 0
    %p107 = por %p105, %p106
    %s109 = sadd.s32 %s108, 1
    %p112 = scmp.eq.s32.totalorder %s11, 1
    %p113 = scmp.ne.s32.totalorder %s108, %s110
    %p114 = scmp.eq.s32.totalorder %s11, 0
    %p115 = por %p113, %p114
    %p116 = scmp.ne.s32.totalorder %s108, %s110
    %p117 = scmp.eq.s32.totalorder %s16, 1
    %p118 = por %p116, %p117
    %p119 = scmp.ne.s32.totalorder %s110, %s111
    %p120 = scmp.eq.s32.totalorder %s16, 0
    %p121 = por %p119, %p120
    %p122 = scmp.ne.s32.totalorder %s110, %s111
    %p123 = scmp.eq.s32.totalorder %s17, 1
    %p124 = por %p122, %p123
    %p126 = scmp.ne.s32.totalorder %s111, %s125
    %p127 = scmp.eq.s32.totalorder %s17, 0
    %p128 = por %p126, %p127
    %s129 = ssub.s32 %s11, %s18
    %p130 = scmp.eq.s32.totalorder %s129, 0
    %s132 = sadd.s32 %s131, 1
    %s133 = scalar_select %p130, %s131, %s132
    %p136 = pneg %p130
    %p137 = scmp.eq.s32.totalorder %s11, 1
    %p138 = por %p136, %p137
    %p139 = scmp.ne.s32.totalorder %s131, %s134
    %p140 = scmp.eq.s32.totalorder %s11, 0
    %p141 = por %p139, %p140
    %p142 = scmp.ne.s32.totalorder %s131, %s134
    %p143 = scmp.eq.s32.totalorder %s16, 1
    %p144 = por %p142, %p143
    %p145 = scmp.ne.s32.totalorder %s134, %s135
    %p146 = scmp.eq.s32.totalorder %s16, 0
    %p147 = por %p145, %p146
    %p148 = scmp.ne.s32.totalorder %s134, %s135
    %p149 = scmp.eq.s32.totalorder %s17, 1
    %p150 = por %p148, %p149
    %p152 = scmp.ne.s32.totalorder %s135, %s151
    %p153 = scmp.eq.s32.totalorder %s17, 0
    %p154 = por %p152, %p153
    %p155 = scmp.le.s32.totalorder 1, %s11
    %p156 = scmp.lt.s32.totalorder %s11, 3
    %p157 = pnand %p155, %p156
    %p158 = pneg %p157
    // Predicated region
    $region9: #{wavemix_forward.9} parent=5 // pred_check
      _
    $region10: #{wavemix_forward.9} parent=5 // pred_check_branch
      %160 = sbr.rel (%p157) target = $region12
    $region11: #{wavemix_forward.9} parent=5 // pred_region
      %s161 = ssub.s32 %s11, 1
      // Predicated region
      $region13: #{wavemix_forward.9} parent=11 // pred_check
        %p162 = pneg %p58
      $region14: #{wavemix_forward.9} parent=11 // pred_check_branch
        %164 = sbr.rel (%p162) target = $region16
      $region15: #{wavemix_forward.9} parent=11 // pred_region
        _
      $region16: #{wavemix_forward.9} parent=11 // pred_fallthru
        _
      // Predicated region
      $region17: #{wavemix_forward.9} parent=11 // pred_check
        %p165 = pneg %p79
      $region18: #{wavemix_forward.9} parent=11 // pred_check_branch
        %167 = sbr.rel (%p165) target = $region20
      $region19: #{wavemix_forward.9} parent=11 // pred_region
        _
      $region20: #{wavemix_forward.9} parent=11 // pred_fallthru
        _
      // Predicated region
      $region21: #{wavemix_forward.9} parent=11 // pred_check
        %p168 = pneg %p100
      $region22: #{wavemix_forward.9} parent=11 // pred_check_branch
        %170 = sbr.rel (%p168) target = $region24
      $region23: #{wavemix_forward.9} parent=11 // pred_region
        _
      $region24: #{wavemix_forward.9} parent=11 // pred_fallthru
        _
      // Predicated region
      $region25: #{wavemix_forward.9} parent=11 // pred_check
        %p171 = pneg %p121
      $region26: #{wavemix_forward.9} parent=11 // pred_check_branch
        %173 = sbr.rel (%p171) target = $region28
      $region27: #{wavemix_forward.9} parent=11 // pred_region
        _
      $region28: #{wavemix_forward.9} parent=11 // pred_fallthru
        _
    $region12: #{wavemix_forward.9} parent=5 // pred_fallthru
      _
    %p174 = scmp.lt.s32.totalorder %s11, 2
    // Predicated region
    $region29: #{wavemix_forward.9} parent=5 // pred_check
      %p175 = pneg %p174
    $region30: #{wavemix_forward.9} parent=5 // pred_check_branch
      %177 = sbr.rel (%p175) target = $region32
    $region31: #{wavemix_forward.9} parent=5 // pred_region
      // Predicated region
      $region33: #{wavemix_forward.9} parent=31 // pred_check
        %p178 = pneg %p31
      $region34: #{wavemix_forward.9} parent=31 // pred_check_branch
        %180 = sbr.rel (%p178) target = $region36
      $region35: #{wavemix_forward.9} parent=31 // pred_region
        %s181 = smul.u32 8, %s11
        %p182 = scmp.lt.s32.totalorder %s181, 15
        %s183 = scalar_select %p182, %s181, 15
        %s184 = smul.addr %s183, 8
        %s185 = scalar_lea.vmem %s0, %s184
        %s186 = smul.u32 8, %s11
      $region36: #{wavemix_forward.9} parent=31 // pred_fallthru
        _
    $region32: #{wavemix_forward.9} parent=5 // pred_fallthru
      _
    %p187 = scmp.le.s32.totalorder 1, %s11
    %p188 = scmp.lt.s32.totalorder %s11, 3
    %p189 = pnand %p187, %p188
    %p190 = pneg %p189
    // Predicated region
    $region37: #{wavemix_forward.9} parent=5 // pred_check
      _
    $region38: #{wavemix_forward.9} parent=5 // pred_check_branch
      %192 = sbr.rel (%p189) target = $region40
    $region39: #{wavemix_forward.9} parent=5 // pred_region
      %s193 = ssub.s32 %s11, 1
      %s194 = smul.u32 8, %s16
      %p195 = scmp.lt.s32.totalorder %s194, 15
      %s196 = scalar_select %p195, %s194, 15
      %s197 = smul.addr %s196, 8
      %s198 = scalar_lea.vmem %s0, %s197
      %p199 = pneg %p37
      %p200 = pneg %p34
      %p201 = pneg %p58
      %p202 = pneg %p55
      %p203 = pneg %p79
      %p204 = pneg %p76
      %p205 = pneg %p100
      %p206 = pneg %p97
      %p207 = pneg %p121
      %p208 = pneg %p118
      %p209 = pneg %p147
      %p210 = pneg %p144
      %s211 = smul.u32 8, %s16
      %p212 = scmp.lt.s32.totalorder %s211, 15
      %s213 = scalar_select %p212, %s211, 15
      %s214 = smul.addr %s213, 8
      %s215 = scalar_lea.vmem %s5, %s214
      %s216 = smul.u32 8, %s16
      %p217 = scmp.lt.s32.totalorder %s216, 15
      %s218 = scalar_select %p217, %s216, 15
      %s219 = smul.addr %s218, 8
      %s220 = scalar_lea.vmem %s0, %s219
      %s221 = smul.u32 8, %s16
      %s222 = smul.u32 8, %s16
      %p223 = scmp.lt.s32.totalorder %s222, 15
      %s224 = scalar_select %p223, %s222, 15
      %s225 = smul.addr %s224, 8
      %s226 = scalar_lea.vmem %s5, %s225
      %s227 = smul.u32 8, %s16
      %v229 = vld [vmem:[%s220] sm:$0xff]
      %v230 = vld [vmem:[%s220 + $0x8] sm:$0xff]
      %v231 = vld [vmem:[%s220 + $0x10] sm:$0xff]
      %v232 = vld [vmem:[%s220 + $0x18] sm:$0xff]
      %v233 = vld [vmem:[%s220 + $0x20] sm:$0xff]
      %v234 = vld [vmem:[%s220 + $0x28] sm:$0xff]
      %v235 = vld [vmem:[%s220 + $0x30] sm:$0xff]
      %v236 = vld [vmem:[%s220 + $0x38] sm:$0xff]
      %v237 = vpack.c.bf16 %v230, %v229
      %v238 = vpack.c.bf16 %v232, %v231
      %v239 = vpack.c.bf16 %v234, %v233
      %v240 = vpack.c.bf16 %v236, %v235
      %v241 = vld [vmem:[%s1] sm:$0xf]
      %v242 = vld [vmem:[%s1 + $0x4] sm:$0xf]
      %v243 = vld [vmem:[%s1 + $0x8] sm:$0xf]
      %v244 = vld [vmem:[%s1 + $0xc] sm:$0xf]
      %v245 = vld [vmem:[%s1 + $0x10] sm:$0xf]
      %v246 = vld [vmem:[%s1 + $0x14] sm:$0xf]
      %v247 = vld [vmem:[%s1 + $0x18] sm:$0xf]
      %v248 = vld [vmem:[%s1 + $0x1c] sm:$0xf]
      %v249 = vld [vmem:[%s1 + $0x20] sm:$0xf]
      %v250 = vld [vmem:[%s1 + $0x24] sm:$0xf]
      %v251 = vld [vmem:[%s1 + $0x28] sm:$0xf]
      %v252 = vld [vmem:[%s1 + $0x2c] sm:$0xf]
      %v253 = vld [vmem:[%s1 + $0x30] sm:$0xf]
      %v254 = vld [vmem:[%s1 + $0x34] sm:$0xf]
      %v255 = vld [vmem:[%s1 + $0x38] sm:$0xf]
      %v256 = vld [vmem:[%s1 + $0x3c] sm:$0xf]
      %v257 = vld [vmem:[%s2] sm:$0x1]
      %v259 = vlaneseq
      %v260 = vshrl.u32 %v259, 7
      %v261 = vsub.s32 0, %v260
      %v262 = vrot.slane %v257, %v261
      %v280 = vunpack.c.l.b16 %v241
      %v281 = vunpack.c.l.b16 %v242
      %v282 = vunpack.c.l.b16 %v243
      %v283 = vunpack.c.l.b16 %v244
      %v284 = vunpack.c.l.b16 %v245
      %v285 = vunpack.c.l.b16 %v246
      %v286 = vunpack.c.l.b16 %v247
      %v287 = vunpack.c.l.b16 %v248
      %v288 = vunpack.c.l.b16 %v249
      %v289 = vunpack.c.l.b16 %v250
      %v290 = vunpack.c.l.b16 %v251
      %v291 = vunpack.c.l.b16 %v252
      %v292 = vunpack.c.l.b16 %v253
      %v293 = vunpack.c.l.b16 %v254
      %v294 = vunpack.c.l.b16 %v255
      %v295 = vunpack.c.l.b16 %v256
      %v296 = vpack.c.b16 %v281, %v280
      %v297 = vpack.c.b16 %v283, %v282
      %v298 = vpack.c.b16 %v285, %v284
      %v299 = vpack.c.b16 %v287, %v286
      %v300 = vpack.c.b16 %v289, %v288
      %v301 = vpack.c.b16 %v291, %v290
      %v302 = vpack.c.b16 %v293, %v292
      %v303 = vpack.c.b16 %v295, %v294
      %312 = vmatprep.subr.bf16.mxu0 0
      %313 = vmatpush1.bf16.msra.mxu0 %v296
      %314 = vmatprep.subr.bf16.mxu0 0
      %315 = vmatpush1.bf16.msra.mxu0 %v297
      %316 = vmatprep.subr.bf16.mxu0 0
      %317 = vmatpush1.bf16.msra.mxu0 %v298
      %318 = vmatprep.subr.bf16.mxu0 0
      %319 = vmatpush1.bf16.msra.mxu0 %v299
      %320 = vmatprep.subr.bf16.mxu0 0
      %321 = vmatpush1.bf16.msra.mxu0 %v300
      %322 = vmatprep.subr.bf16.mxu0 0
      %323 = vmatpush1.bf16.msra.mxu0 %v301
      %324 = vmatprep.subr.bf16.mxu0 0
      %325 = vmatpush1.bf16.msra.mxu0 %v302
      %326 = vmatprep.subr.bf16.mxu0 0
      %327 = vmatpush1.bf16.msra.mxu0 %v303
      %328 = vmatprep.subr.bf16.mxu0 0
      %329 = vmatpush1.bf16.msra.mxu0 0
      %330 = vmatprep.subr.bf16.mxu0 0
      %331 = vmatpush1.bf16.msra.mxu0 0
      %332 = vmatprep.subr.bf16.mxu0 0
      %333 = vmatpush1.bf16.msra.mxu0 0
      %334 = vmatprep.subr.bf16.mxu0 0
      %335 = vmatpush1.bf16.msra.mxu0 0
      %336 = vmatprep.subr.bf16.mxu0 0
      %337 = vmatpush1.bf16.msra.mxu0 0
      %338 = vmatprep.subr.bf16.mxu0 0
      %339 = vmatpush1.bf16.msra.mxu0 0
      %340 = vmatprep.subr.bf16.mxu0 0
      %341 = vmatpush1.bf16.msra.mxu0 0
      %342 = vmatprep.subr.bf16.mxu0 0
      %343 = vmatpush1.bf16.msra.mxu0 0
      %344 = vmatprep.mubr.bf16.mxu0 0
      %345 = vmatmul.mubr.bf16.gmra.mrb[0].mxu0 %v237
      %v346 = vpop.f32.mrb[0].mxu0
      %v347 = vadd.f32 %v262, %v346
      %v348 = vpop.f32.mrb[0].mxu0
      %v349 = vpop.f32.mrb[0].mxu0
      %v350 = vadd.f32 %v262, %v349
      %v351 = vpop.f32.mrb[0].mxu0
      %352 = vmatprep.mubr.bf16.mxu0 0
      %353 = vmatmul.mubr.bf16.gmra.mrb[0].mxu0 %v238
      %v354 = vpop.f32.mrb[0].mxu0
      %v355 = vadd.f32 %v262, %v354
      %v356 = vpop.f32.mrb[0].mxu0
      %v357 = vpop.f32.mrb[0].mxu0
      %v358 = vadd.f32 %v262, %v357
      %v359 = vpop.f32.mrb[0].mxu0
      %360 = vmatprep.mubr.bf16.mxu0 0
      %361 = vmatmul.mubr.bf16.gmra.mrb[0].mxu0 %v239
      %v362 = vpop.f32.mrb[0].mxu0
      %v363 = vadd.f32 %v262, %v362
      %v364 = vpop.f32.mrb[0].mxu0
      %v365 = vpop.f32.mrb[0].mxu0
      %v366 = vadd.f32 %v262, %v365
      %v367 = vpop.f32.mrb[0].mxu0
      %368 = vmatprep.mubr.bf16.mxu0 0
      %369 = vmatmul.mubr.bf16.gmra.mrb[0].mxu0 %v240
      %v370 = vpop.f32.mrb[0].mxu0
      %v371 = vadd.f32 %v262, %v370
      %v372 = vpop.f32.mrb[0].mxu0
      %v373 = vpop.f32.mrb[0].mxu0
      %v374 = vadd.f32 %v262, %v373
      %v375 = vpop.f32.mrb[0].mxu0
      %376 = vdwg.mxu0
      %v377 = vmul.f32 %v347, 0.5
      %v378 = vmul.f32 %v350, 0.5
      %v379 = vmul.f32 %v355, 0.5
      %v380 = vmul.f32 %v358, 0.5
      %v381 = vmul.f32 %v363, 0.5
      %v382 = vmul.f32 %v366, 0.5
      %v383 = vmul.f32 %v371, 0.5
      %v384 = vmul.f32 %v374, 0.5
      %v385 = vmul.f32 %v347, 0.70710677
      %v386 = vmul.f32 %v350, 0.70710677
      %v387 = vmul.f32 %v355, 0.70710677
      %v388 = vmul.f32 %v358, 0.70710677
      %v389 = vmul.f32 %v363, 0.70710677
      %v390 = vmul.f32 %v366, 0.70710677
      %v391 = vmul.f32 %v371, 0.70710677
      %v392 = vmul.f32 %v374, 0.70710677
      %v393 = vand.u32 2147483647, %v385
      %v394 = vand.u32 2147483647, %v386
      %v395 = vand.u32 2147483647, %v387
      %v396 = vand.u32 2147483647, %v388
      %v397 = vand.u32 2147483647, %v389
      %v398 = vand.u32 2147483647, %v390
      %v399 = vand.u32 2147483647, %v391
      %v400 = vand.u32 2147483647, %v392
      %v401 = vmul.f32 %v393, 0.3275911
      %v402 = vmul.f32 %v394, 0.3275911
      %v403 = vmul.f32 %v395, 0.3275911
      %v404 = vmul.f32 %v396, 0.3275911
      %v405 = vmul.f32 %v397, 0.3275911
      %v406 = vmul.f32 %v398, 0.3275911
      %v407 = vmul.f32 %v399, 0.3275911
      %v408 = vmul.f32 %v400, 0.3275911
      %v409 = vadd.f32 %v401, 1.0
      %v410 = vadd.f32 %v402, 1.0
      %v411 = vadd.f32 %v403, 1.0
      %v412 = vadd.f32 %v404, 1.0
      %v413 = vadd.f32 %v405, 1.0
      %v414 = vadd.f32 %v406, 1.0
      %v415 = vadd.f32 %v407, 1.0
      %v416 = vadd.f32 %v408, 1.0
      %v417 = vrcp.pop %v409
      %v418 = vmul.f32 1.0, %v417
      %v419 = vrcp.pop %v410
      %v420 = vmul.f32 1.0, %v419
      %v421 = vrcp.pop %v411
      %v422 = vmul.f32 1.0, %v421
      %v423 = vrcp.pop %v412
      %v424 = vmul.f32 1.0, %v423
      %v425 = vrcp.pop %v413
      %v426 = vmul.f32 1.0, %v425
      %v427 = vrcp.pop %v414
      %v428 = vmul.f32 1.0, %v427
      %v429 = vrcp.pop %v415
      %v430 = vmul.f32 1.0, %v429
      %v431 = vrcp.pop %v416
      %v432 = vmul.f32 1.0, %v431
      %v433 = vmul.f32 %v418, 1.0614054
      %v434 = vmul.f32 %v420, 1.0614054
      %v435 = vmul.f32 %v422, 1.0614054
      %v436 = vmul.f32 %v424, 1.0614054
      %v437 = vmul.f32 %v426, 1.0614054
      %v438 = vmul.f32 %v428, 1.0614054
      %v439 = vmul.f32 %v430, 1.0614054
      %v440 = vmul.f32 %v432, 1.0614054
      %v441 = vadd.f32 %v433, -1.4531521
      %v442 = vadd.f32 %v434, -1.4531521
      %v443 = vadd.f32 %v435, -1.4531521
      %v444 = vadd.f32 %v436, -1.4531521
      %v445 = vadd.f32 %v437, -1.4531521
      %v446 = vadd.f32 %v438, -1.4531521
      %v447 = vadd.f32 %v439, -1.4531521
      %v448 = vadd.f32 %v440, -1.4531521
      %v449 = vmul.f32 %v441, %v418
      %v450 = vmul.f32 %v442, %v420
      %v451 = vmul.f32 %v443, %v422
      %v452 = vmul.f32 %v444, %v424
      %v453 = vmul.f32 %v445, %v426
      %v454 = vmul.f32 %v446, %v428
      %v455 = vmul.f32 %v447, %v430
      %v456 = vmul.f32 %v448, %v432
      %v457 = vadd.f32 %v449, 1.4214138
      %v458 = vadd.f32 %v450, 1.4214138
      %v459 = vadd.f32 %v451, 1.4214138
      %v460 = vadd.f32 %v452, 1.4214138
      %v461 = vadd.f32 %v453, 1.4214138
      %v462 = vadd.f32 %v454, 1.4214138
      %v463 = vadd.f32 %v455, 1.4214138
      %v464 = vadd.f32 %v456, 1.4214138
      %v465 = vmul.f32 %v457, %v418
      %v466 = vmul.f32 %v458, %v420
      %v467 = vmul.f32 %v459, %v422
      %v468 = vmul.f32 %v460, %v424
      %v469 = vmul.f32 %v461, %v426
      %v470 = vmul.f32 %v462, %v428
      %v471 = vmul.f32 %v463, %v430
      %v472 = vmul.f32 %v464, %v432
      %v473 = vadd.f32 %v465, -0.28449672
      %v474 = vadd.f32 %v466, -0.28449672
      %v475 = vadd.f32 %v467, -0.28449672
      %v476 = vadd.f32 %v468, -0.28449672
      %v477 = vadd.f32 %v469, -0.28449672
      %v478 = vadd.f32 %v470, -0.28449672
      %v479 = vadd.f32 %v471, -0.28449672
      %v480 = vadd.f32 %v472, -0.28449672
      %v481 = vmul.f32 %v473, %v418
      %v482 = vmul.f32 %v474, %v420
      %v483 = vmul.f32 %v475, %v422
      %v484 = vmul.f32 %v476, %v424
      %v485 = vmul.f32 %v477, %v426
      %v486 = vmul.f32 %v478, %v428
      %v487 = vmul.f32 %v479, %v430
      %v488 = vmul.f32 %v480, %v432
      %v489 = vadd.f32 %v481, 0.2548296
      %v490 = vadd.f32 %v482, 0.2548296
      %v491 = vadd.f32 %v483, 0.2548296
      %v492 = vadd.f32 %v484, 0.2548296
      %v493 = vadd.f32 %v485, 0.2548296
      %v494 = vadd.f32 %v486, 0.2548296
      %v495 = vadd.f32 %v487, 0.2548296
      %v496 = vadd.f32 %v488, 0.2548296
      %v497 = vmul.f32 %v489, %v418
      %v498 = vmul.f32 %v490, %v420
      %v499 = vmul.f32 %v491, %v422
      %v500 = vmul.f32 %v492, %v424
      %v501 = vmul.f32 %v493, %v426
      %v502 = vmul.f32 %v494, %v428
      %v503 = vmul.f32 %v495, %v430
      %v504 = vmul.f32 %v496, %v432
      %v505 = vsub.f32 0.0, %v393
      %v506 = vsub.f32 0.0, %v394
      %v507 = vsub.f32 0.0, %v395
      %v508 = vsub.f32 0.0, %v396
      %v509 = vsub.f32 0.0, %v397
      %v510 = vsub.f32 0.0, %v398
      %v511 = vsub.f32 0.0, %v399
      %v512 = vsub.f32 0.0, %v400
      %v513 = vmul.f32 %v505, %v393
      %v514 = vmul.f32 %v506, %v394
      %v515 = vmul.f32 %v507, %v395
      %v516 = vmul.f32 %v508, %v396
      %v517 = vmul.f32 %v509, %v397
      %v518 = vmul.f32 %v510, %v398
      %v519 = vmul.f32 %v511, %v399
      %v520 = vmul.f32 %v512, %v400
      %v521 = vmul.f32 %v513, 1.442695
      %v522 = vpow.pop %v521
      %v523 = vmul.f32 %v514, 1.442695
      %v524 = vpow.pop %v523
      %v525 = vmul.f32 %v515, 1.442695
      %v526 = vpow.pop %v525
      %v527 = vmul.f32 %v516, 1.442695
      %v528 = vpow.pop %v527
      %v529 = vmul.f32 %v517, 1.442695
      %v530 = vpow.pop %v529
      %v531 = vmul.f32 %v518, 1.442695
      %v532 = vpow.pop %v531
      %v533 = vmul.f32 %v519, 1.442695
      %v534 = vpow.pop %v533
      %v535 = vmul.f32 %v520, 1.442695
      %v536 = vpow.pop %v535
      %v537 = vmul.f32 %v497, %v522
      %v538 = vmul.f32 %v498, %v524
      %v539 = vmul.f32 %v499, %v526
      %v540 = vmul.f32 %v500, %v528
      %v541 = vmul.f32 %v501, %v530
      %v542 = vmul.f32 %v502, %v532
      %v543 = vmul.f32 %v503, %v534
      %v544 = vmul.f32 %v504, %v536
      %v545 = vsub.f32 1.0, %v537
      %v546 = vsub.f32 1.0, %v538
      %v547 = vsub.f32 1.0, %v539
      %v548 = vsub.f32 1.0, %v540
      %v549 = vsub.f32 1.0, %v541
      %v550 = vsub.f32 1.0, %v542
      %v551 = vsub.f32 1.0, %v543
      %v552 = vsub.f32 1.0, %v544
      %vm553 = vcmp.lt.f32.partialorder %v385, 0.0
      %vm554 = vcmp.lt.f32.partialorder %v386, 0.0
      %vm555 = vcmp.lt.f32.partialorder %v387, 0.0
      %vm556 = vcmp.lt.f32.partialorder %v388, 0.0
      %vm557 = vcmp.lt.f32.partialorder %v389, 0.0
      %vm558 = vcmp.lt.f32.partialorder %v390, 0.0
      %vm559 = vcmp.lt.f32.partialorder %v391, 0.0
      %vm560 = vcmp.lt.f32.partialorder %v392, 0.0
      %v561 = vsub.f32 0.0, %v545
      %v562 = vsub.f32 0.0, %v546
      %v563 = vsub.f32 0.0, %v547
      %v564 = vsub.f32 0.0, %v548
      %v565 = vsub.f32 0.0, %v549
      %v566 = vsub.f32 0.0, %v550
      %v567 = vsub.f32 0.0, %v551
      %v568 = vsub.f32 0.0, %v552
      %v569 = vsel %vm553, %v561, %v545
      %v570 = vsel %vm554, %v562, %v546
      %v571 = vsel %vm555, %v563, %v547
      %v572 = vsel %vm556, %v564, %v548
      %v573 = vsel %vm557, %v565, %v549
      %v574 = vsel %vm558, %v566, %v550
      %v575 = vsel %vm559, %v567, %v551
      %v576 = vsel %vm560, %v568, %v552
      %v577 = vadd.f32 %v569, 1.0
      %v578 = vadd.f32 %v570, 1.0
      %v579 = vadd.f32 %v571, 1.0
      %v580 = vadd.f32 %v572, 1.0
      %v581 = vadd.f32 %v573, 1.0
      %v582 = vadd.f32 %v574, 1.0
      %v583 = vadd.f32 %v575, 1.0
      %v584 = vadd.f32 %v576, 1.0
      %v585 = vmul.f32 %v377, %v577
      %v586 = vmul.f32 %v378, %v578
      %v587 = vmul.f32 %v379, %v579
      %v588 = vmul.f32 %v380, %v580
      %v589 = vmul.f32 %v381, %v581
      %v590 = vmul.f32 %v382, %v582
      %v591 = vmul.f32 %v383, %v583
      %v592 = vmul.f32 %v384, %v584
      %v593 = vpack.c.bf16 %v586, %v585
      %v594 = vpack.c.bf16 %v588, %v587
      %v595 = vpack.c.bf16 %v590, %v589
      %v596 = vpack.c.bf16 %v592, %v591
      %v597 = vld [vmem:[%s3] sm:$0xf]
      %v598 = vld [vmem:[%s3 + $0x4] sm:$0xf]
      %v599 = vld [vmem:[%s3 + $0x8] sm:$0xf]
      %v600 = vld [vmem:[%s3 + $0xc] sm:$0xf]
      %v601 = vld [vmem:[%s3 + $0x10] sm:$0xf]
      %v602 = vld [vmem:[%s3 + $0x14] sm:$0xf]
      %v603 = vld [vmem:[%s3 + $0x18] sm:$0xf]
      %v604 = vld [vmem:[%s3 + $0x1c] sm:$0xf]
      %v605 = vld [vmem:[%s4] sm:$0x1]
      %v607 = vlaneseq
      %v608 = vshrl.u32 %v607, 7
      %v609 = vsub.s32 0, %v608
      %v610 = vrot.slane %v605, %v609
      %v620 = vunpack.c.l.b16 %v597
      %v621 = vunpack.c.l.b16 %v598
      %v622 = vunpack.c.l.b16 %v599
      %v623 = vunpack.c.l.b16 %v600
      %v624 = vunpack.c.l.b16 %v601
      %v625 = vunpack.c.l.b16 %v602
      %v626 = vunpack.c.l.b16 %v603
      %v627 = vunpack.c.l.b16 %v604
      %v628 = vpack.c.b16 %v621, %v620
      %v629 = vpack.c.b16 %v623, %v622
      %v630 = vpack.c.b16 %v625, %v624
      %v631 = vpack.c.b16 %v627, %v626
      %vm636 = vcmask 523264
      %v638 = vsel %vm636, %v593, 0
      %v641 = vsel %vm636, %v594, 0
      %v644 = vsel %vm636, %v595, 0
      %v647 = vsel %vm636, %v596, 0
      %649 = vmatprep.subr.bf16.mxu0 0
      %650 = vmatpush1.bf16.msra.mxu0 %v628
      %651 = vmatprep.subr.bf16.mxu0 0
      %652 = vmatpush1.bf16.msra.mxu0 %v629
      %653 = vmatprep.subr.bf16.mxu0 0
      %654 = vmatpush1.bf16.msra.mxu0 %v630
      %655 = vmatprep.subr.bf16.mxu0 0
      %656 = vmatpush1.bf16.msra.mxu0 %v631
      %657 = vmatprep.subr.bf16.mxu0 0
      %658 = vmatpush1.bf16.msra.mxu0 0
      %659 = vmatprep.subr.bf16.mxu0 0
      %660 = vmatpush1.bf16.msra.mxu0 0
      %661 = vmatprep.subr.bf16.mxu0 0
      %662 = vmatpush1.bf16.msra.mxu0 0
      %663 = vmatprep.subr.bf16.mxu0 0
      %664 = vmatpush1.bf16.msra.mxu0 0
      %665 = vmatprep.subr.bf16.mxu0 0
      %666 = vmatpush1.bf16.msra.mxu0 0
      %667 = vmatprep.subr.bf16.mxu0 0
      %668 = vmatpush1.bf16.msra.mxu0 0
      %669 = vmatprep.subr.bf16.mxu0 0
      %670 = vmatpush1.bf16.msra.mxu0 0
      %671 = vmatprep.subr.bf16.mxu0 0
      %672 = vmatpush1.bf16.msra.mxu0 0
      %673 = vmatprep.subr.bf16.mxu0 0
      %674 = vmatpush1.bf16.msra.mxu0 0
      %675 = vmatprep.subr.bf16.mxu0 0
      %676 = vmatpush1.bf16.msra.mxu0 0
      %677 = vmatprep.subr.bf16.mxu0 0
      %678 = vmatpush1.bf16.msra.mxu0 0
      %679 = vmatprep.subr.bf16.mxu0 0
      %680 = vmatpush1.bf16.msra.mxu0 0
      %681 = vmatprep.mubr.bf16.mxu0 0
      %682 = vmatmul.mubr.bf16.gmra.mrb[0].mxu0 %v638
      %v683 = vpop.f32.mrb[0].mxu0
      %v684 = vadd.f32 %v610, %v683
      %v685 = vpop.f32.mrb[0].mxu0
      %v686 = vpop.f32.mrb[0].mxu0
      %v687 = vadd.f32 %v610, %v686
      %v688 = vpop.f32.mrb[0].mxu0
      %689 = vmatprep.mubr.bf16.mxu0 0
      %690 = vmatmul.mubr.bf16.gmra.mrb[0].mxu0 %v641
      %v691 = vpop.f32.mrb[0].mxu0
      %v692 = vadd.f32 %v610, %v691
      %v693 = vpop.f32.mrb[0].mxu0
      %v694 = vpop.f32.mrb[0].mxu0
      %v695 = vadd.f32 %v610, %v694
      %v696 = vpop.f32.mrb[0].mxu0
      %697 = vmatprep.mubr.bf16.mxu0 0
      %698 = vmatmul.mubr.bf16.gmra.mrb[0].mxu0 %v644
      %v699 = vpop.f32.mrb[0].mxu0
      %v700 = vadd.f32 %v610, %v699
      %v701 = vpop.f32.mrb[0].mxu0
      %v702 = vpop.f32.mrb[0].mxu0
      %v703 = vadd.f32 %v610, %v702
      %v704 = vpop.f32.mrb[0].mxu0
      %705 = vmatprep.mubr.bf16.mxu0 0
      %706 = vmatmul.mubr.bf16.gmra.mrb[0].mxu0 %v647
      %v707 = vpop.f32.mrb[0].mxu0
      %v708 = vadd.f32 %v610, %v707
      %v709 = vpop.f32.mrb[0].mxu0
      %v710 = vpop.f32.mrb[0].mxu0
      %v711 = vadd.f32 %v610, %v710
      %v712 = vpop.f32.mrb[0].mxu0
      %713 = vdwg.mxu0
      %vm714 = vcmask 130048
      %715 = vst.msk [vmem:[%s226] sm:$0xff] %vm714, %v684
      %716 = vst.msk [vmem:[%s226 + $0x8] sm:$0xff] %vm714, %v687
      %717 = vst.msk [vmem:[%s226 + $0x10] sm:$0xff] %vm714, %v692
      %718 = vst.msk [vmem:[%s226 + $0x18] sm:$0xff] %vm714, %v695
      %719 = vst.msk [vmem:[%s226 + $0x20] sm:$0xff] %vm714, %v700
      %720 = vst.msk [vmem:[%s226 + $0x28] sm:$0xff] %vm714, %v703
      %721 = vst.msk [vmem:[%s226 + $0x30] sm:$0xff] %vm714, %v708
      %722 = vst.msk [vmem:[%s226 + $0x38] sm:$0xff] %vm714, %v711
      %s723 = smul.u32 8, %s16
      %p724 = scmp.lt.s32.totalorder %s723, 15
      %s725 = scalar_select %p724, %s723, 15
      %s726 = smul.addr %s725, 8
      %s727 = scalar_lea.vmem %s5, %s726
      // Predicated region
      $region41: #{wavemix_forward.9} parent=39 // pred_check
        %p728 = pneg %p144
      $region42: #{wavemix_forward.9} parent=39 // pred_check_branch
        %730 = sbr.rel (%p728) target = $region44
      $region43: #{wavemix_forward.9} parent=39 // pred_region
        %s731 = smul.u32 8, %s16
      $region44: #{wavemix_forward.9} parent=39 // pred_fallthru
        _
    $region40: #{wavemix_forward.9} parent=5 // pred_fallthru
      _
    %p732 = scmp.le.s32.totalorder 2, %s11
    // Predicated region
    $region45: #{wavemix_forward.9} parent=5 // pred_check
      %p733 = pneg %p732
    $region46: #{wavemix_forward.9} parent=5 // pred_check_branch
      %735 = sbr.rel (%p733) target = $region48
    $region47: #{wavemix_forward.9} parent=5 // pred_region
      %s736 = ssub.s32 %s11, 2
      // Predicated region
      $region49: #{wavemix_forward.9} parent=47 // pred_check
        %p737 = pneg %p150
      $region50: #{wavemix_forward.9} parent=47 // pred_check_branch
        %739 = sbr.rel (%p737) target = $region52
      $region51: #{wavemix_forward.9} parent=47 // pred_region
        %s740 = smul.u32 8, %s17
        %p741 = scmp.lt.s32.totalorder %s740, 15
        %s742 = scalar_select %p741, %s740, 15
        %s743 = smul.addr %s742, 8
        %s744 = scalar_lea.vmem %s5, %s743
      $region52: #{wavemix_forward.9} parent=47 // pred_fallthru
        _
    $region48: #{wavemix_forward.9} parent=5 // pred_fallthru
      _
  $region6: #{wavemix_forward.9} parent=0 // loop_footer
    %s15 = sadd.s32 1, %s11
  $region7: #{wavemix_forward.9} parent=0 // loop_footer_branch
    %10 = sbr.rel target = $region3
  $region8: #{wavemix_forward.9} parent=0 // loop_exit
    _

// kernel: wavemix_forward.10
$region0: #{wavemix_forward.10}
  #allocation0 [shape = 'u32[]', space=smem, size = 0x4, offset = 0x4, fixed_abs, tag = 'smem constant byte address 0x4 - core index']
  #allocation1 [shape = 'u32[144,128]{1,0:T(1,128)}', space=vmem, size = 0x12000, scoped, tag = 'internal scratch']
  %s0 = inlined_call_operand.vmem [shape: f32[128,256], index: 0, kind: input, shape index: {}]
  %s1 = inlined_call_operand.vmem [shape: bf16[256,128], index: 1, kind: input, shape index: {}]
  %s2 = inlined_call_operand.vmem [shape: f32[1,128], index: 2, kind: input, shape index: {}]
  %s3 = inlined_call_operand.vmem [shape: f32[128,128], index: 3, kind: input, shape index: {}]
  %s4 = inlined_call_operand.vmem [shape: f32[128,128], index: 4, kind: output, shape index: {}]
  %s5 = sld [smem:[#allocation0]]
  $region49: #{wavemix_forward.10} parent=0
    _
  %s7 = ssub.s32 1, %s5
  %s8 = scalar_select 0, %s7, %s5
  loop: start=0, step=1, limit=4
  $region2: #{wavemix_forward.10} parent=0 // loop_pre_header
    _
  $region3: #{wavemix_forward.10} parent=0 // loop_header
    %s10 = sphi 0, %s14
    %p11 = scmp.ge.s32.totalorder %s10, 4
    %s20 = sphi 0, %s22
    %s23 = sphi 0, %s20
    %s24 = sphi 0, %s23
    %s40 = sphi 0, %s24
    %s44 = sphi 0, %s44
    %s46 = sphi 0, %s44
    %s47 = sphi 0, %s46
    %s61 = sphi 0, %s47
    %s65 = sphi 0, %s65
    %s67 = sphi 0, %s65
    %s68 = sphi 0, %s67
    %s82 = sphi 0, %s68
    %s88 = sphi 0, %s90
    %s91 = sphi 0, %s88
    %s92 = sphi 0, %s91
    %s108 = sphi 0, %s92
    %s114 = sphi 0, %s116
    %s117 = sphi 0, %s114
    %s118 = sphi 0, %s117
    %s134 = sphi 0, %s118
  $region4: #{wavemix_forward.10} parent=0 // loop_header_branch
    %13 = sbr.rel (%p11) target = $region8
  $region5: #{wavemix_forward.10} parent=0 // loop_body
    %s15 = ssub.s32 %s10, 1
    %s16 = ssub.s32 %s10, 2
    %s17 = sadd.s32 %s10, 1
    %s18 = ssub.s32 %s10, %s17
    %p19 = scmp.eq.s32.totalorder %s18, 0
    %s21 = sadd.s32 %s20, 1
    %s22 = scalar_select %p19, %s20, %s21
    %p25 = pneg %p19
    %p26 = scmp.eq.s32.totalorder %s10, 1
    %p27 = por %p25, %p26
    %p28 = scmp.ne.s32.totalorder %s20, %s23
    %p29 = scmp.eq.s32.totalorder %s10, 0
    %p30 = por %p28, %p29
    %p31 = scmp.ne.s32.totalorder %s20, %s23
    %p32 = scmp.eq.s32.totalorder %s15, 1
    %p33 = por %p31, %p32
    %p34 = scmp.ne.s32.totalorder %s23, %s24
    %p35 = scmp.eq.s32.totalorder %s15, 0
    %p36 = por %p34, %p35
    %p37 = scmp.ne.s32.totalorder %s23, %s24
    %p38 = scmp.eq.s32.totalorder %s16, 1
    %p39 = por %p37, %p38
    %p41 = scmp.ne.s32.totalorder %s24, %s40
    %p42 = scmp.eq.s32.totalorder %s16, 0
    %p43 = por %p41, %p42
    %s45 = sadd.s32 %s44, 1
    %p48 = scmp.eq.s32.totalorder %s10, 1
    %p49 = scmp.ne.s32.totalorder %s44, %s46
    %p50 = scmp.eq.s32.totalorder %s10, 0
    %p51 = por %p49, %p50
    %p52 = scmp.ne.s32.totalorder %s44, %s46
    %p53 = scmp.eq.s32.totalorder %s15, 1
    %p54 = por %p52, %p53
    %p55 = scmp.ne.s32.totalorder %s46, %s47
    %p56 = scmp.eq.s32.totalorder %s15, 0
    %p57 = por %p55, %p56
    %p58 = scmp.ne.s32.totalorder %s46, %s47
    %p59 = scmp.eq.s32.totalorder %s16, 1
    %p60 = por %p58, %p59
    %p62 = scmp.ne.s32.totalorder %s47, %s61
    %p63 = scmp.eq.s32.totalorder %s16, 0
    %p64 = por %p62, %p63
    %s66 = sadd.s32 %s65, 1
    %p69 = scmp.eq.s32.totalorder %s10, 1
    %p70 = scmp.ne.s32.totalorder %s65, %s67
    %p71 = scmp.eq.s32.totalorder %s10, 0
    %p72 = por %p70, %p71
    %p73 = scmp.ne.s32.totalorder %s65, %s67
    %p74 = scmp.eq.s32.totalorder %s15, 1
    %p75 = por %p73, %p74
    %p76 = scmp.ne.s32.totalorder %s67, %s68
    %p77 = scmp.eq.s32.totalorder %s15, 0
    %p78 = por %p76, %p77
    %p79 = scmp.ne.s32.totalorder %s67, %s68
    %p80 = scmp.eq.s32.totalorder %s16, 1
    %p81 = por %p79, %p80
    %p83 = scmp.ne.s32.totalorder %s68, %s82
    %p84 = scmp.eq.s32.totalorder %s16, 0
    %p85 = por %p83, %p84
    %s86 = ssub.s32 %s10, %s17
    %p87 = scmp.eq.s32.totalorder %s86, 0
    %s89 = sadd.s32 %s88, 1
    %s90 = scalar_select %p87, %s88, %s89
    %p93 = pneg %p87
    %p94 = scmp.eq.s32.totalorder %s10, 1
    %p95 = por %p93, %p94
    %p96 = scmp.ne.s32.totalorder %s88, %s91
    %p97 = scmp.eq.s32.totalorder %s10, 0
    %p98 = por %p96, %p97
    %p99 = scmp.ne.s32.totalorder %s88, %s91
    %p100 = scmp.eq.s32.totalorder %s15, 1
    %p101 = por %p99, %p100
    %p102 = scmp.ne.s32.totalorder %s91, %s92
    %p103 = scmp.eq.s32.totalorder %s15, 0
    %p104 = por %p102, %p103
    %p105 = scmp.ne.s32.totalorder %s91, %s92
    %p106 = scmp.eq.s32.totalorder %s16, 1
    %p107 = por %p105, %p106
    %p109 = scmp.ne.s32.totalorder %s92, %s108
    %p110 = scmp.eq.s32.totalorder %s16, 0
    %p111 = por %p109, %p110
    %s112 = ssub.s32 %s10, %s17
    %p113 = scmp.eq.s32.totalorder %s112, 0
    %s115 = sadd.s32 %s114, 1
    %s116 = scalar_select %p113, %s114, %s115
    %p119 = pneg %p113
    %p120 = scmp.eq.s32.totalorder %s10, 1
    %p121 = por %p119, %p120
    %p122 = scmp.ne.s32.totalorder %s114, %s117
    %p123 = scmp.eq.s32.totalorder %s10, 0
    %p124 = por %p122, %p123
    %p125 = scmp.ne.s32.totalorder %s114, %s117
    %p126 = scmp.eq.s32.totalorder %s15, 1
    %p127 = por %p125, %p126
    %p128 = scmp.ne.s32.totalorder %s117, %s118
    %p129 = scmp.eq.s32.totalorder %s15, 0
    %p130 = por %p128, %p129
    %p131 = scmp.ne.s32.totalorder %s117, %s118
    %p132 = scmp.eq.s32.totalorder %s16, 1
    %p133 = por %p131, %p132
    %p135 = scmp.ne.s32.totalorder %s118, %s134
    %p136 = scmp.eq.s32.totalorder %s16, 0
    %p137 = por %p135, %p136
    %p138 = scmp.le.s32.totalorder 1, %s10
    %p139 = scmp.lt.s32.totalorder %s10, 3
    %p140 = pnand %p138, %p139
    %p141 = pneg %p140
    // Predicated region
    $region9: #{wavemix_forward.10} parent=5 // pred_check
      _
    $region10: #{wavemix_forward.10} parent=5 // pred_check_branch
      %143 = sbr.rel (%p140) target = $region12
    $region11: #{wavemix_forward.10} parent=5 // pred_region
      %s144 = ssub.s32 %s10, 1
      // Predicated region
      $region13: #{wavemix_forward.10} parent=11 // pred_check
        %p145 = pneg %p57
      $region14: #{wavemix_forward.10} parent=11 // pred_check_branch
        %147 = sbr.rel (%p145) target = $region16
      $region15: #{wavemix_forward.10} parent=11 // pred_region
        _
      $region16: #{wavemix_forward.10} parent=11 // pred_fallthru
        _
      // Predicated region
      $region17: #{wavemix_forward.10} parent=11 // pred_check
        %p148 = pneg %p78
      $region18: #{wavemix_forward.10} parent=11 // pred_check_branch
        %150 = sbr.rel (%p148) target = $region20
      $region19: #{wavemix_forward.10} parent=11 // pred_region
        _
      $region20: #{wavemix_forward.10} parent=11 // pred_fallthru
        _
    $region12: #{wavemix_forward.10} parent=5 // pred_fallthru
      _
    %p151 = scmp.lt.s32.totalorder %s10, 2
    // Predicated region
    $region21: #{wavemix_forward.10} parent=5 // pred_check
      %p152 = pneg %p151
    $region22: #{wavemix_forward.10} parent=5 // pred_check_branch
      %154 = sbr.rel (%p152) target = $region24
    $region23: #{wavemix_forward.10} parent=5 // pred_region
      // Predicated region
      $region25: #{wavemix_forward.10} parent=23 // pred_check
        %p155 = pneg %p30
      $region26: #{wavemix_forward.10} parent=23 // pred_check_branch
        %157 = sbr.rel (%p155) target = $region28
      $region27: #{wavemix_forward.10} parent=23 // pred_region
        %s158 = smul.u32 8, %s10
        %p159 = scmp.lt.s32.totalorder %s158, 15
        %s160 = scalar_select %p159, %s158, 15
        %s161 = smul.addr %s160, 2
        %s162 = smul.addr %s161, 8
        %s163 = scalar_lea.vmem %s0, %s162
        %s164 = smul.u32 8, %s10
      $region28: #{wavemix_forward.10} parent=23 // pred_fallthru
        _
      // Predicated region
      $region29: #{wavemix_forward.10} parent=23 // pred_check
        %p165 = pneg %p98
      $region30: #{wavemix_forward.10} parent=23 // pred_check_branch
        %167 = sbr.rel (%p165) target = $region32
      $region31: #{wavemix_forward.10} parent=23 // pred_region
        %s168 = smul.u32 8, %s10
        %p169 = scmp.lt.s32.totalorder %s168, 15
        %s170 = scalar_select %p169, %s168, 15
        %s171 = smul.addr %s170, 8
        %s172 = scalar_lea.vmem %s3, %s171
        %s173 = smul.u32 8, %s10
      $region32: #{wavemix_forward.10} parent=23 // pred_fallthru
        _
    $region24: #{wavemix_forward.10} parent=5 // pred_fallthru
      _
    %p174 = scmp.le.s32.totalorder 1, %s10
    %p175 = scmp.lt.s32.totalorder %s10, 3
    %p176 = pnand %p174, %p175
    %p177 = pneg %p176
    // Predicated region
    $region33: #{wavemix_forward.10} parent=5 // pred_check
      _
    $region34: #{wavemix_forward.10} parent=5 // pred_check_branch
      %179 = sbr.rel (%p176) target = $region36
    $region35: #{wavemix_forward.10} parent=5 // pred_region
      %s180 = ssub.s32 %s10, 1
      %s181 = smul.u32 8, %s15
      %p182 = scmp.lt.s32.totalorder %s181, 15
      %s183 = scalar_select %p182, %s181, 15
      %s184 = smul.addr %s183, 2
      %s185 = smul.addr %s184, 8
      %s186 = scalar_lea.vmem %s0, %s185
      %p187 = pneg %p36
      %p188 = pneg %p33
      %p189 = pneg %p57
      %p190 = pneg %p54
      %p191 = pneg %p78
      %p192 = pneg %p75
      %s193 = smul.u32 8, %s15
      %p194 = scmp.lt.s32.totalorder %s193, 15
      %s195 = scalar_select %p194, %s193, 15
      %s196 = smul.addr %s195, 8
      %s197 = scalar_lea.vmem %s3, %s196
      %p198 = pneg %p104
      %p199 = pneg %p101
      %p200 = pneg %p130
      %p201 = pneg %p127
      %s202 = smul.u32 8, %s15
      %p203 = scmp.lt.s32.totalorder %s202, 15
      %s204 = scalar_select %p203, %s202, 15
      %s205 = smul.addr %s204, 8
      %s206 = scalar_lea.vmem %s4, %s205
      %s207 = smul.u32 8, %s15
      %p208 = scmp.lt.s32.totalorder %s207, 15
      %s209 = scalar_select %p208, %s207, 15
      %s210 = smul.addr %s209, 2
      %s211 = smul.addr %s210, 8
      %s212 = scalar_lea.vmem %s0, %s211
      %s213 = smul.u32 8, %s15
      %s214 = smul.u32 8, %s15
      %p215 = scmp.lt.s32.totalorder %s214, 15
      %s216 = scalar_select %p215, %s214, 15
      %s217 = smul.addr %s216, 8
      %s218 = scalar_lea.vmem %s3, %s217
      %s219 = smul.u32 8, %s15
      %s220 = smul.u32 8, %s15
      %p221 = scmp.lt.s32.totalorder %s220, 15
      %s222 = scalar_select %p221, %s220, 15
      %s223 = smul.addr %s222, 8
      %s224 = scalar_lea.vmem %s4, %s223
      %s225 = smul.u32 8, %s15
      %v227 = vld [vmem:[%s212] sm:$0xff]
      %v228 = vld [vmem:[%s212 + $0x8] sm:$0xff]
      %v229 = vld [vmem:[%s212 + $0x10] sm:$0xff]
      %v230 = vld [vmem:[%s212 + $0x18] sm:$0xff]
      %v231 = vld [vmem:[%s212 + $0x20] sm:$0xff]
      %v232 = vld [vmem:[%s212 + $0x28] sm:$0xff]
      %v233 = vld [vmem:[%s212 + $0x30] sm:$0xff]
      %v234 = vld [vmem:[%s212 + $0x38] sm:$0xff]
      %v235 = vld [vmem:[%s212 + $0x40] sm:$0xff]
      %v236 = vld [vmem:[%s212 + $0x48] sm:$0xff]
      %v237 = vld [vmem:[%s212 + $0x50] sm:$0xff]
      %v238 = vld [vmem:[%s212 + $0x58] sm:$0xff]
      %v239 = vld [vmem:[%s212 + $0x60] sm:$0xff]
      %v240 = vld [vmem:[%s212 + $0x68] sm:$0xff]
      %v241 = vld [vmem:[%s212 + $0x70] sm:$0xff]
      %v242 = vld [vmem:[%s212 + $0x78] sm:$0xff]
      %v243 = vpack.c.bf16 %v229, %v227
      %v244 = vpack.c.bf16 %v230, %v228
      %v245 = vpack.c.bf16 %v233, %v231
      %v246 = vpack.c.bf16 %v234, %v232
      %v247 = vpack.c.bf16 %v237, %v235
      %v248 = vpack.c.bf16 %v238, %v236
      %v249 = vpack.c.bf16 %v241, %v239
      %v250 = vpack.c.bf16 %v242, %v240
      %v251 = vld [vmem:[%s1] sm:$0xf]
      %v252 = vld [vmem:[%s1 + $0x4] sm:$0xf]
      %v253 = vld [vmem:[%s1 + $0x8] sm:$0xf]
      %v254 = vld [vmem:[%s1 + $0xc] sm:$0xf]
      %v255 = vld [vmem:[%s1 + $0x10] sm:$0xf]
      %v256 = vld [vmem:[%s1 + $0x14] sm:$0xf]
      %v257 = vld [vmem:[%s1 + $0x18] sm:$0xf]
      %v258 = vld [vmem:[%s1 + $0x1c] sm:$0xf]
      %v259 = vld [vmem:[%s1 + $0x20] sm:$0xf]
      %v260 = vld [vmem:[%s1 + $0x24] sm:$0xf]
      %v261 = vld [vmem:[%s1 + $0x28] sm:$0xf]
      %v262 = vld [vmem:[%s1 + $0x2c] sm:$0xf]
      %v263 = vld [vmem:[%s1 + $0x30] sm:$0xf]
      %v264 = vld [vmem:[%s1 + $0x34] sm:$0xf]
      %v265 = vld [vmem:[%s1 + $0x38] sm:$0xf]
      %v266 = vld [vmem:[%s1 + $0x3c] sm:$0xf]
      %v267 = vld [vmem:[%s1 + $0x40] sm:$0xf]
      %v268 = vld [vmem:[%s1 + $0x44] sm:$0xf]
      %v269 = vld [vmem:[%s1 + $0x48] sm:$0xf]
      %v270 = vld [vmem:[%s1 + $0x4c] sm:$0xf]
      %v271 = vld [vmem:[%s1 + $0x50] sm:$0xf]
      %v272 = vld [vmem:[%s1 + $0x54] sm:$0xf]
      %v273 = vld [vmem:[%s1 + $0x58] sm:$0xf]
      %v274 = vld [vmem:[%s1 + $0x5c] sm:$0xf]
      %v275 = vld [vmem:[%s1 + $0x60] sm:$0xf]
      %v276 = vld [vmem:[%s1 + $0x64] sm:$0xf]
      %v277 = vld [vmem:[%s1 + $0x68] sm:$0xf]
      %v278 = vld [vmem:[%s1 + $0x6c] sm:$0xf]
      %v279 = vld [vmem:[%s1 + $0x70] sm:$0xf]
      %v280 = vld [vmem:[%s1 + $0x74] sm:$0xf]
      %v281 = vld [vmem:[%s1 + $0x78] sm:$0xf]
      %v282 = vld [vmem:[%s1 + $0x7c] sm:$0xf]
      %v283 = vld [vmem:[%s2] sm:$0x1]
      %v285 = vlaneseq
      %v286 = vshrl.u32 %v285, 7
      %v287 = vsub.s32 0, %v286
      %v288 = vrot.slane %v283, %v287
      %v322 = vunpack.c.l.b16 %v251
      %v323 = vunpack.c.l.b16 %v252
      %v324 = vunpack.c.l.b16 %v253
      %v325 = vunpack.c.l.b16 %v254
      %v326 = vunpack.c.l.b16 %v255
      %v327 = vunpack.c.l.b16 %v256
      %v328 = vunpack.c.l.b16 %v257
      %v329 = vunpack.c.l.b16 %v258
      %v330 = vunpack.c.l.b16 %v259
      %v331 = vunpack.c.l.b16 %v260
      %v332 = vunpack.c.l.b16 %v261
      %v333 = vunpack.c.l.b16 %v262
      %v334 = vunpack.c.l.b16 %v263
      %v335 = vunpack.c.l.b16 %v264
      %v336 = vunpack.c.l.b16 %v265
      %v337 = vunpack.c.l.b16 %v266
      %v338 = vunpack.c.l.b16 %v267
      %v339 = vunpack.c.l.b16 %v268
      %v340 = vunpack.c.l.b16 %v269
      %v341 = vunpack.c.l.b16 %v270
      %v342 = vunpack.c.l.b16 %v271
      %v343 = vunpack.c.l.b16 %v272
      %v344 = vunpack.c.l.b16 %v273
      %v345 = vunpack.c.l.b16 %v274
      %v346 = vunpack.c.l.b16 %v275
      %v347 = vunpack.c.l.b16 %v276
      %v348 = vunpack.c.l.b16 %v277
      %v349 = vunpack.c.l.b16 %v278
      %v350 = vunpack.c.l.b16 %v279
      %v351 = vunpack.c.l.b16 %v280
      %v352 = vunpack.c.l.b16 %v281
      %v353 = vunpack.c.l.b16 %v282
      %v354 = vpack.c.b16 %v323, %v322
      %v355 = vpack.c.b16 %v325, %v324
      %v356 = vpack.c.b16 %v327, %v326
      %v357 = vpack.c.b16 %v329, %v328
      %v358 = vpack.c.b16 %v331, %v330
      %v359 = vpack.c.b16 %v333, %v332
      %v360 = vpack.c.b16 %v335, %v334
      %v361 = vpack.c.b16 %v337, %v336
      %v362 = vpack.c.b16 %v339, %v338
      %v363 = vpack.c.b16 %v341, %v340
      %v364 = vpack.c.b16 %v343, %v342
      %v365 = vpack.c.b16 %v345, %v344
      %v366 = vpack.c.b16 %v347, %v346
      %v367 = vpack.c.b16 %v349, %v348
      %v368 = vpack.c.b16 %v351, %v350
      %v369 = vpack.c.b16 %v353, %v352
      %386 = vmatprep.subr.bf16.mxu0 0
      %387 = vmatpush1.bf16.msra.mxu0 %v354
      %388 = vmatprep.subr.bf16.mxu0 0
      %389 = vmatpush1.bf16.msra.mxu0 %v355
      %390 = vmatprep.subr.bf16.mxu0 0
      %391 = vmatpush1.bf16.msra.mxu0 %v356
      %392 = vmatprep.subr.bf16.mxu0 0
      %393 = vmatpush1.bf16.msra.mxu0 %v357
      %394 = vmatprep.subr.bf16.mxu0 0
      %395 = vmatpush1.bf16.msra.mxu0 %v358
      %396 = vmatprep.subr.bf16.mxu0 0
      %397 = vmatpush1.bf16.msra.mxu0 %v359
      %398 = vmatprep.subr.bf16.mxu0 0
      %399 = vmatpush1.bf16.msra.mxu0 %v360
      %400 = vmatprep.subr.bf16.mxu0 0
      %401 = vmatpush1.bf16.msra.mxu0 %v361
      %402 = vmatprep.subr.bf16.mxu0 0
      %403 = vmatpush1.bf16.msra.mxu0 %v362
      %404 = vmatprep.subr.bf16.mxu0 0
      %405 = vmatpush1.bf16.msra.mxu0 %v363
      %406 = vmatprep.subr.bf16.mxu0 0
      %407 = vmatpush1.bf16.msra.mxu0 %v364
      %408 = vmatprep.subr.bf16.mxu0 0
      %409 = vmatpush1.bf16.msra.mxu0 %v365
      %410 = vmatprep.subr.bf16.mxu0 0
      %411 = vmatpush1.bf16.msra.mxu0 %v366
      %412 = vmatprep.subr.bf16.mxu0 0
      %413 = vmatpush1.bf16.msra.mxu0 %v367
      %414 = vmatprep.subr.bf16.mxu0 0
      %415 = vmatpush1.bf16.msra.mxu0 %v368
      %416 = vmatprep.subr.bf16.mxu0 0
      %417 = vmatpush1.bf16.msra.mxu0 %v369
      %418 = vmatprep.mubr.bf16.mxu0 %v244
      %419 = vmatmul.mubr.bf16.gmra.mrb[0].mxu0 %v243
      %v420 = vpop.f32.mrb[0].mxu0
      %v421 = vadd.f32 %v288, %v420
      %v422 = vpop.f32.mrb[0].mxu0
      %v423 = vpop.f32.mrb[0].mxu0
      %v424 = vadd.f32 %v288, %v423
      %v425 = vpop.f32.mrb[0].mxu0
      %426 = vmatprep.mubr.bf16.mxu0 %v246
      %427 = vmatmul.mubr.bf16.gmra.mrb[0].mxu0 %v245
      %v428 = vpop.f32.mrb[0].mxu0
      %v429 = vadd.f32 %v288, %v428
      %v430 = vpop.f32.mrb[0].mxu0
      %v431 = vpop.f32.mrb[0].mxu0
      %v432 = vadd.f32 %v288, %v431
      %v433 = vpop.f32.mrb[0].mxu0
      %434 = vmatprep.mubr.bf16.mxu0 %v248
      %435 = vmatmul.mubr.bf16.gmra.mrb[0].mxu0 %v247
      %v436 = vpop.f32.mrb[0].mxu0
      %v437 = vadd.f32 %v288, %v436
      %v438 = vpop.f32.mrb[0].mxu0
      %v439 = vpop.f32.mrb[0].mxu0
      %v440 = vadd.f32 %v288, %v439
      %v441 = vpop.f32.mrb[0].mxu0
      %442 = vmatprep.mubr.bf16.mxu0 %v250
      %443 = vmatmul.mubr.bf16.gmra.mrb[0].mxu0 %v249
      %v444 = vpop.f32.mrb[0].mxu0
      %v445 = vadd.f32 %v288, %v444
      %v446 = vpop.f32.mrb[0].mxu0
      %v447 = vpop.f32.mrb[0].mxu0
      %v448 = vadd.f32 %v288, %v447
      %v449 = vpop.f32.mrb[0].mxu0
      %450 = vdwg.mxu0
      %v451 = vld [vmem:[%s218] sm:$0xff]
      %v452 = vld [vmem:[%s218 + $0x8] sm:$0xff]
      %v453 = vld [vmem:[%s218 + $0x10] sm:$0xff]
      %v454 = vld [vmem:[%s218 + $0x18] sm:$0xff]
      %v455 = vld [vmem:[%s218 + $0x20] sm:$0xff]
      %v456 = vld [vmem:[%s218 + $0x28] sm:$0xff]
      %v457 = vld [vmem:[%s218 + $0x30] sm:$0xff]
      %v458 = vld [vmem:[%s218 + $0x38] sm:$0xff]
      %v459 = vadd.f32 %v421, %v451
      %v460 = vadd.f32 %v424, %v452
      %v461 = vadd.f32 %v429, %v453
      %v462 = vadd.f32 %v432, %v454
      %v463 = vadd.f32 %v437, %v455
      %v464 = vadd.f32 %v440, %v456
      %v465 = vadd.f32 %v445, %v457
      %v466 = vadd.f32 %v448, %v458
      %467 = vst [vmem:[%s224] sm:$0xff] %v459
      %468 = vst [vmem:[%s224 + $0x8] sm:$0xff] %v460
      %469 = vst [vmem:[%s224 + $0x10] sm:$0xff] %v461
      %470 = vst [vmem:[%s224 + $0x18] sm:$0xff] %v462
      %471 = vst [vmem:[%s224 + $0x20] sm:$0xff] %v463
      %472 = vst [vmem:[%s224 + $0x28] sm:$0xff] %v464
      %473 = vst [vmem:[%s224 + $0x30] sm:$0xff] %v465
      %474 = vst [vmem:[%s224 + $0x38] sm:$0xff] %v466
      %s475 = smul.u32 8, %s15
      %p476 = scmp.lt.s32.totalorder %s475, 15
      %s477 = scalar_select %p476, %s475, 15
      %s478 = smul.addr %s477, 8
      %s479 = scalar_lea.vmem %s4, %s478
      // Predicated region
      $region37: #{wavemix_forward.10} parent=35 // pred_check
        %p480 = pneg %p127
      $region38: #{wavemix_forward.10} parent=35 // pred_check_branch
        %482 = sbr.rel (%p480) target = $region40
      $region39: #{wavemix_forward.10} parent=35 // pred_region
        %s483 = smul.u32 8, %s15
      $region40: #{wavemix_forward.10} parent=35 // pred_fallthru
        _
    $region36: #{wavemix_forward.10} parent=5 // pred_fallthru
      _
    %p484 = scmp.le.s32.totalorder 2, %s10
    // Predicated region
    $region41: #{wavemix_forward.10} parent=5 // pred_check
      %p485 = pneg %p484
    $region42: #{wavemix_forward.10} parent=5 // pred_check_branch
      %487 = sbr.rel (%p485) target = $region44
    $region43: #{wavemix_forward.10} parent=5 // pred_region
      %s488 = ssub.s32 %s10, 2
      // Predicated region
      $region45: #{wavemix_forward.10} parent=43 // pred_check
        %p489 = pneg %p133
      $region46: #{wavemix_forward.10} parent=43 // pred_check_branch
        %491 = sbr.rel (%p489) target = $region48
      $region47: #{wavemix_forward.10} parent=43 // pred_region
        %s492 = smul.u32 8, %s16
        %p493 = scmp.lt.s32.totalorder %s492, 15
        %s494 = scalar_select %p493, %s492, 15
        %s495 = smul.addr %s494, 8
        %s496 = scalar_lea.vmem %s4, %s495
      $region48: #{wavemix_forward.10} parent=43 // pred_fallthru
        _
    $region44: #{wavemix_forward.10} parent=5 // pred_fallthru
      _
  $region6: #{wavemix_forward.10} parent=0 // loop_footer
    %s14 = sadd.s32 1, %s10
  $region7: #{wavemix_forward.10} parent=0 // loop_footer_branch
    %9 = sbr.rel target = $region3
  $region8: #{wavemix_forward.10} parent=0 // loop_exit
    _

// kernel: wavemix_forward.13
$region0: #{wavemix_forward.13}
  #allocation0 [shape = 'u32[]', space=smem, size = 0x4, offset = 0x4, fixed_abs, tag = 'smem constant byte address 0x4 - core index']
  #allocation1 [shape = 'u32[144,128]{1,0:T(1,128)}', space=vmem, size = 0x12000, scoped, tag = 'internal scratch']
  #allocation2 [shape = 'f32[2,128]{1,0:T(2,128)}', space=vmem, size = 0x400, scoped, tag = 'scratch operand']
  %s0 = inlined_call_operand.vmem [shape: f32[2,64,128], index: 0, kind: input, shape index: {}]
  %s1 = inlined_call_operand.vmem [shape: bf16[128,128], index: 1, kind: input, shape index: {}]
  %s2 = inlined_call_operand.vmem [shape: f32[1,128], index: 2, kind: input, shape index: {}]
  %s3 = inlined_call_operand.hbm [shape: f32[2,128], index: 3, kind: output, shape index: {}]
  %s4 = sld [smem:[#allocation0]]
  $region91: #{wavemix_forward.13} parent=0
    _
  %s6 = ssub.s32 1, %s4
  %s7 = scalar_select 0, %s6, %s4
  $region1: #{wavemix_forward.13} parent=0
    #allocation3 [shape = 'u8[65536]{0}', space=vmem, size = 0x10000, scoped, tag = 'input window, operand 0']
    #allocation4 [shape = 'u8[1024]{0}', space=vmem, size = 0x400, scoped, tag = 'output window, operand 0, single buffered']
    #allocation5 [shape = 's32[2]{0}', space=sflag, size = 0x8, scoped, tag = 'scoped memory for wavemix_forward.13']
    %8 = vsyncpa [#allocation5], 0
    loop: start=0, step=1, limit=4
    $region2: #{wavemix_forward.13} parent=1 // loop_pre_header
      _
    $region3: #{wavemix_forward.13} parent=1 // loop_header
      %s10 = sphi 0, %s14
      %p11 = scmp.ge.s32.totalorder %s10, 4
      %s20 = sphi 0, %s22
      %s23 = sphi 0, %s20
      %s24 = sphi 0, %s23
      %s40 = sphi 0, %s24
      %s44 = sphi 0, %s44
      %s46 = sphi 0, %s44
      %s47 = sphi 0, %s46
      %s61 = sphi 0, %s47
      %s65 = sphi 0, %s65
      %s67 = sphi 0, %s65
      %s68 = sphi 0, %s67
      %s82 = sphi 0, %s68
      %s86 = sphi 0, %s86
      %s88 = sphi 0, %s86
      %s89 = sphi 0, %s88
      %s103 = sphi 0, %s89
    $region4: #{wavemix_forward.13} parent=1 // loop_header_branch
      %13 = sbr.rel (%p11) target = $region8
    $region5: #{wavemix_forward.13} parent=1 // loop_body
      %s15 = ssub.s32 %s10, 1
      %s16 = ssub.s32 %s10, 2
      %s17 = sadd.s32 %s10, 1
      %s18 = ssub.s32 %s10, %s17
      %p19 = scmp.eq.s32.totalorder %s18, 0
      %s21 = sadd.s32 %s20, 1
      %s22 = scalar_select %p19, %s20, %s21
      %p25 = pneg %p19
      %p26 = scmp.eq.s32.totalorder %s10, 1
      %p27 = por %p25, %p26
      %p28 = scmp.ne.s32.totalorder %s20, %s23
      %p29 = scmp.eq.s32.totalorder %s10, 0
      %p30 = por %p28, %p29
      %p31 = scmp.ne.s32.totalorder %s20, %s23
      %p32 = scmp.eq.s32.totalorder %s15, 1
      %p33 = por %p31, %p32
      %p34 = scmp.ne.s32.totalorder %s23, %s24
      %p35 = scmp.eq.s32.totalorder %s15, 0
      %p36 = por %p34, %p35
      %p37 = scmp.ne.s32.totalorder %s23, %s24
      %p38 = scmp.eq.s32.totalorder %s16, 1
      %p39 = por %p37, %p38
      %p41 = scmp.ne.s32.totalorder %s24, %s40
      %p42 = scmp.eq.s32.totalorder %s16, 0
      %p43 = por %p41, %p42
      %s45 = sadd.s32 %s44, 1
      %p48 = scmp.eq.s32.totalorder %s10, 1
      %p49 = scmp.ne.s32.totalorder %s44, %s46
      %p50 = scmp.eq.s32.totalorder %s10, 0
      %p51 = por %p49, %p50
      %p52 = scmp.ne.s32.totalorder %s44, %s46
      %p53 = scmp.eq.s32.totalorder %s15, 1
      %p54 = por %p52, %p53
      %p55 = scmp.ne.s32.totalorder %s46, %s47
      %p56 = scmp.eq.s32.totalorder %s15, 0
      %p57 = por %p55, %p56
      %p58 = scmp.ne.s32.totalorder %s46, %s47
      %p59 = scmp.eq.s32.totalorder %s16, 1
      %p60 = por %p58, %p59
      %p62 = scmp.ne.s32.totalorder %s47, %s61
      %p63 = scmp.eq.s32.totalorder %s16, 0
      %p64 = por %p62, %p63
      %s66 = sadd.s32 %s65, 1
      %p69 = scmp.eq.s32.totalorder %s10, 1
      %p70 = scmp.ne.s32.totalorder %s65, %s67
      %p71 = scmp.eq.s32.totalorder %s10, 0
      %p72 = por %p70, %p71
      %p73 = scmp.ne.s32.totalorder %s65, %s67
      %p74 = scmp.eq.s32.totalorder %s15, 1
      %p75 = por %p73, %p74
      %p76 = scmp.ne.s32.totalorder %s67, %s68
      %p77 = scmp.eq.s32.totalorder %s15, 0
      %p78 = por %p76, %p77
      %p79 = scmp.ne.s32.totalorder %s67, %s68
      %p80 = scmp.eq.s32.totalorder %s16, 1
      %p81 = por %p79, %p80
      %p83 = scmp.ne.s32.totalorder %s68, %s82
      %p84 = scmp.eq.s32.totalorder %s16, 0
      %p85 = por %p83, %p84
      %s87 = sadd.s32 %s86, 1
      %p90 = scmp.eq.s32.totalorder %s10, 1
      %p91 = scmp.ne.s32.totalorder %s86, %s88
      %p92 = scmp.eq.s32.totalorder %s10, 0
      %p93 = por %p91, %p92
      %p94 = scmp.ne.s32.totalorder %s86, %s88
      %p95 = scmp.eq.s32.totalorder %s15, 1
      %p96 = por %p94, %p95
      %p97 = scmp.ne.s32.totalorder %s88, %s89
      %p98 = scmp.eq.s32.totalorder %s15, 0
      %p99 = por %p97, %p98
      %p100 = scmp.ne.s32.totalorder %s88, %s89
      %p101 = scmp.eq.s32.totalorder %s16, 1
      %p102 = por %p100, %p101
      %p104 = scmp.ne.s32.totalorder %s89, %s103
      %p105 = scmp.eq.s32.totalorder %s16, 0
      %p106 = por %p104, %p105
      %p107 = scmp.le.s32.totalorder 1, %s10
      %p108 = scmp.lt.s32.totalorder %s10, 3
      %p109 = pnand %p107, %p108
      %p110 = pneg %p109
      // Predicated region
      $region9: #{wavemix_forward.13} parent=5 // pred_check
        _
      $region10: #{wavemix_forward.13} parent=5 // pred_check_branch
        %112 = sbr.rel (%p109) target = $region12
      $region11: #{wavemix_forward.13} parent=5 // pred_region
        %s113 = ssub.s32 %s10, 1
        // Predicated region
        $region13: #{wavemix_forward.13} parent=11 // pred_check
          %p114 = pneg %p57
        $region14: #{wavemix_forward.13} parent=11 // pred_check_branch
          %116 = sbr.rel (%p114) target = $region16
        $region15: #{wavemix_forward.13} parent=11 // pred_region
          _
        $region16: #{wavemix_forward.13} parent=11 // pred_fallthru
          _
        // Predicated region
        $region17: #{wavemix_forward.13} parent=11 // pred_check
          %p117 = pneg %p78
        $region18: #{wavemix_forward.13} parent=11 // pred_check_branch
          %119 = sbr.rel (%p117) target = $region20
        $region19: #{wavemix_forward.13} parent=11 // pred_region
          _
        $region20: #{wavemix_forward.13} parent=11 // pred_fallthru
          _
      $region12: #{wavemix_forward.13} parent=5 // pred_fallthru
        _
      %p120 = scmp.lt.s32.totalorder %s10, 2
      // Predicated region
      $region21: #{wavemix_forward.13} parent=5 // pred_check
        %p121 = pneg %p120
      $region22: #{wavemix_forward.13} parent=5 // pred_check_branch
        %123 = sbr.rel (%p121) target = $region24
      $region23: #{wavemix_forward.13} parent=5 // pred_region
        // Predicated region
        $region25: #{wavemix_forward.13} parent=23 // pred_check
          %p124 = pneg %p30
        $region26: #{wavemix_forward.13} parent=23 // pred_check_branch
          %126 = sbr.rel (%p124) target = $region28
        $region27: #{wavemix_forward.13} parent=23 // pred_region
          %s127 = sand.u32 %s20, 1
          %s128 = sand.u32 %s20, 1
          %s129 = smul.addr %s128, 64
          %s130 = scalar_lea.vmem [#allocation3], %s129
          %s131 = smul.u32 4, %s10
          %s132 = smul.addr %s131, 8
          %s133 = scalar_lea.vmem %s0, %s132
          // Predicated region
          $region29: #{wavemix_forward.13} parent=27 // pred_check
            _
          $region30: #{wavemix_forward.13} parent=27 // pred_check_branch
            %135 = sbr.rel (0) target = $region32
          $region31: #{wavemix_forward.13} parent=27 // pred_region
            // Predicated region
            $region33: #{wavemix_forward.13} parent=31 // pred_check
              _
            $region34: #{wavemix_forward.13} parent=31 // pred_check_branch
              %137 = sbr.rel (0) target = $region36
            $region35: #{wavemix_forward.13} parent=31 // pred_region
              // Predicated region
              $region48: #{wavemix_forward.13} parent=35 // pred_check
                _
              $region49: #{wavemix_forward.13} parent=35 // pred_check_branch
                %166 = sbr.rel (0) target = $region51
              $region50: #{wavemix_forward.13} parent=35 // pred_region
                loop: start=0, step=1, limit=1
                $region52: #{wavemix_forward.13} parent=50 // loop_pre_header
                  _
                $region53: #{wavemix_forward.13} parent=50 // loop_header
                  %s168 = sphi 0, %s172
                  %p169 = scmp.ge.s32.totalorder %s168, 1
                  %s173 = sphi %s133, %s133
                  %s174 = sphi %s130, %s130
                $region54: #{wavemix_forward.13} parent=50 // loop_header_branch
                  %171 = sbr.rel (%p169) target = $region58
                $region55: #{wavemix_forward.13} parent=50 // loop_body
                  %v175 = vld [vmem:[%s173] sm:$0xff]
                  %176 = vst [vmem:[%s174] sm:$0xff] %v175
                  %v177 = vld [vmem:[%s173 + $0x8] sm:$0xff]
                  %178 = vst [vmem:[%s174 + $0x8] sm:$0xff] %v177
                  %v179 = vld [vmem:[%s173 + $0x10] sm:$0xff]
                  %180 = vst [vmem:[%s174 + $0x10] sm:$0xff] %v179
                  %v181 = vld [vmem:[%s173 + $0x18] sm:$0xff]
                  %182 = vst [vmem:[%s174 + $0x18] sm:$0xff] %v181
                  %v183 = vld [vmem:[%s173 + $0x40] sm:$0xff]
                  %184 = vst [vmem:[%s174 + $0x20] sm:$0xff] %v183
                  %v185 = vld [vmem:[%s173 + $0x48] sm:$0xff]
                  %186 = vst [vmem:[%s174 + $0x28] sm:$0xff] %v185
                  %v187 = vld [vmem:[%s173 + $0x50] sm:$0xff]
                  %188 = vst [vmem:[%s174 + $0x30] sm:$0xff] %v187
                  %v189 = vld [vmem:[%s173 + $0x58] sm:$0xff]
                  %190 = vst [vmem:[%s174 + $0x38] sm:$0xff] %v189
                $region56: #{wavemix_forward.13} parent=50 // loop_footer
                  %s172 = sadd.s32 1, %s168
                $region57: #{wavemix_forward.13} parent=50 // loop_footer_branch
                  %167 = sbr.rel target = $region53
                $region58: #{wavemix_forward.13} parent=50 // loop_exit
                  _
              $region51: #{wavemix_forward.13} parent=35 // pred_fallthru
                _
              // Predicated region
              $region59: #{wavemix_forward.13} parent=35 // pred_check
                _
              $region60: #{wavemix_forward.13} parent=35 // pred_check_branch
                %192 = sbr.rel target = $region62
              $region61: #{wavemix_forward.13} parent=35 // pred_region
                _
              $region62: #{wavemix_forward.13} parent=35 // pred_fallthru
                _
            $region36: #{wavemix_forward.13} parent=31 // pred_fallthru
              _
            // Predicated region
            $region37: #{wavemix_forward.13} parent=31 // pred_check
              _
            $region38: #{wavemix_forward.13} parent=31 // pred_check_branch
              %139 = sbr.rel target = $region40
            $region39: #{wavemix_forward.13} parent=31 // pred_region
              loop: start=0, step=1, limit=1
              $region41: #{wavemix_forward.13} parent=39 // loop_pre_header
                _
              $region42: #{wavemix_forward.13} parent=39 // loop_header
                %s142 = sphi 0, %s146
                %p143 = scmp.ge.s32.totalorder %s142, 1
                %s147 = sphi %s133, %s133
                %s148 = sphi %s130, %s130
              $region43: #{wavemix_forward.13} parent=39 // loop_header_branch
                %145 = sbr.rel (%p143) target = $region47
              $region44: #{wavemix_forward.13} parent=39 // loop_body
                %v149 = vld [vmem:[%s147] sm:$0xff]
                %150 = vst [vmem:[%s148] sm:$0xff] %v149
                %v151 = vld [vmem:[%s147 + $0x8] sm:$0xff]
                %152 = vst [vmem:[%s148 + $0x8] sm:$0xff] %v151
                %v153 = vld [vmem:[%s147 + $0x10] sm:$0xff]
                %154 = vst [vmem:[%s148 + $0x10] sm:$0xff] %v153
                %v155 = vld [vmem:[%s147 + $0x18] sm:$0xff]
                %156 = vst [vmem:[%s148 + $0x18] sm:$0xff] %v155
                %v157 = vld [vmem:[%s147 + $0x40] sm:$0xff]
                %158 = vst [vmem:[%s148 + $0x20] sm:$0xff] %v157
                %v159 = vld [vmem:[%s147 + $0x48] sm:$0xff]
                %160 = vst [vmem:[%s148 + $0x28] sm:$0xff] %v159
                %v161 = vld [vmem:[%s147 + $0x50] sm:$0xff]
                %162 = vst [vmem:[%s148 + $0x30] sm:$0xff] %v161
                %v163 = vld [vmem:[%s147 + $0x58] sm:$0xff]
                %164 = vst [vmem:[%s148 + $0x38] sm:$0xff] %v163
              $region45: #{wavemix_forward.13} parent=39 // loop_footer
                %s146 = sadd.s32 1, %s142
              $region46: #{wavemix_forward.13} parent=39 // loop_footer_branch
                %141 = sbr.rel target = $region42
              $region47: #{wavemix_forward.13} parent=39 // loop_exit
                _
            $region40: #{wavemix_forward.13} parent=31 // pred_fallthru
              _
          $region32: #{wavemix_forward.13} parent=27 // pred_fallthru
            _
          %193 = vnop
        $region28: #{wavemix_forward.13} parent=23 // pred_fallthru
          _
      $region24: #{wavemix_forward.13} parent=5 // pred_fallthru
        _
      %p194 = scmp.le.s32.totalorder 1, %s10
      %p195 = scmp.lt.s32.totalorder %s10, 3
      %p196 = pnand %p194, %p195
      %p197 = pneg %p196
      // Predicated region
      $region63: #{wavemix_forward.13} parent=5 // pred_check
        _
      $region64: #{wavemix_forward.13} parent=5 // pred_check_branch
        %199 = sbr.rel (%p196) target = $region66
      $region65: #{wavemix_forward.13} parent=5 // pred_region
        %s200 = ssub.s32 %s10, 1
        %s201 = sand.u32 %s23, 1
        %s202 = sand.u32 %s23, 1
        %s203 = smul.addr %s202, 64
        %s204 = scalar_lea.vmem [#allocation3], %s203
        // Predicated region
        $region67: #{wavemix_forward.13} parent=65 // pred_check
          %p205 = pneg %p36
        $region68: #{wavemix_forward.13} parent=65 // pred_check_branch
          %207 = sbr.rel (%p205) target = $region70
        $region69: #{wavemix_forward.13} parent=65 // pred_region
          _
        $region70: #{wavemix_forward.13} parent=65 // pred_fallthru
          _
        %s208 = sand.u32 %s23, 1
        %s209 = sand.u32 %s23, 1
        %s210 = smul.addr %s209, 64
        %s211 = scalar_lea.vmem [#allocation3], %s210
        %p212 = pneg %p36
        %p213 = pneg %p33
        %p214 = pneg %p57
        %p215 = pneg %p54
        %p216 = pneg %p78
        %p217 = pneg %p75
        %p218 = pneg %p99
        %p219 = pneg %p96
        %s220 = smul.u32 4, %s15
        %p222 = scmp.eq.s32.totalorder %s15, 0
        // Predicated region
        $region71: #{wavemix_forward.13} parent=65 // pred_check
          %p223 = pneg %p222
        $region72: #{wavemix_forward.13} parent=65 // pred_check_branch
          %225 = sbr.rel (%p223) target = $region74
        $region73: #{wavemix_forward.13} parent=65 // pred_region
          %226 = vst [vmem:[#allocation2] sm:$0x3] 0.0
        $region74: #{wavemix_forward.13} parent=65 // pred_fallthru
          _
        %v227 = vld [vmem:[#allocation2] sm:$0x3]
        %v228 = vld [vmem:[%s204] sm:$0xff]
        %v229 = vld [vmem:[%s204 + $0x8] sm:$0xff]
        %v230 = vld [vmem:[%s204 + $0x10] sm:$0xff]
        %v231 = vld [vmem:[%s204 + $0x18] sm:$0xff]
        %v232 = vld [vmem:[%s204 + $0x20] sm:$0xff]
        %v233 = vld [vmem:[%s204 + $0x28] sm:$0xff]
        %v234 = vld [vmem:[%s204 + $0x30] sm:$0xff]
        %v235 = vld [vmem:[%s204 + $0x38] sm:$0xff]
        %v236 = vadd.f32 %v228, %v229
        %v237 = vadd.f32 %v236, %v230
        %v238 = vadd.f32 %v237, %v231
        %v239 = vrot.slane %v238, 4
        %v240 = vadd.f32 %v238, %v239
        %v241 = vrot.slane %v240, 2
        %v242 = vadd.f32 %v240, %v241
        %v243 = vrot.slane %v242, 1
        %v244 = vadd.f32 %v242, %v243
        %v245 = vadd.f32 %v232, %v233
        %v246 = vadd.f32 %v245, %v234
        %v247 = vadd.f32 %v246, %v235
        %v248 = vrot.slane %v247, 4
        %v249 = vadd.f32 %v247, %v248
        %v250 = vrot.slane %v249, 2
        %v251 = vadd.f32 %v249, %v250
        %v252 = vrot.slane %v251, 1
        %v253 = vadd.f32 %v251, %v252
        %vm256 = vcmask 1041409
        %v257 = vsel %vm256, %v253, %v244
        %v259 = vadd.f32 %v227, %v257
        %260 = vst [vmem:[#allocation2] sm:$0x3] %v259
        %p261 = scmp.eq.s32.totalorder %s15, 1
        // Predicated region
        $region75: #{wavemix_forward.13} parent=65 // pred_check
          %p262 = pneg %p261
        $region76: #{wavemix_forward.13} parent=65 // pred_check_branch
          %264 = sbr.rel (%p262) target = $region78
        $region77: #{wavemix_forward.13} parent=65 // pred_region
          %v265 = vld [vmem:[#allocation2] sm:$0x3]
          %v266 = vmul.f32 %v265, 0.015625
          %v267 = vpack.c.bf16 %v266, %v266
          %v268 = vld [vmem:[%s1] sm:$0xf]
          %v269 = vld [vmem:[%s1 + $0x4] sm:$0xf]
          %v270 = vld [vmem:[%s1 + $0x8] sm:$0xf]
          %v271 = vld [vmem:[%s1 + $0xc] sm:$0xf]
          %v272 = vld [vmem:[%s1 + $0x10] sm:$0xf]
          %v273 = vld [vmem:[%s1 + $0x14] sm:$0xf]
          %v274 = vld [vmem:[%s1 + $0x18] sm:$0xf]
          %v275 = vld [vmem:[%s1 + $0x1c] sm:$0xf]
          %v276 = vld [vmem:[%s1 + $0x20] sm:$0xf]
          %v277 = vld [vmem:[%s1 + $0x24] sm:$0xf]
          %v278 = vld [vmem:[%s1 + $0x28] sm:$0xf]
          %v279 = vld [vmem:[%s1 + $0x2c] sm:$0xf]
          %v280 = vld [vmem:[%s1 + $0x30] sm:$0xf]
          %v281 = vld [vmem:[%s1 + $0x34] sm:$0xf]
          %v282 = vld [vmem:[%s1 + $0x38] sm:$0xf]
          %v283 = vld [vmem:[%s1 + $0x3c] sm:$0xf]
          %v284 = vld [vmem:[%s2] sm:$0x1]
          %v286 = vlaneseq
          %v287 = vshrl.u32 %v286, 7
          %v288 = vsub.s32 0, %v287
          %v289 = vrot.slane %v284, %v288
          %v307 = vunpack.c.l.b16 %v268
          %v308 = vunpack.c.l.b16 %v269
          %v309 = vunpack.c.l.b16 %v270
          %v310 = vunpack.c.l.b16 %v271
          %v311 = vunpack.c.l.b16 %v272
          %v312 = vunpack.c.l.b16 %v273
          %v313 = vunpack.c.l.b16 %v274
          %v314 = vunpack.c.l.b16 %v275
          %v315 = vunpack.c.l.b16 %v276
          %v316 = vunpack.c.l.b16 %v277
          %v317 = vunpack.c.l.b16 %v278
          %v318 = vunpack.c.l.b16 %v279
          %v319 = vunpack.c.l.b16 %v280
          %v320 = vunpack.c.l.b16 %v281
          %v321 = vunpack.c.l.b16 %v282
          %v322 = vunpack.c.l.b16 %v283
          %v323 = vpack.c.b16 %v308, %v307
          %v324 = vpack.c.b16 %v310, %v309
          %v325 = vpack.c.b16 %v312, %v311
          %v326 = vpack.c.b16 %v314, %v313
          %v327 = vpack.c.b16 %v316, %v315
          %v328 = vpack.c.b16 %v318, %v317
          %v329 = vpack.c.b16 %v320, %v319
          %v330 = vpack.c.b16 %v322, %v321
          %339 = vmatprep.subr.bf16.mxu0 0
          %340 = vmatpush1.bf16.msra.mxu0 %v323
          %341 = vmatprep.subr.bf16.mxu0 0
          %342 = vmatpush1.bf16.msra.mxu0 %v324
          %343 = vmatprep.subr.bf16.mxu0 0
          %344 = vmatpush1.bf16.msra.mxu0 %v325
          %345 = vmatprep.subr.bf16.mxu0 0
          %346 = vmatpush1.bf16.msra.mxu0 %v326
          %347 = vmatprep.subr.bf16.mxu0 0
          %348 = vmatpush1.bf16.msra.mxu0 %v327
          %349 = vmatprep.subr.bf16.mxu0 0
          %350 = vmatpush1.bf16.msra.mxu0 %v328
          %351 = vmatprep.subr.bf16.mxu0 0
          %352 = vmatpush1.bf16.msra.mxu0 %v329
          %353 = vmatprep.subr.bf16.mxu0 0
          %354 = vmatpush1.bf16.msra.mxu0 %v330
          %355 = vmatprep.subr.bf16.mxu0 0
          %356 = vmatpush1.bf16.msra.mxu0 0
          %357 = vmatprep.subr.bf16.mxu0 0
          %358 = vmatpush1.bf16.msra.mxu0 0
          %359 = vmatprep.subr.bf16.mxu0 0
          %360 = vmatpush1.bf16.msra.mxu0 0
          %361 = vmatprep.subr.bf16.mxu0 0
          %362 = vmatpush1.bf16.msra.mxu0 0
          %363 = vmatprep.subr.bf16.mxu0 0
          %364 = vmatpush1.bf16.msra.mxu0 0
          %365 = vmatprep.subr.bf16.mxu0 0
          %366 = vmatpush1.bf16.msra.mxu0 0
          %367 = vmatprep.subr.bf16.mxu0 0
          %368 = vmatpush1.bf16.msra.mxu0 0
          %369 = vmatprep.subr.bf16.mxu0 0
          %370 = vmatpush1.bf16.msra.mxu0 0
          %371 = vmatprep.mubr.bf16.mxu0 0
          %372 = vmatmul.mubr.bf16.gmra.mrb[0].mxu0 %v267
          %v373 = vpop.f32.mrb[0].mxu0
          %v374 = vadd.f32 %v289, %v373
          %v375 = vpop.f32.mrb[0].mxu0
          %v376 = vpop.f32.mrb[0].mxu0
          %v377 = vpop.f32.mrb[0].mxu0
          %378 = vdwg.mxu0
          %379 = vst [vmem:[#allocation4] sm:$0x3] %v374
        $region78: #{wavemix_forward.13} parent=65 // pred_fallthru
          _
        // Predicated region
        $region79: #{wavemix_forward.13} parent=65 // pred_check
          %p380 = pneg %p96
        $region80: #{wavemix_forward.13} parent=65 // pred_check_branch
          %382 = sbr.rel (%p380) target = $region82
        $region81: #{wavemix_forward.13} parent=65 // pred_region
          %s384 = ssub.s32 32, 32
          %385 = vsyncadd [#allocation5], %s384
          %s387 = sshll.u32 [#allocation4], 4
          %s388 = int_to_ptr.vmem [resolvable:$true] %s387
          %390 = dma.vmem_to_hbm [thread:$0]  %s388, 32, %s3, [#allocation5]
        $region82: #{wavemix_forward.13} parent=65 // pred_fallthru
          _
        // Predicated region
        $region83: #{wavemix_forward.13} parent=65 // pred_check
          %p391 = pneg %p96
        $region84: #{wavemix_forward.13} parent=65 // pred_check_branch
          %393 = sbr.rel (%p391) target = $region86
        $region85: #{wavemix_forward.13} parent=65 // pred_region
          %394 = dma.done [#allocation5], 32
        $region86: #{wavemix_forward.13} parent=65 // pred_fallthru
          _
      $region66: #{wavemix_forward.13} parent=5 // pred_fallthru
        _
      %p395 = scmp.le.s32.totalorder 2, %s10
      // Predicated region
      $region87: #{wavemix_forward.13} parent=5 // pred_check
        %p396 = pneg %p395
      $region88: #{wavemix_forward.13} parent=5 // pred_check_branch
        %398 = sbr.rel (%p396) target = $region90
      $region89: #{wavemix_forward.13} parent=5 // pred_region
        %s399 = ssub.s32 %s10, 2
      $region90: #{wavemix_forward.13} parent=5 // pred_fallthru
        _
    $region6: #{wavemix_forward.13} parent=1 // loop_footer
      %s14 = sadd.s32 1, %s10
    $region7: #{wavemix_forward.13} parent=1 // loop_footer_branch
      %9 = sbr.rel target = $region3
    $region8: #{wavemix_forward.13} parent=1 // loop_exit
      _
    %400 = vsyncpa [#allocation5], 1
    %s401 = scalar_lea.sflag [#allocation5], 1
    %402 = vsyncpa %s401, 1

</llo_original>
